<compile_context>
chip_gen: v7x
topology: tpu7x:2x2x1
jax: 0.10.0
libtpu: 0.0.40
codegen_flags: <defaults>
</compile_context>

<pallas_src>
import math

import jax
import jax.numpy as jnp
import numpy as np
from jax import lax
from jax.experimental import pallas as pl
from jax.experimental.pallas import tpu as pltpu

# ----------------------- small config (ChronosBoltConfig analogue) ----------
D_MODEL = 32
D_FF = 64
D_KV = 8
N_HEADS = 4
INNER = N_HEADS * D_KV          # 32
EPS = 1e-6
REL_BUCKETS = 32
REL_MAX_DIST = 128

B = 2        # batch
LQ = 8       # decoder (query) sequence length
LK = 16      # encoder (key/value) sequence length for cross-attention
NEG = -1e9   # additive mask value

# packed input-projection weight slab: 128-lane-aligned column segments
SEG = 128
OFF_QKV1 = 0 * SEG    # (D, 3*INNER) fused Q/K/V of self-attention
OFF_Q2 = 1 * SEG      # (D, INNER)   Q of cross-attention
OFF_KV2 = 2 * SEG     # (D, 2*INNER) fused K/V of cross-attention
OFF_WI = 3 * SEG      # (D, D_FF)    feed-forward input projection
W_IN_COLS = 4 * SEG


# ----------------------------- kernel helpers -------------------------------
def _rmsnorm(x, w):
    # T5 LayerNorm: x * rsqrt(mean(x^2) + eps) * weight   (all f32)
    var = jnp.mean(x * x, axis=-1, keepdims=True)
    return w * (x * lax.rsqrt(var + EPS))


def _softmax(s):
    # numerically-stable softmax; reciprocal on the EUP (approx) frees VALU.
    s = s - jnp.max(s, axis=-1, keepdims=True)
    e = jnp.exp(s)
    return e * pl.reciprocal(jnp.sum(e, axis=-1, keepdims=True), approx=True)


# -------------------------------- kernel ------------------------------------
def decoder_block_kernel(h_ref, enc_ref, sbias_ref, cbias_ref,
                         ln_ref, w_in_ref, wo_ref, woff_ref, out_ref):
    f32 = jnp.float32
    bf16 = jnp.bfloat16

    h = h_ref[0]            # (LQ, D)  f32, residual stream kept in f32
    enc = enc_ref[0]        # (LK, D)  f32
    T = h.shape[0]
    Tk = enc.shape[0]

    # 1) self-attention sub-block (pre-norm + residual)
    x = _rmsnorm(h, ln_ref[0:1, :]).astype(bf16)
    qkv = jnp.dot(x, w_in_ref[:, OFF_QKV1:OFF_QKV1 + 3 * INNER],
                  preferred_element_type=f32)                        # (T, 3*INNER)
    # T<->head transpose on a tiny activation tensor (unavoidable without a
    # per-head loop); everything downstream stays head-major.
    qkv = jnp.swapaxes(qkv.reshape(T, 3 * N_HEADS, D_KV), 0, 1)      # (3H, T, dk)
    q, k, v = qkv[:N_HEADS], qkv[N_HEADS:2 * N_HEADS], qkv[2 * N_HEADS:]
    s = jnp.einsum('hqd,hkd->hqk', q, k, preferred_element_type=f32)
    # sbias = per-batch causal/self mask + T5 rel-pos bias, per head
    p = _softmax(s + sbias_ref[0])                                   # (H, T, T)
    ctx = jnp.einsum('hqk,hkd->hqd', p, v, preferred_element_type=f32)
    # head-merge folded into the output projection: per-head matmul + head-sum
    o = jnp.einsum('hqd,hdo->hqo', ctx.astype(bf16), wo_ref[0],
                   preferred_element_type=f32)                       # (H, T, D)
    h = h + jnp.sum(o, axis=0)

    # 2) cross-attention sub-block (position_bias = 0.0, matching the module)
    x = _rmsnorm(h, ln_ref[1:2, :]).astype(bf16)
    q2 = jnp.dot(x, w_in_ref[:, OFF_Q2:OFF_Q2 + INNER],
                 preferred_element_type=f32)                         # (T, INNER)
    q2 = jnp.swapaxes(q2.reshape(T, N_HEADS, D_KV), 0, 1)            # (H, T, dk)
    kv2 = jnp.dot(enc.astype(bf16), w_in_ref[:, OFF_KV2:OFF_KV2 + 2 * INNER],
                  preferred_element_type=f32)                        # (Tk, 2*INNER)
    kv2 = jnp.swapaxes(kv2.reshape(Tk, 2 * N_HEADS, D_KV), 0, 1)     # (2H, Tk, dk)
    k2, v2 = kv2[:N_HEADS], kv2[N_HEADS:]
    s2 = jnp.einsum('hqd,hkd->hqk', q2, k2, preferred_element_type=f32)
    p2 = _softmax(s2 + cbias_ref[0][None, :, :])                     # (H, T, Tk)
    ctx2 = jnp.einsum('hqk,hkd->hqd', p2, v2, preferred_element_type=f32)
    o2 = jnp.einsum('hqd,hdo->hqo', ctx2.astype(bf16), wo_ref[1],
                    preferred_element_type=f32)                      # (H, T, D)
    h = h + jnp.sum(o2, axis=0)

    # 3) feed-forward sub-block (pre-norm + ReLU MLP + residual)
    x = _rmsnorm(h, ln_ref[2:3, :]).astype(bf16)
    ff = jnp.maximum(jnp.dot(x, w_in_ref[:, OFF_WI:OFF_WI + D_FF],
                             preferred_element_type=f32), 0.0)
    h = h + jnp.dot(ff.astype(bf16), woff_ref[...], preferred_element_type=f32)

    out_ref[0] = h


# ---------------------- one-time parameter packing (hoisted) ----------------
def pack_decoder_params(params):
    """Done ONCE at init -- no per-call concatenation / casting."""
    (ln1, wq1, wk1, wv1, wo1,
     ln2, wq2, wk2, wv2, wo2,
     ln3, wi, woff) = params

    ln_w = jnp.concatenate([ln1, ln2, ln3], axis=0).astype(jnp.float32)   # (3, D)

    def seg(w):  # pad each segment to 128 lanes so in-kernel views are aligned
        return jnp.pad(w, ((0, 0), (0, SEG - w.shape[1])))

    w_in = jnp.concatenate(
        [seg(jnp.concatenate([wq1, wk1, wv1], axis=1)),   # OFF_QKV1
         seg(wq2),                                        # OFF_Q2
         seg(jnp.concatenate([wk2, wv2], axis=1)),        # OFF_KV2
         seg(wi)],                                        # OFF_WI
        axis=1).astype(jnp.bfloat16)                      # (D, 512)

    # output projections pre-reshaped head-major so ctx never needs a relayout
    wo_hd = jnp.stack([wo1.reshape(N_HEADS, D_KV, D_MODEL),
                       wo2.reshape(N_HEADS, D_KV, D_MODEL)],
                      axis=0).astype(jnp.bfloat16)        # (2, H, dk, D)

    woff_b = woff.astype(jnp.bfloat16)                    # (D_FF, D)
    return ln_w, w_in, wo_hd, woff_b


# ------------------------------ wrapper --------------------------------------
@jax.jit
def decoder_block(hidden_states, encoder_states, self_mask, encoder_mask,
                  position_bias, packed):
    """grid=(B,): one batch item per step, both v7x TCs usable ("parallel")."""
    ln_w, w_in, wo_hd, woff = packed
    Bb, Lq, D = hidden_states.shape
    Lk = encoder_states.shape[1]
    H = position_bias.shape[0]

    # the only per-call prep: fold mask + rel-pos bias (fused under jit), f32
    sbias = (self_mask[:, None, :, :].astype(jnp.float32)
             + position_bias[None].astype(jnp.float32))   # (B, H, Lq, Lq)
    cbias = encoder_mask.astype(jnp.float32)               # (B, Lq, Lk)

    return pl.pallas_call(
        decoder_block_kernel,
        out_shape=jax.ShapeDtypeStruct((Bb, Lq, D), jnp.float32),
        grid=(Bb,),
        in_specs=[
            pl.BlockSpec((1, Lq, D), lambda b: (b, 0, 0)),
            pl.BlockSpec((1, Lk, D), lambda b: (b, 0, 0)),
            pl.BlockSpec((1, H, Lq, Lq), lambda b: (b, 0, 0, 0)),
            pl.BlockSpec((1, Lq, Lk), lambda b: (b, 0, 0)),
            pl.BlockSpec(ln_w.shape, lambda b: (0, 0)),
            pl.BlockSpec(w_in.shape, lambda b: (0, 0)),
            pl.BlockSpec(wo_hd.shape, lambda b: (0, 0, 0, 0)),
            pl.BlockSpec(woff.shape, lambda b: (0, 0)),
        ],
        out_specs=pl.BlockSpec((1, Lq, D), lambda b: (b, 0, 0)),
        input_output_aliases={0: 0},
        compiler_params=pltpu.CompilerParams(
            dimension_semantics=("parallel",)),
    )(hidden_states.astype(jnp.float32), encoder_states.astype(jnp.float32),
      sbias, cbias, ln_w, w_in, wo_hd, woff)


# -------------------- glue: T5 relative position bias ------------------------
def compute_rel_pos_bias(rel_emb, q_len, k_len):
    """Decoder (unidirectional) T5 relative position bias. rel_emb: (buckets, H)."""
    q_pos = jnp.arange(q_len, dtype=jnp.int32)[:, None]
    k_pos = jnp.arange(k_len, dtype=jnp.int32)[None, :]
    rel = k_pos - q_pos                              # (q, k)
    num_buckets = REL_BUCKETS
    num_exact = num_buckets // 2
    num_log = num_buckets - num_exact
    rel = -jnp.minimum(rel, 0)                       # non-negative distances
    safe_rel = jnp.maximum(rel, 1)                   # avoid log(0); masked below
    log_ratio = jnp.log(safe_rel.astype(jnp.float32) / num_exact) / math.log(
        REL_MAX_DIST / num_exact)
    log_pos = num_exact + (log_ratio * num_log).astype(jnp.int32)
    log_pos = jnp.minimum(log_pos, num_buckets - 1)
    bucket = jnp.where(rel < num_exact, rel, log_pos)
    values = rel_emb[bucket]                         # (q, k, H)
    return jnp.transpose(values, (2, 0, 1)).astype(jnp.float32)  # (H, q, k)


# --------------------------- pure-JAX reference ------------------------------
def ref_decoder_block(h, enc, smask, cmask, pbias, params):
    (ln1, wq1, wk1, wv1, wo1,
     ln2, wq2, wk2, wv2, wo2,
     ln3, wi, woff) = params

    def rmsnorm(x, w):
        var = jnp.mean(x * x, axis=-1, keepdims=True)
        return w * (x * lax.rsqrt(var + EPS))

    def attn(xq, xkv, mask, pb, wq, wk, wv, wo):
        b, lq, _ = xq.shape
        lk = xkv.shape[1]
        q = (xq @ wq).reshape(b, lq, N_HEADS, D_KV).transpose(0, 2, 1, 3)
        k = (xkv @ wk).reshape(b, lk, N_HEADS, D_KV).transpose(0, 2, 1, 3)
        v = (xkv @ wv).reshape(b, lk, N_HEADS, D_KV).transpose(0, 2, 1, 3)
        scores = jnp.einsum("bhqd,bhkd->bhqk", q, k) + mask[:, None] + pb
        p = jax.nn.softmax(scores, axis=-1)
        o = jnp.einsum("bhqk,bhkd->bhqd", p, v)
        o = o.transpose(0, 2, 1, 3).reshape(b, lq, INNER)
        return o @ wo

    h = h + attn(rmsnorm(h, ln1), rmsnorm(h, ln1), smask, pbias[None],
                 wq1, wk1, wv1, wo1)
    h = h + attn(rmsnorm(h, ln2), enc, cmask, 0.0, wq2, wk2, wv2, wo2)
    x = rmsnorm(h, ln3)
    h = h + jnp.maximum(x @ wi, 0.0) @ woff
    return h


# --------------------------------- main --------------------------------------
if __name__ == "__main__":
    key = jax.random.PRNGKey(0)
    ks = jax.random.split(key, 20)

    def rnd(k, shape, scale=0.05):
        return (jax.random.normal(k, shape, dtype=jnp.float32) * scale)

    # parameters (nn.Linear weights stored transposed: (in, out))
    ln1 = 1.0 + rnd(ks[0], (1, D_MODEL), 0.1)
    wq1 = rnd(ks[1], (D_MODEL, INNER))
    wk1 = rnd(ks[2], (D_MODEL, INNER))
    wv1 = rnd(ks[3], (D_MODEL, INNER))
    wo1 = rnd(ks[4], (INNER, D_MODEL))
    ln2 = 1.0 + rnd(ks[5], (1, D_MODEL), 0.1)
    wq2 = rnd(ks[6], (D_MODEL, INNER))
    wk2 = rnd(ks[7], (D_MODEL, INNER))
    wv2 = rnd(ks[8], (D_MODEL, INNER))
    wo2 = rnd(ks[9], (INNER, D_MODEL))
    ln3 = 1.0 + rnd(ks[10], (1, D_MODEL), 0.1)
    wi = rnd(ks[11], (D_MODEL, D_FF))
    woff = rnd(ks[12], (D_FF, D_MODEL))
    rel_emb = rnd(ks[13], (REL_BUCKETS, N_HEADS), 0.1)
    params = (ln1, wq1, wk1, wv1, wo1, ln2, wq2, wk2, wv2, wo2, ln3, wi, woff)

    # one-time packing (hoisted out of the per-call path)
    packed = pack_decoder_params(params)
    packed = jax.tree_util.tree_map(jax.block_until_ready, packed)

    # inputs
    hidden_states = rnd(ks[14], (B, LQ, D_MODEL), 1.0)
    encoder_states = rnd(ks[15], (B, LK, D_MODEL), 1.0)

    # decoder causal self-attention mask (additive, 0 = attend, -1e9 = masked)
    i = jnp.arange(LQ)[:, None]
    j = jnp.arange(LQ)[None, :]
    causal = jnp.where(j <= i, 0.0, NEG).astype(jnp.float32)
    self_mask = jnp.broadcast_to(causal, (B, LQ, LQ))

    # encoder padding mask: batch item 1 has its last 2 encoder positions masked
    enc_base = jnp.zeros((B, 1, LK), jnp.float32)
    enc_base = enc_base.at[1, 0, LK - 2:].set(NEG)
    encoder_mask = jnp.broadcast_to(enc_base, (B, LQ, LK))

    # relative position bias (has_rel_pos_bias=True path of the self-attention)
    position_bias = compute_rel_pos_bias(rel_emb, LQ, LQ)   # (H, LQ, LQ)

    out = decoder_block(hidden_states, encoder_states, self_mask, encoder_mask,
                        position_bias, packed)
    out = jax.block_until_ready(out)

    ref = ref_decoder_block(hidden_states, encoder_states, self_mask,
                            encoder_mask, position_bias, params)
    # tolerance covers bf16 matmul inputs + pl.reciprocal(approx=True) softmax;
    # reference is pure f32.
    np.testing.assert_allclose(np.asarray(out), np.asarray(ref),
                               rtol=2e-2, atol=2e-2)
    print("KERNEL_OK")
</pallas_src>

<mosaic_0001>
module attributes {stable_mosaic.version = 11 : i64} {
  func.func @decoder_block_kernel(%arg0: i32, %arg1: memref<1x8x32xf32, #tpu.memory_space<vmem>>, %arg2: memref<1x16x32xf32, #tpu.memory_space<vmem>>, %arg3: memref<1x4x8x8xf32, #tpu.memory_space<vmem>>, %arg4: memref<1x8x16xf32, #tpu.memory_space<vmem>>, %arg5: memref<3x32xf32, #tpu.memory_space<vmem>>, %arg6: memref<32x512xbf16, #tpu.memory_space<vmem>>, %arg7: memref<2x4x8x32xbf16, #tpu.memory_space<vmem>>, %arg8: memref<64x32xbf16, #tpu.memory_space<vmem>>, %arg9: memref<1x8x32xf32, #tpu.memory_space<vmem>>) attributes {dimension_semantics = [#tpu.dimension_semantics<parallel>], iteration_bounds = array<i64: 2>, scalar_prefetch = 0 : i64, scratch_operands = 0 : i64, tpu.core_type = #tpu.core_type<tc>, window_params = [{transform_indices = @transform_0, window_bounds = array<i64: 1, 8, 32>}, {transform_indices = @transform_1, window_bounds = array<i64: 1, 16, 32>}, {transform_indices = @transform_2, window_bounds = array<i64: 1, 4, 8, 8>}, {transform_indices = @transform_3, window_bounds = array<i64: 1, 8, 16>}, {pipeline_mode = #tpu.pipeline_mode<synchronous>, transform_indices = @transform_4, window_bounds = array<i64: 3, 32>}, {pipeline_mode = #tpu.pipeline_mode<synchronous>, transform_indices = @transform_5, window_bounds = array<i64: 32, 512>}, {pipeline_mode = #tpu.pipeline_mode<synchronous>, transform_indices = @transform_6, window_bounds = array<i64: 2, 4, 8, 32>}, {pipeline_mode = #tpu.pipeline_mode<synchronous>, transform_indices = @transform_7, window_bounds = array<i64: 64, 32>}, {transform_indices = @transform_8, window_bounds = array<i64: 1, 8, 32>}]} {
    %c0 = arith.constant 0 : index
    %c0_0 = arith.constant 0 : index
    %c0_1 = arith.constant 0 : index
    %0 = vector.load %arg1[%c0, %c0_0, %c0_1] : memref<1x8x32xf32, #tpu.memory_space<vmem>>, vector<1x8x32xf32>
    %1 = vector.shape_cast %0 : vector<1x8x32xf32> to vector<8x32xf32>
    %c0_2 = arith.constant 0 : index
    %c0_3 = arith.constant 0 : index
    %c0_4 = arith.constant 0 : index
    %2 = vector.load %arg2[%c0_2, %c0_3, %c0_4] : memref<1x16x32xf32, #tpu.memory_space<vmem>>, vector<1x16x32xf32>
    %3 = vector.shape_cast %2 : vector<1x16x32xf32> to vector<16x32xf32>
    %c0_5 = arith.constant 0 : index
    %c0_6 = arith.constant 0 : index
    %4 = vector.load %arg5[%c0_5, %c0_6] : memref<3x32xf32, #tpu.memory_space<vmem>>, vector<1x32xf32>
    %5 = arith.mulf %1, %1 : vector<8x32xf32>
    %cst = arith.constant dense<0.000000e+00> : vector<8xf32>
    %6 = vector.multi_reduction <add>, %5, %cst [1] : vector<8x32xf32> to vector<8xf32>
    %7 = vector.shape_cast %6 : vector<8xf32> to vector<8x1xf32>
    %cst_7 = arith.constant 3.200000e+01 : f32
    %8 = vector.broadcast %cst_7 : f32 to vector<8x1xf32>
    %9 = arith.divf %7, %8 : vector<8x1xf32>
    %cst_8 = arith.constant 9.99999997E-7 : f32
    %10 = vector.broadcast %cst_8 : f32 to vector<8x1xf32>
    %11 = arith.addf %9, %10 : vector<8x1xf32>
    %12 = math.rsqrt %11 : vector<8x1xf32>
    %13 = vector.broadcast %12 : vector<8x1xf32> to vector<8x32xf32>
    %14 = arith.mulf %1, %13 : vector<8x32xf32>
    %15 = vector.broadcast %4 : vector<1x32xf32> to vector<8x32xf32>
    %16 = arith.mulf %15, %14 : vector<8x32xf32>
    %17 = arith.truncf %16 : vector<8x32xf32> to vector<8x32xbf16>
    %c0_9 = arith.constant 0 : index
    %c0_10 = arith.constant 0 : index
    %18 = vector.load %arg6[%c0_9, %c0_10] : memref<32x512xbf16, #tpu.memory_space<vmem>>, vector<32x96xbf16>
    %cst_11 = arith.constant dense<0.000000e+00> : vector<8x96xf32>
    %19 = tpu.matmul %17, %18, %cst_11 {dimension_numbers = #tpu.dot_dimension_numbers<[1], [0], [0], [1], [0, 0, 1, 1], [], []>} : vector<8x32xbf16>, vector<32x96xbf16>, vector<8x96xf32> -> vector<8x96xf32>
    %20 = vector.shape_cast %19 : vector<8x96xf32> to vector<8x12x8xf32>
    %21 = tpu.transpose %20, [1, 0, 2] : vector<8x12x8xf32> -> vector<12x8x8xf32>
    %22 = vector.extract_strided_slice %21 {offsets = [0, 0, 0], sizes = [4, 8, 8], strides = [1, 1, 1]} : vector<12x8x8xf32> to vector<4x8x8xf32>
    %23 = vector.extract_strided_slice %21 {offsets = [4, 0, 0], sizes = [4, 8, 8], strides = [1, 1, 1]} : vector<12x8x8xf32> to vector<4x8x8xf32>
    %24 = vector.extract_strided_slice %21 {offsets = [8, 0, 0], sizes = [4, 8, 8], strides = [1, 1, 1]} : vector<12x8x8xf32> to vector<4x8x8xf32>
    "tpu.trace_start"() <{level = 10 : i32, message = "hqd,hkd->hqk"}> : () -> ()
    %cst_12 = arith.constant dense<0.000000e+00> : vector<4x8x8xf32>
    %25 = tpu.matmul %22, %23, %cst_12 {dimension_numbers = #tpu.dot_dimension_numbers<[2], [2], [1], [1], [0, 0, 0, 1, 1, 1], [0], [0]>} : vector<4x8x8xf32>, vector<4x8x8xf32>, vector<4x8x8xf32> -> vector<4x8x8xf32>
    "tpu.trace_stop"() : () -> ()
    %c0_13 = arith.constant 0 : index
    %c0_14 = arith.constant 0 : index
    %c0_15 = arith.constant 0 : index
    %c0_16 = arith.constant 0 : index
    %26 = vector.load %arg3[%c0_13, %c0_14, %c0_15, %c0_16] : memref<1x4x8x8xf32, #tpu.memory_space<vmem>>, vector<1x4x8x8xf32>
    %27 = vector.shape_cast %26 : vector<1x4x8x8xf32> to vector<4x8x8xf32>
    %28 = arith.addf %25, %27 : vector<4x8x8xf32>
    %cst_17 = arith.constant dense<0xFF800000> : vector<4x8xf32>
    %29 = vector.multi_reduction <maximumf>, %28, %cst_17 [2] : vector<4x8x8xf32> to vector<4x8xf32>
    %30 = vector.shape_cast %29 : vector<4x8xf32> to vector<4x8x1xf32>
    %31 = vector.broadcast %30 : vector<4x8x1xf32> to vector<4x8x8xf32>
    %32 = arith.subf %28, %31 : vector<4x8x8xf32>
    %33 = math.exp %32 : vector<4x8x8xf32>
    %cst_18 = arith.constant dense<0.000000e+00> : vector<4x8xf32>
    %34 = vector.multi_reduction <add>, %33, %cst_18 [2] : vector<4x8x8xf32> to vector<4x8xf32>
    %35 = vector.shape_cast %34 : vector<4x8xf32> to vector<4x8x1xf32>
    %36 = tpu.reciprocal %35 {approx = true} : vector<4x8x1xf32> -> vector<4x8x1xf32>
    %37 = vector.broadcast %36 : vector<4x8x1xf32> to vector<4x8x8xf32>
    %38 = arith.mulf %33, %37 : vector<4x8x8xf32>
    "tpu.trace_start"() <{level = 10 : i32, message = "hqk,hkd->hqd"}> : () -> ()
    %cst_19 = arith.constant dense<0.000000e+00> : vector<4x8x8xf32>
    %39 = tpu.matmul %38, %24, %cst_19 {dimension_numbers = #tpu.dot_dimension_numbers<[2], [1], [1], [2], [0, 0, 0, 1, 1, 2], [0], [0]>} : vector<4x8x8xf32>, vector<4x8x8xf32>, vector<4x8x8xf32> -> vector<4x8x8xf32>
    "tpu.trace_stop"() : () -> ()
    %40 = arith.truncf %39 : vector<4x8x8xf32> to vector<4x8x8xbf16>
    %c0_20 = arith.constant 0 : index
    %c0_21 = arith.constant 0 : index
    %c0_22 = arith.constant 0 : index
    %c0_23 = arith.constant 0 : index
    %41 = vector.load %arg7[%c0_20, %c0_21, %c0_22, %c0_23] : memref<2x4x8x32xbf16, #tpu.memory_space<vmem>>, vector<1x4x8x32xbf16>
    %42 = vector.shape_cast %41 : vector<1x4x8x32xbf16> to vector<4x8x32xbf16>
    "tpu.trace_start"() <{level = 10 : i32, message = "hqd,hdo->hqo"}> : () -> ()
    %cst_24 = arith.constant dense<0.000000e+00> : vector<4x8x32xf32>
    %43 = tpu.matmul %40, %42, %cst_24 {dimension_numbers = #tpu.dot_dimension_numbers<[2], [1], [1], [2], [0, 0, 0, 1, 1, 2], [0], [0]>} : vector<4x8x8xbf16>, vector<4x8x32xbf16>, vector<4x8x32xf32> -> vector<4x8x32xf32>
    "tpu.trace_stop"() : () -> ()
    %cst_25 = arith.constant dense<0.000000e+00> : vector<8x32xf32>
    %44 = vector.multi_reduction <add>, %43, %cst_25 [0] : vector<4x8x32xf32> to vector<8x32xf32>
    %45 = arith.addf %1, %44 : vector<8x32xf32>
    %c1 = arith.constant 1 : index
    %c0_26 = arith.constant 0 : index
    %46 = vector.load %arg5[%c1, %c0_26] : memref<3x32xf32, #tpu.memory_space<vmem>>, vector<1x32xf32>
    %47 = arith.mulf %45, %45 : vector<8x32xf32>
    %cst_27 = arith.constant dense<0.000000e+00> : vector<8xf32>
    %48 = vector.multi_reduction <add>, %47, %cst_27 [1] : vector<8x32xf32> to vector<8xf32>
    %49 = vector.shape_cast %48 : vector<8xf32> to vector<8x1xf32>
    %cst_28 = arith.constant 3.200000e+01 : f32
    %50 = vector.broadcast %cst_28 : f32 to vector<8x1xf32>
    %51 = arith.divf %49, %50 : vector<8x1xf32>
    %cst_29 = arith.constant 9.99999997E-7 : f32
    %52 = vector.broadcast %cst_29 : f32 to vector<8x1xf32>
    %53 = arith.addf %51, %52 : vector<8x1xf32>
    %54 = math.rsqrt %53 : vector<8x1xf32>
    %55 = vector.broadcast %54 : vector<8x1xf32> to vector<8x32xf32>
    %56 = arith.mulf %45, %55 : vector<8x32xf32>
    %57 = vector.broadcast %46 : vector<1x32xf32> to vector<8x32xf32>
    %58 = arith.mulf %57, %56 : vector<8x32xf32>
    %59 = arith.truncf %58 : vector<8x32xf32> to vector<8x32xbf16>
    %c0_30 = arith.constant 0 : index
    %c128 = arith.constant 128 : index
    %60 = vector.load %arg6[%c0_30, %c128] : memref<32x512xbf16, #tpu.memory_space<vmem>>, vector<32x32xbf16>
    %cst_31 = arith.constant dense<0.000000e+00> : vector<8x32xf32>
    %61 = tpu.matmul %59, %60, %cst_31 {dimension_numbers = #tpu.dot_dimension_numbers<[1], [0], [0], [1], [0, 0, 1, 1], [], []>} : vector<8x32xbf16>, vector<32x32xbf16>, vector<8x32xf32> -> vector<8x32xf32>
    %62 = vector.shape_cast %61 : vector<8x32xf32> to vector<8x4x8xf32>
    %63 = tpu.transpose %62, [1, 0, 2] : vector<8x4x8xf32> -> vector<4x8x8xf32>
    %64 = arith.truncf %3 : vector<16x32xf32> to vector<16x32xbf16>
    %c0_32 = arith.constant 0 : index
    %c256 = arith.constant 256 : index
    %65 = vector.load %arg6[%c0_32, %c256] : memref<32x512xbf16, #tpu.memory_space<vmem>>, vector<32x64xbf16>
    %cst_33 = arith.constant dense<0.000000e+00> : vector<16x64xf32>
    %66 = tpu.matmul %64, %65, %cst_33 {dimension_numbers = #tpu.dot_dimension_numbers<[1], [0], [0], [1], [0, 0, 1, 1], [], []>} : vector<16x32xbf16>, vector<32x64xbf16>, vector<16x64xf32> -> vector<16x64xf32>
    %67 = vector.shape_cast %66 : vector<16x64xf32> to vector<16x8x8xf32>
    %68 = tpu.transpose %67, [1, 0, 2] : vector<16x8x8xf32> -> vector<8x16x8xf32>
    %69 = vector.extract_strided_slice %68 {offsets = [0, 0, 0], sizes = [4, 16, 8], strides = [1, 1, 1]} : vector<8x16x8xf32> to vector<4x16x8xf32>
    %70 = vector.extract_strided_slice %68 {offsets = [4, 0, 0], sizes = [4, 16, 8], strides = [1, 1, 1]} : vector<8x16x8xf32> to vector<4x16x8xf32>
    "tpu.trace_start"() <{level = 10 : i32, message = "hqd,hkd->hqk"}> : () -> ()
    %cst_34 = arith.constant dense<0.000000e+00> : vector<4x8x16xf32>
    %71 = tpu.matmul %63, %69, %cst_34 {dimension_numbers = #tpu.dot_dimension_numbers<[2], [2], [1], [1], [0, 0, 0, 1, 1, 1], [0], [0]>} : vector<4x8x8xf32>, vector<4x16x8xf32>, vector<4x8x16xf32> -> vector<4x8x16xf32>
    "tpu.trace_stop"() : () -> ()
    %c0_35 = arith.constant 0 : index
    %c0_36 = arith.constant 0 : index
    %c0_37 = arith.constant 0 : index
    %72 = vector.load %arg4[%c0_35, %c0_36, %c0_37] : memref<1x8x16xf32, #tpu.memory_space<vmem>>, vector<1x8x16xf32>
    %73 = vector.shape_cast %72 : vector<1x8x16xf32> to vector<8x16xf32>
    %74 = vector.shape_cast %73 : vector<8x16xf32> to vector<1x8x16xf32>
    %75 = vector.broadcast %74 : vector<1x8x16xf32> to vector<4x8x16xf32>
    %76 = arith.addf %71, %75 : vector<4x8x16xf32>
    %cst_38 = arith.constant dense<0xFF800000> : vector<4x8xf32>
    %77 = vector.multi_reduction <maximumf>, %76, %cst_38 [2] : vector<4x8x16xf32> to vector<4x8xf32>
    %78 = vector.shape_cast %77 : vector<4x8xf32> to vector<4x8x1xf32>
    %79 = vector.broadcast %78 : vector<4x8x1xf32> to vector<4x8x16xf32>
    %80 = arith.subf %76, %79 : vector<4x8x16xf32>
    %81 = math.exp %80 : vector<4x8x16xf32>
    %cst_39 = arith.constant dense<0.000000e+00> : vector<4x8xf32>
    %82 = vector.multi_reduction <add>, %81, %cst_39 [2] : vector<4x8x16xf32> to vector<4x8xf32>
    %83 = vector.shape_cast %82 : vector<4x8xf32> to vector<4x8x1xf32>
    %84 = tpu.reciprocal %83 {approx = true} : vector<4x8x1xf32> -> vector<4x8x1xf32>
    %85 = vector.broadcast %84 : vector<4x8x1xf32> to vector<4x8x16xf32>
    %86 = arith.mulf %81, %85 : vector<4x8x16xf32>
    "tpu.trace_start"() <{level = 10 : i32, message = "hqk,hkd->hqd"}> : () -> ()
    %cst_40 = arith.constant dense<0.000000e+00> : vector<4x8x8xf32>
    %87 = tpu.matmul %86, %70, %cst_40 {dimension_numbers = #tpu.dot_dimension_numbers<[2], [1], [1], [2], [0, 0, 0, 1, 1, 2], [0], [0]>} : vector<4x8x16xf32>, vector<4x16x8xf32>, vector<4x8x8xf32> -> vector<4x8x8xf32>
    "tpu.trace_stop"() : () -> ()
    %88 = arith.truncf %87 : vector<4x8x8xf32> to vector<4x8x8xbf16>
    %c1_41 = arith.constant 1 : index
    %c0_42 = arith.constant 0 : index
    %c0_43 = arith.constant 0 : index
    %c0_44 = arith.constant 0 : index
    %89 = vector.load %arg7[%c1_41, %c0_42, %c0_43, %c0_44] : memref<2x4x8x32xbf16, #tpu.memory_space<vmem>>, vector<1x4x8x32xbf16>
    %90 = vector.shape_cast %89 : vector<1x4x8x32xbf16> to vector<4x8x32xbf16>
    "tpu.trace_start"() <{level = 10 : i32, message = "hqd,hdo->hqo"}> : () -> ()
    %cst_45 = arith.constant dense<0.000000e+00> : vector<4x8x32xf32>
    %91 = tpu.matmul %88, %90, %cst_45 {dimension_numbers = #tpu.dot_dimension_numbers<[2], [1], [1], [2], [0, 0, 0, 1, 1, 2], [0], [0]>} : vector<4x8x8xbf16>, vector<4x8x32xbf16>, vector<4x8x32xf32> -> vector<4x8x32xf32>
    "tpu.trace_stop"() : () -> ()
    %cst_46 = arith.constant dense<0.000000e+00> : vector<8x32xf32>
    %92 = vector.multi_reduction <add>, %91, %cst_46 [0] : vector<4x8x32xf32> to vector<8x32xf32>
    %93 = arith.addf %45, %92 : vector<8x32xf32>
    %c2 = arith.constant 2 : index
    %c0_47 = arith.constant 0 : index
    %94 = vector.load %arg5[%c2, %c0_47] : memref<3x32xf32, #tpu.memory_space<vmem>>, vector<1x32xf32>
    %95 = arith.mulf %93, %93 : vector<8x32xf32>
    %cst_48 = arith.constant dense<0.000000e+00> : vector<8xf32>
    %96 = vector.multi_reduction <add>, %95, %cst_48 [1] : vector<8x32xf32> to vector<8xf32>
    %97 = vector.shape_cast %96 : vector<8xf32> to vector<8x1xf32>
    %cst_49 = arith.constant 3.200000e+01 : f32
    %98 = vector.broadcast %cst_49 : f32 to vector<8x1xf32>
    %99 = arith.divf %97, %98 : vector<8x1xf32>
    %cst_50 = arith.constant 9.99999997E-7 : f32
    %100 = vector.broadcast %cst_50 : f32 to vector<8x1xf32>
    %101 = arith.addf %99, %100 : vector<8x1xf32>
    %102 = math.rsqrt %101 : vector<8x1xf32>
    %103 = vector.broadcast %102 : vector<8x1xf32> to vector<8x32xf32>
    %104 = arith.mulf %93, %103 : vector<8x32xf32>
    %105 = vector.broadcast %94 : vector<1x32xf32> to vector<8x32xf32>
    %106 = arith.mulf %105, %104 : vector<8x32xf32>
    %107 = arith.truncf %106 : vector<8x32xf32> to vector<8x32xbf16>
    %c0_51 = arith.constant 0 : index
    %c384 = arith.constant 384 : index
    %108 = vector.load %arg6[%c0_51, %c384] : memref<32x512xbf16, #tpu.memory_space<vmem>>, vector<32x64xbf16>
    %cst_52 = arith.constant dense<0.000000e+00> : vector<8x64xf32>
    %109 = tpu.matmul %107, %108, %cst_52 {dimension_numbers = #tpu.dot_dimension_numbers<[1], [0], [0], [1], [0, 0, 1, 1], [], []>} : vector<8x32xbf16>, vector<32x64xbf16>, vector<8x64xf32> -> vector<8x64xf32>
    %cst_53 = arith.constant 0.000000e+00 : f32
    %110 = vector.broadcast %cst_53 : f32 to vector<8x64xf32>
    %111 = arith.maximumf %109, %110 : vector<8x64xf32>
    %112 = arith.truncf %111 : vector<8x64xf32> to vector<8x64xbf16>
    %c0_54 = arith.constant 0 : index
    %c0_55 = arith.constant 0 : index
    %113 = vector.load %arg8[%c0_54, %c0_55] : memref<64x32xbf16, #tpu.memory_space<vmem>>, vector<64x32xbf16>
    %cst_56 = arith.constant dense<0.000000e+00> : vector<8x32xf32>
    %114 = tpu.matmul %112, %113, %cst_56 {dimension_numbers = #tpu.dot_dimension_numbers<[1], [0], [0], [1], [0, 0, 1, 1], [], []>} : vector<8x64xbf16>, vector<64x32xbf16>, vector<8x32xf32> -> vector<8x32xf32>
    %115 = arith.addf %93, %114 : vector<8x32xf32>
    %c0_57 = arith.constant 0 : index
    %c0_58 = arith.constant 0 : index
    %c0_59 = arith.constant 0 : index
    %116 = vector.load %arg9[%c0_57, %c0_58, %c0_59] : memref<1x8x32xf32, #tpu.memory_space<vmem>>, vector<1x8x32xf32>
    %117 = vector.shape_cast %116 : vector<1x8x32xf32> to vector<8x32xf32>
    %118 = vector.shape_cast %115 : vector<8x32xf32> to vector<1x8x32xf32>
    tpu.vector_store %arg9[%c0_57, %c0_58, %c0_59], %118 {strides = array<i32>} : memref<1x8x32xf32, #tpu.memory_space<vmem>>, vector<1x8x32xf32>,
    return
  }
  func.func @transform_0(%arg0: i32) -> (i32, i32, i32) {
    %c0_i32 = arith.constant 0 : i32
    %c0_i32_0 = arith.constant 0 : i32
    %c0_i32_1 = arith.constant 0 : i32
    return %arg0, %c0_i32, %c0_i32_0 : i32, i32, i32
  }
  func.func @transform_1(%arg0: i32) -> (i32, i32, i32) {
    %c0_i32 = arith.constant 0 : i32
    %c0_i32_0 = arith.constant 0 : i32
    %c0_i32_1 = arith.constant 0 : i32
    return %arg0, %c0_i32, %c0_i32_0 : i32, i32, i32
  }
  func.func @transform_2(%arg0: i32) -> (i32, i32, i32, i32) {
    %c0_i32 = arith.constant 0 : i32
    %c0_i32_0 = arith.constant 0 : i32
    %c0_i32_1 = arith.constant 0 : i32
    %c0_i32_2 = arith.constant 0 : i32
    return %arg0, %c0_i32, %c0_i32_0, %c0_i32_1 : i32, i32, i32, i32
  }
  func.func @transform_3(%arg0: i32) -> (i32, i32, i32) {
    %c0_i32 = arith.constant 0 : i32
    %c0_i32_0 = arith.constant 0 : i32
    %c0_i32_1 = arith.constant 0 : i32
    return %arg0, %c0_i32, %c0_i32_0 : i32, i32, i32
  }
  func.func @transform_4(%arg0: i32) -> (i32, i32) {
    %c0_i32 = arith.constant 0 : i32
    %c0_i32_0 = arith.constant 0 : i32
    %c0_i32_1 = arith.constant 0 : i32
    return %c0_i32, %c0_i32_0 : i32, i32
  }
  func.func @transform_5(%arg0: i32) -> (i32, i32) {
    %c0_i32 = arith.constant 0 : i32
    %c0_i32_0 = arith.constant 0 : i32
    %c0_i32_1 = arith.constant 0 : i32
    return %c0_i32, %c0_i32_0 : i32, i32
  }
  func.func @transform_6(%arg0: i32) -> (i32, i32, i32, i32) {
    %c0_i32 = arith.constant 0 : i32
    %c0_i32_0 = arith.constant 0 : i32
    %c0_i32_1 = arith.constant 0 : i32
    %c0_i32_2 = arith.constant 0 : i32
    %c0_i32_3 = arith.constant 0 : i32
    return %c0_i32, %c0_i32_0, %c0_i32_1, %c0_i32_2 : i32, i32, i32, i32
  }
  func.func @transform_7(%arg0: i32) -> (i32, i32) {
    %c0_i32 = arith.constant 0 : i32
    %c0_i32_0 = arith.constant 0 : i32
    %c0_i32_1 = arith.constant 0 : i32
    return %c0_i32, %c0_i32_0 : i32, i32
  }
  func.func @transform_8(%arg0: i32) -> (i32, i32, i32) {
    %c0_i32 = arith.constant 0 : i32
    %c0_i32_0 = arith.constant 0 : i32
    %c0_i32_1 = arith.constant 0 : i32
    return %arg0, %c0_i32, %c0_i32_0 : i32, i32, i32
  }
}

</mosaic_0001>

<llo_original>
// kernel: decoder_block.1
$region0: #{decoder_block.1}
  #allocation0 [shape = 'u32[]', space=smem, size = 0x4, offset = 0x4, fixed_abs, tag = 'smem constant byte address 0x4 - core index']
  #allocation1 [shape = 'u32[144,128]{1,0:T(1,128)}', space=vmem, size = 0x12000, scoped, tag = 'internal scratch']
  %s0 = inlined_call_operand.hbm [shape: f32[2,8,32], index: 0, kind: input, shape index: {}, may-alias: {0,8}]
  %s1 = inlined_call_operand.vmem [shape: f32[2,16,32], index: 1, kind: input, shape index: {}]
  %s2 = inlined_call_operand.vmem [shape: f32[2,4,8,8], index: 2, kind: input, shape index: {}]
  %s3 = inlined_call_operand.hbm [shape: f32[2,8,16], index: 3, kind: input, shape index: {}]
  %s4 = inlined_call_operand.vmem [shape: f32[3,32], index: 4, kind: input, shape index: {}]
  %s5 = inlined_call_operand.vmem [shape: bf16[32,512], index: 5, kind: input, shape index: {}]
  %s6 = inlined_call_operand.vmem [shape: bf16[2,4,8,32], index: 6, kind: input, shape index: {}]
  %s7 = inlined_call_operand.vmem [shape: bf16[64,32], index: 7, kind: input, shape index: {}]
  %s8 = inlined_call_operand.hbm [shape: f32[2,8,32], index: 8, kind: output, shape index: {}, may-alias: {0,8}]
  %s9 = sld [smem:[#allocation0]]
  $region73: #{decoder_block.1} parent=0
    _
  %s11 = ssub.s32 1, %s9
  %s12 = scalar_select 0, %s11, %s9
  $region1: #{decoder_block.1} parent=0
    #allocation2 [shape = 'u8[8192]{0}', space=vmem, size = 0x2000, scoped, tag = 'input window, operand 0']
    #allocation3 [shape = 's32[2]{0}', space=sflag, size = 0x8, scoped, tag = 'scoped memory for decoder_block.1']
    #allocation4 [shape = 's32[2]{0}', space=sflag, size = 0x8, scoped, tag = 'scoped memory for decoder_block.1']
    #allocation5 [shape = 'u8[8192]{0}', space=vmem, size = 0x2000, scoped, tag = 'input window, operand 3']
    #allocation6 [shape = 's32[2]{0}', space=sflag, size = 0x8, scoped, tag = 'scoped memory for decoder_block.1']
    #allocation7 [shape = 'u8[8192]{0}', space=vmem, size = 0x2000, scoped, tag = 'output window, operand 0']
    %13 = vsyncpa [#allocation3], 0
    %s14 = scalar_lea.sflag [#allocation3], 1
    %15 = vsyncpa %s14, 0
    %16 = vsyncpa [#allocation6], 0
    %s17 = scalar_lea.sflag [#allocation6], 1
    %18 = vsyncpa %s17, 0
    %19 = vsyncpa [#allocation4], 0
    %s20 = scalar_lea.sflag [#allocation4], 1
    %21 = vsyncpa %s20, 0
    loop: start=0, step=1, limit=4
    $region2: #{decoder_block.1} parent=1 // loop_pre_header
      _
    $region3: #{decoder_block.1} parent=1 // loop_header
      %s23 = sphi 0, %s27
      %p24 = scmp.ge.s32.totalorder %s23, 4
      %s33 = sphi 0, %s35
      %s36 = sphi 0, %s33
      %s37 = sphi 0, %s36
      %s53 = sphi 0, %s37
      %s59 = sphi 0, %s61
      %s62 = sphi 0, %s59
      %s63 = sphi 0, %s62
      %s79 = sphi 0, %s63
      %s85 = sphi 0, %s87
      %s88 = sphi 0, %s85
      %s89 = sphi 0, %s88
      %s105 = sphi 0, %s89
      %s111 = sphi 0, %s113
      %s114 = sphi 0, %s111
      %s115 = sphi 0, %s114
      %s131 = sphi 0, %s115
      %s135 = sphi 0, %s135
      %s137 = sphi 0, %s135
      %s138 = sphi 0, %s137
      %s152 = sphi 0, %s138
      %s156 = sphi 0, %s156
      %s158 = sphi 0, %s156
      %s159 = sphi 0, %s158
      %s173 = sphi 0, %s159
      %s177 = sphi 0, %s177
      %s179 = sphi 0, %s177
      %s180 = sphi 0, %s179
      %s194 = sphi 0, %s180
      %s198 = sphi 0, %s198
      %s200 = sphi 0, %s198
      %s201 = sphi 0, %s200
      %s215 = sphi 0, %s201
      %s221 = sphi 0, %s223
      %s224 = sphi 0, %s221
      %s225 = sphi 0, %s224
      %s241 = sphi 0, %s225
    $region4: #{decoder_block.1} parent=1 // loop_header_branch
      %26 = sbr.rel (%p24) target = $region8
    $region5: #{decoder_block.1} parent=1 // loop_body
      %s28 = ssub.s32 %s23, 1
      %s29 = ssub.s32 %s23, 2
      %s30 = sadd.s32 %s23, 1
      %s31 = ssub.s32 %s23, %s30
      %p32 = scmp.eq.s32.totalorder %s31, 0
      %s34 = sadd.s32 %s33, 1
      %s35 = scalar_select %p32, %s33, %s34
      %p38 = pneg %p32
      %p39 = scmp.eq.s32.totalorder %s23, 1
      %p40 = por %p38, %p39
      %p41 = scmp.ne.s32.totalorder %s33, %s36
      %p42 = scmp.eq.s32.totalorder %s23, 0
      %p43 = por %p41, %p42
      %p44 = scmp.ne.s32.totalorder %s33, %s36
      %p45 = scmp.eq.s32.totalorder %s28, 1
      %p46 = por %p44, %p45
      %p47 = scmp.ne.s32.totalorder %s36, %s37
      %p48 = scmp.eq.s32.totalorder %s28, 0
      %p49 = por %p47, %p48
      %p50 = scmp.ne.s32.totalorder %s36, %s37
      %p51 = scmp.eq.s32.totalorder %s29, 1
      %p52 = por %p50, %p51
      %p54 = scmp.ne.s32.totalorder %s37, %s53
      %p55 = scmp.eq.s32.totalorder %s29, 0
      %p56 = por %p54, %p55
      %s57 = ssub.s32 %s23, %s30
      %p58 = scmp.eq.s32.totalorder %s57, 0
      %s60 = sadd.s32 %s59, 1
      %s61 = scalar_select %p58, %s59, %s60
      %p64 = pneg %p58
      %p65 = scmp.eq.s32.totalorder %s23, 1
      %p66 = por %p64, %p65
      %p67 = scmp.ne.s32.totalorder %s59, %s62
      %p68 = scmp.eq.s32.totalorder %s23, 0
      %p69 = por %p67, %p68
      %p70 = scmp.ne.s32.totalorder %s59, %s62
      %p71 = scmp.eq.s32.totalorder %s28, 1
      %p72 = por %p70, %p71
      %p73 = scmp.ne.s32.totalorder %s62, %s63
      %p74 = scmp.eq.s32.totalorder %s28, 0
      %p75 = por %p73, %p74
      %p76 = scmp.ne.s32.totalorder %s62, %s63
      %p77 = scmp.eq.s32.totalorder %s29, 1
      %p78 = por %p76, %p77
      %p80 = scmp.ne.s32.totalorder %s63, %s79
      %p81 = scmp.eq.s32.totalorder %s29, 0
      %p82 = por %p80, %p81
      %s83 = ssub.s32 %s23, %s30
      %p84 = scmp.eq.s32.totalorder %s83, 0
      %s86 = sadd.s32 %s85, 1
      %s87 = scalar_select %p84, %s85, %s86
      %p90 = pneg %p84
      %p91 = scmp.eq.s32.totalorder %s23, 1
      %p92 = por %p90, %p91
      %p93 = scmp.ne.s32.totalorder %s85, %s88
      %p94 = scmp.eq.s32.totalorder %s23, 0
      %p95 = por %p93, %p94
      %p96 = scmp.ne.s32.totalorder %s85, %s88
      %p97 = scmp.eq.s32.totalorder %s28, 1
      %p98 = por %p96, %p97
      %p99 = scmp.ne.s32.totalorder %s88, %s89
      %p100 = scmp.eq.s32.totalorder %s28, 0
      %p101 = por %p99, %p100
      %p102 = scmp.ne.s32.totalorder %s88, %s89
      %p103 = scmp.eq.s32.totalorder %s29, 1
      %p104 = por %p102, %p103
      %p106 = scmp.ne.s32.totalorder %s89, %s105
      %p107 = scmp.eq.s32.totalorder %s29, 0
      %p108 = por %p106, %p107
      %s109 = ssub.s32 %s23, %s30
      %p110 = scmp.eq.s32.totalorder %s109, 0
      %s112 = sadd.s32 %s111, 1
      %s113 = scalar_select %p110, %s111, %s112
      %p116 = pneg %p110
      %p117 = scmp.eq.s32.totalorder %s23, 1
      %p118 = por %p116, %p117
      %p119 = scmp.ne.s32.totalorder %s111, %s114
      %p120 = scmp.eq.s32.totalorder %s23, 0
      %p121 = por %p119, %p120
      %p122 = scmp.ne.s32.totalorder %s111, %s114
      %p123 = scmp.eq.s32.totalorder %s28, 1
      %p124 = por %p122, %p123
      %p125 = scmp.ne.s32.totalorder %s114, %s115
      %p126 = scmp.eq.s32.totalorder %s28, 0
      %p127 = por %p125, %p126
      %p128 = scmp.ne.s32.totalorder %s114, %s115
      %p129 = scmp.eq.s32.totalorder %s29, 1
      %p130 = por %p128, %p129
      %p132 = scmp.ne.s32.totalorder %s115, %s131
      %p133 = scmp.eq.s32.totalorder %s29, 0
      %p134 = por %p132, %p133
      %s136 = sadd.s32 %s135, 1
      %p139 = scmp.eq.s32.totalorder %s23, 1
      %p140 = scmp.ne.s32.totalorder %s135, %s137
      %p141 = scmp.eq.s32.totalorder %s23, 0
      %p142 = por %p140, %p141
      %p143 = scmp.ne.s32.totalorder %s135, %s137
      %p144 = scmp.eq.s32.totalorder %s28, 1
      %p145 = por %p143, %p144
      %p146 = scmp.ne.s32.totalorder %s137, %s138
      %p147 = scmp.eq.s32.totalorder %s28, 0
      %p148 = por %p146, %p147
      %p149 = scmp.ne.s32.totalorder %s137, %s138
      %p150 = scmp.eq.s32.totalorder %s29, 1
      %p151 = por %p149, %p150
      %p153 = scmp.ne.s32.totalorder %s138, %s152
      %p154 = scmp.eq.s32.totalorder %s29, 0
      %p155 = por %p153, %p154
      %s157 = sadd.s32 %s156, 1
      %p160 = scmp.eq.s32.totalorder %s23, 1
      %p161 = scmp.ne.s32.totalorder %s156, %s158
      %p162 = scmp.eq.s32.totalorder %s23, 0
      %p163 = por %p161, %p162
      %p164 = scmp.ne.s32.totalorder %s156, %s158
      %p165 = scmp.eq.s32.totalorder %s28, 1
      %p166 = por %p164, %p165
      %p167 = scmp.ne.s32.totalorder %s158, %s159
      %p168 = scmp.eq.s32.totalorder %s28, 0
      %p169 = por %p167, %p168
      %p170 = scmp.ne.s32.totalorder %s158, %s159
      %p171 = scmp.eq.s32.totalorder %s29, 1
      %p172 = por %p170, %p171
      %p174 = scmp.ne.s32.totalorder %s159, %s173
      %p175 = scmp.eq.s32.totalorder %s29, 0
      %p176 = por %p174, %p175
      %s178 = sadd.s32 %s177, 1
      %p181 = scmp.eq.s32.totalorder %s23, 1
      %p182 = scmp.ne.s32.totalorder %s177, %s179
      %p183 = scmp.eq.s32.totalorder %s23, 0
      %p184 = por %p182, %p183
      %p185 = scmp.ne.s32.totalorder %s177, %s179
      %p186 = scmp.eq.s32.totalorder %s28, 1
      %p187 = por %p185, %p186
      %p188 = scmp.ne.s32.totalorder %s179, %s180
      %p189 = scmp.eq.s32.totalorder %s28, 0
      %p190 = por %p188, %p189
      %p191 = scmp.ne.s32.totalorder %s179, %s180
      %p192 = scmp.eq.s32.totalorder %s29, 1
      %p193 = por %p191, %p192
      %p195 = scmp.ne.s32.totalorder %s180, %s194
      %p196 = scmp.eq.s32.totalorder %s29, 0
      %p197 = por %p195, %p196
      %s199 = sadd.s32 %s198, 1
      %p202 = scmp.eq.s32.totalorder %s23, 1
      %p203 = scmp.ne.s32.totalorder %s198, %s200
      %p204 = scmp.eq.s32.totalorder %s23, 0
      %p205 = por %p203, %p204
      %p206 = scmp.ne.s32.totalorder %s198, %s200
      %p207 = scmp.eq.s32.totalorder %s28, 1
      %p208 = por %p206, %p207
      %p209 = scmp.ne.s32.totalorder %s200, %s201
      %p210 = scmp.eq.s32.totalorder %s28, 0
      %p211 = por %p209, %p210
      %p212 = scmp.ne.s32.totalorder %s200, %s201
      %p213 = scmp.eq.s32.totalorder %s29, 1
      %p214 = por %p212, %p213
      %p216 = scmp.ne.s32.totalorder %s201, %s215
      %p217 = scmp.eq.s32.totalorder %s29, 0
      %p218 = por %p216, %p217
      %s219 = ssub.s32 %s23, %s30
      %p220 = scmp.eq.s32.totalorder %s219, 0
      %s222 = sadd.s32 %s221, 1
      %s223 = scalar_select %p220, %s221, %s222
      %p226 = pneg %p220
      %p227 = scmp.eq.s32.totalorder %s23, 1
      %p228 = por %p226, %p227
      %p229 = scmp.ne.s32.totalorder %s221, %s224
      %p230 = scmp.eq.s32.totalorder %s23, 0
      %p231 = por %p229, %p230
      %p232 = scmp.ne.s32.totalorder %s221, %s224
      %p233 = scmp.eq.s32.totalorder %s28, 1
      %p234 = por %p232, %p233
      %p235 = scmp.ne.s32.totalorder %s224, %s225
      %p236 = scmp.eq.s32.totalorder %s28, 0
      %p237 = por %p235, %p236
      %p238 = scmp.ne.s32.totalorder %s224, %s225
      %p239 = scmp.eq.s32.totalorder %s29, 1
      %p240 = por %p238, %p239
      %p242 = scmp.ne.s32.totalorder %s225, %s241
      %p243 = scmp.eq.s32.totalorder %s29, 0
      %p244 = por %p242, %p243
      %p245 = scmp.le.s32.totalorder 1, %s23
      %p246 = scmp.lt.s32.totalorder %s23, 3
      %p247 = pnand %p245, %p246
      %p248 = pneg %p247
      // Predicated region
      $region9: #{decoder_block.1} parent=5 // pred_check
        _
      $region10: #{decoder_block.1} parent=5 // pred_check_branch
        %250 = sbr.rel (%p247) target = $region12
      $region11: #{decoder_block.1} parent=5 // pred_region
        %s251 = ssub.s32 %s23, 1
        // Predicated region
        $region13: #{decoder_block.1} parent=11 // pred_check
          %p252 = pneg %p148
        $region14: #{decoder_block.1} parent=11 // pred_check_branch
          %254 = sbr.rel (%p252) target = $region16
        $region15: #{decoder_block.1} parent=11 // pred_region
          _
        $region16: #{decoder_block.1} parent=11 // pred_fallthru
          _
        // Predicated region
        $region17: #{decoder_block.1} parent=11 // pred_check
          %p255 = pneg %p169
        $region18: #{decoder_block.1} parent=11 // pred_check_branch
          %257 = sbr.rel (%p255) target = $region20
        $region19: #{decoder_block.1} parent=11 // pred_region
          _
        $region20: #{decoder_block.1} parent=11 // pred_fallthru
          _
        // Predicated region
        $region21: #{decoder_block.1} parent=11 // pred_check
          %p258 = pneg %p190
        $region22: #{decoder_block.1} parent=11 // pred_check_branch
          %260 = sbr.rel (%p258) target = $region24
        $region23: #{decoder_block.1} parent=11 // pred_region
          _
        $region24: #{decoder_block.1} parent=11 // pred_fallthru
          _
        // Predicated region
        $region25: #{decoder_block.1} parent=11 // pred_check
          %p261 = pneg %p211
        $region26: #{decoder_block.1} parent=11 // pred_check_branch
          %263 = sbr.rel (%p261) target = $region28
        $region27: #{decoder_block.1} parent=11 // pred_region
          _
        $region28: #{decoder_block.1} parent=11 // pred_fallthru
          _
      $region12: #{decoder_block.1} parent=5 // pred_fallthru
        _
      %p264 = scmp.lt.s32.totalorder %s23, 2
      // Predicated region
      $region29: #{decoder_block.1} parent=5 // pred_check
        %p265 = pneg %p264
      $region30: #{decoder_block.1} parent=5 // pred_check_branch
        %267 = sbr.rel (%p265) target = $region32
      $region31: #{decoder_block.1} parent=5 // pred_region
        // Predicated region
        $region33: #{decoder_block.1} parent=31 // pred_check
          %p268 = pneg %p43
        $region34: #{decoder_block.1} parent=31 // pred_check_branch
          %270 = sbr.rel (%p268) target = $region36
        $region35: #{decoder_block.1} parent=31 // pred_region
          %s271 = sand.u32 %s33, 1
          %s272 = scalar_lea.sflag [#allocation3], %s271
          %s273 = sand.u32 %s33, 1
          %s274 = smul.addr %s273, 8
          %s275 = scalar_lea.vmem [#allocation2], %s274
          %s277 = ssub.s32 128, 128
          %278 = vsyncadd %s272, %s277
          %s279 = smul.addr %s23, 128
          %s280 = scalar_lea.hbm %s0, %s279
          %s282 = sshll.u32 %s275, 4
          %s283 = int_to_ptr.vmem [resolvable:$true] %s282
          %285 = dma.hbm_to_vmem [thread:$0]  %s280, 128, %s283, %s272
        $region36: #{decoder_block.1} parent=31 // pred_fallthru
          _
        // Predicated region
        $region37: #{decoder_block.1} parent=31 // pred_check
          %p286 = pneg %p69
        $region38: #{decoder_block.1} parent=31 // pred_check_branch
          %288 = sbr.rel (%p286) target = $region40
        $region39: #{decoder_block.1} parent=31 // pred_region
          %p289 = scmp.lt.s32.totalorder %s23, 1
          %s290 = scalar_select %p289, %s23, 1
          %s291 = smul.addr %s290, 2
          %s292 = smul.addr %s291, 8
          %s293 = scalar_lea.vmem %s1, %s292
        $region40: #{decoder_block.1} parent=31 // pred_fallthru
          _
        // Predicated region
        $region41: #{decoder_block.1} parent=31 // pred_check
          %p294 = pneg %p95
        $region42: #{decoder_block.1} parent=31 // pred_check_branch
          %296 = sbr.rel (%p294) target = $region44
        $region43: #{decoder_block.1} parent=31 // pred_region
          %p297 = scmp.lt.s32.totalorder %s23, 1
          %s298 = scalar_select %p297, %s23, 1
          %s299 = smul.addr %s298, 4
          %s300 = smul.addr %s299, 8
          %s301 = scalar_lea.vmem %s2, %s300
        $region44: #{decoder_block.1} parent=31 // pred_fallthru
          _
        // Predicated region
        $region45: #{decoder_block.1} parent=31 // pred_check
          %p302 = pneg %p121
        $region46: #{decoder_block.1} parent=31 // pred_check_branch
          %304 = sbr.rel (%p302) target = $region48
        $region47: #{decoder_block.1} parent=31 // pred_region
          %s305 = sand.u32 %s111, 1
          %s306 = scalar_lea.sflag [#allocation6], %s305
          %s307 = sand.u32 %s111, 1
          %s308 = smul.addr %s307, 8
          %s309 = scalar_lea.vmem [#allocation5], %s308
          %s311 = ssub.s32 128, 128
          %312 = vsyncadd %s306, %s311
          %s313 = smul.addr %s23, 128
          %s314 = scalar_lea.hbm %s3, %s313
          %s316 = sshll.u32 %s309, 4
          %s317 = int_to_ptr.vmem [resolvable:$true] %s316
          %319 = dma.hbm_to_vmem [thread:$0]  %s314, 128, %s317, %s306
        $region48: #{decoder_block.1} parent=31 // pred_fallthru
          _
      $region32: #{decoder_block.1} parent=5 // pred_fallthru
        _
      %p320 = scmp.le.s32.totalorder 1, %s23
      %p321 = scmp.lt.s32.totalorder %s23, 3
      %p322 = pnand %p320, %p321
      %p323 = pneg %p322
      // Predicated region
      $region49: #{decoder_block.1} parent=5 // pred_check
        _
      $region50: #{decoder_block.1} parent=5 // pred_check_branch
        %325 = sbr.rel (%p322) target = $region52
      $region51: #{decoder_block.1} parent=5 // pred_region
        %s326 = ssub.s32 %s23, 1
        %s327 = sand.u32 %s36, 1
        %s328 = scalar_lea.sflag [#allocation3], %s327
        %s329 = sand.u32 %s36, 1
        %s330 = smul.addr %s329, 8
        %s331 = scalar_lea.vmem [#allocation2], %s330
        // Predicated region
        $region53: #{decoder_block.1} parent=51 // pred_check
          %p332 = pneg %p49
        $region54: #{decoder_block.1} parent=51 // pred_check_branch
          %334 = sbr.rel (%p332) target = $region56
        $region55: #{decoder_block.1} parent=51 // pred_region
          %335 = dma.done %s328, 128
        $region56: #{decoder_block.1} parent=51 // pred_fallthru
          _
        %s336 = sand.u32 %s114, 1
        %s337 = scalar_lea.sflag [#allocation6], %s336
        %s338 = sand.u32 %s114, 1
        %s339 = smul.addr %s338, 8
        %s340 = scalar_lea.vmem [#allocation5], %s339
        // Predicated region
        $region57: #{decoder_block.1} parent=51 // pred_check
          %p341 = pneg %p127
        $region58: #{decoder_block.1} parent=51 // pred_check_branch
          %343 = sbr.rel (%p341) target = $region60
        $region59: #{decoder_block.1} parent=51 // pred_region
          %344 = dma.done %s337, 128
        $region60: #{decoder_block.1} parent=51 // pred_fallthru
          _
        %s345 = sand.u32 %s36, 1
        %s346 = scalar_lea.sflag [#allocation3], %s345
        %s347 = sand.u32 %s36, 1
        %s348 = smul.addr %s347, 8
        %s349 = scalar_lea.vmem [#allocation2], %s348
        %p350 = pneg %p49
        %p351 = pneg %p46
        %p352 = scmp.lt.s32.totalorder %s28, 1
        %s353 = scalar_select %p352, %s28, 1
        %s354 = smul.addr %s353, 2
        %s355 = smul.addr %s354, 8
        %s356 = scalar_lea.vmem %s1, %s355
        %p357 = pneg %p75
        %p358 = pneg %p72
        %p359 = scmp.lt.s32.totalorder %s28, 1
        %s360 = scalar_select %p359, %s28, 1
        %s361 = smul.addr %s360, 4
        %s362 = smul.addr %s361, 8
        %s363 = scalar_lea.vmem %s2, %s362
        %p364 = pneg %p101
        %p365 = pneg %p98
        %s366 = sand.u32 %s114, 1
        %s367 = scalar_lea.sflag [#allocation6], %s366
        %s368 = sand.u32 %s114, 1
        %s369 = smul.addr %s368, 8
        %s370 = scalar_lea.vmem [#allocation5], %s369
        %p371 = pneg %p127
        %p372 = pneg %p124
        %p373 = pneg %p148
        %p374 = pneg %p145
        %p375 = pneg %p169
        %p376 = pneg %p166
        %p377 = pneg %p190
        %p378 = pneg %p187
        %p379 = pneg %p211
        %p380 = pneg %p208
        %p381 = pneg %p237
        %p382 = pneg %p234
        %s383 = sand.u32 %s224, 1
        %s384 = scalar_lea.sflag [#allocation4], %s383
        %s385 = sand.u32 %s224, 1
        %s386 = smul.addr %s385, 8
        %s387 = scalar_lea.vmem [#allocation7], %s386
        %p388 = scmp.lt.s32.totalorder %s28, 1
        %s389 = scalar_select %p388, %s28, 1
        %s390 = smul.addr %s389, 2
        %s391 = smul.addr %s390, 8
        %s392 = scalar_lea.vmem %s1, %s391
        %p393 = scmp.lt.s32.totalorder %s28, 1
        %s394 = scalar_select %p393, %s28, 1
        %s395 = smul.addr %s394, 4
        %s396 = smul.addr %s395, 8
        %s397 = scalar_lea.vmem %s2, %s396
        %v399 = vld [vmem:[%s331] sm:$0xff]
        %v400 = vld [vmem:[%s392] sm:$0xff]
        %v401 = vld [vmem:[%s392 + $0x8] sm:$0xff]
        %v402 = vld [vmem:[%s4] sm:$0x1]
        %v403 = vmul.f32 %v399, %v399
        %vm404 = vcmask 261120
        %v405 = vsel %vm404, %v403, 0.0
        %406 = vadd.xlane.f32.xlu0 %v405
        %v407 = vpop.xlane.xlu0 %406
        %v408 = vrcp.pop 32.0
        %v409 = vmul.f32 %v407, %v408
        %v410 = vadd.f32 %v409, 1e-06
        %v411 = vrsqrt.pop %v410
        %v412 = vmul.f32 %v399, %v411
        %v413 = vlaneseq
        %v414 = vshrl.u32 %v413, 7
        %v415 = vsub.s32 0, %v414
        %v416 = vrot.slane %v402, %v415
        %v417 = vmul.f32 %v416, %v412
        %v418 = vpack.c.bf16 %v417, %v417
        %v419 = vld [vmem:[%s5] sm:$0xf]
        %v420 = vld [vmem:[%s5 + $0x10] sm:$0xf]
        %v421 = vld [vmem:[%s5 + $0x20] sm:$0xf]
        %v422 = vld [vmem:[%s5 + $0x30] sm:$0xf]
        %v427 = vunpack.c.l.b16 %v419
        %v428 = vunpack.c.l.b16 %v420
        %v429 = vunpack.c.l.b16 %v421
        %v430 = vunpack.c.l.b16 %v422
        %v431 = vpack.c.b16 %v428, %v427
        %v432 = vpack.c.b16 %v430, %v429
        %v436 = vsel %vm404, %v418, 0
        %438 = vmatprep.subr.bf16.mxu0 0
        %439 = vmatpush1.bf16.msra.mxu0 %v431
        %440 = vmatprep.subr.bf16.mxu0 0
        %441 = vmatpush1.bf16.msra.mxu0 %v432
        %442 = vmatprep.subr.bf16.mxu0 0
        %443 = vmatpush1.bf16.msra.mxu0 0
        %444 = vmatprep.subr.bf16.mxu0 0
        %445 = vmatpush1.bf16.msra.mxu0 0
        %446 = vmatprep.subr.bf16.mxu0 0
        %447 = vmatpush1.bf16.msra.mxu0 0
        %448 = vmatprep.subr.bf16.mxu0 0
        %449 = vmatpush1.bf16.msra.mxu0 0
        %450 = vmatprep.subr.bf16.mxu0 0
        %451 = vmatpush1.bf16.msra.mxu0 0
        %452 = vmatprep.subr.bf16.mxu0 0
        %453 = vmatpush1.bf16.msra.mxu0 0
        %454 = vmatprep.subr.bf16.mxu0 0
        %455 = vmatpush1.bf16.msra.mxu0 0
        %456 = vmatprep.subr.bf16.mxu0 0
        %457 = vmatpush1.bf16.msra.mxu0 0
        %458 = vmatprep.subr.bf16.mxu0 0
        %459 = vmatpush1.bf16.msra.mxu0 0
        %460 = vmatprep.subr.bf16.mxu0 0
        %461 = vmatpush1.bf16.msra.mxu0 0
        %462 = vmatprep.subr.bf16.mxu0 0
        %463 = vmatpush1.bf16.msra.mxu0 0
        %464 = vmatprep.subr.bf16.mxu0 0
        %465 = vmatpush1.bf16.msra.mxu0 0
        %466 = vmatprep.subr.bf16.mxu0 0
        %467 = vmatpush1.bf16.msra.mxu0 0
        %468 = vmatprep.subr.bf16.mxu0 0
        %469 = vmatpush1.bf16.msra.mxu0 0
        %470 = vmatprep.mubr.bf16.mxu0 0
        %471 = vmatmul.mubr.bf16.gmra.mrb[0].mxu0 %v436
        %v472 = vpop.f32.mrb[0].mxu0
        %v473 = vadd.f32 0.0, %v472
        %v474 = vpop.f32.mrb[0].mxu0
        %v475 = vpop.f32.mrb[0].mxu0
        %v476 = vpop.f32.mrb[0].mxu0
        %477 = vdwg.mxu0
        %479 = vrot.lane.b32.xlu0 %v473, 120
        %v480 = vpop.permute.xlu0 %479
        %482 = vrot.lane.b32.xlu0 %v473, 112
        %v483 = vpop.permute.xlu0 %482
        %485 = vrot.lane.b32.xlu0 %v473, 104
        %v486 = vpop.permute.xlu0 %485
        %488 = vrot.lane.b32.xlu0 %v473, 96
        %v489 = vpop.permute.xlu0 %488
        %491 = vrot.lane.b32.xlu0 %v473, 88
        %v492 = vpop.permute.xlu0 %491
        %494 = vrot.lane.b32.xlu0 %v473, 80
        %v495 = vpop.permute.xlu0 %494
        %497 = vrot.lane.b32.xlu0 %v473, 72
        %v498 = vpop.permute.xlu0 %497
        %500 = vrot.lane.b32.xlu0 %v473, 64
        %v501 = vpop.permute.xlu0 %500
        %503 = vrot.lane.b32.xlu0 %v473, 56
        %v504 = vpop.permute.xlu0 %503
        %506 = vrot.lane.b32.xlu0 %v473, 48
        %v507 = vpop.permute.xlu0 %506
        %509 = vrot.lane.b32.xlu0 %v473, 40
        %v510 = vpop.permute.xlu0 %509
        %v512 = vcombine.low %v473, %v483
        %v513 = vcombine.high %v473, %v483
        %v515 = vunpack.c.l.s4 1983009808
        %v516 = vunpack.c.0.s8 %v515
        %v517 = vlaneseq
        %v518 = vshrl.u32 %v517, 7
        %v519 = vsub.s32 %v516, %v518
        %v520 = vrot.slane %v512, %v519
        %v522 = vunpack.c.l.s4 1983009808
        %v523 = vunpack.c.0.s8 %v522
        %v524 = vlaneseq
        %v525 = vshrl.u32 %v524, 7
        %v526 = vsub.s32 %v523, %v525
        %v527 = vrot.slane %v513, %v526
        %v528 = vcombine.low %v480, %v486
        %v529 = vcombine.high %v480, %v486
        %v531 = vunpack.c.l.s4 1983009808
        %v532 = vunpack.c.0.s8 %v531
        %v533 = vlaneseq
        %v534 = vshrl.u32 %v533, 7
        %v535 = vsub.s32 %v532, %v534
        %v536 = vrot.slane %v528, %v535
        %v538 = vunpack.c.l.s4 1983009808
        %v539 = vunpack.c.0.s8 %v538
        %v540 = vlaneseq
        %v541 = vshrl.u32 %v540, 7
        %v542 = vsub.s32 %v539, %v541
        %v543 = vrot.slane %v529, %v542
        %v544 = vcombine.low %v489, %v495
        %v545 = vcombine.high %v489, %v495
        %v547 = vunpack.c.l.s4 1983009808
        %v548 = vunpack.c.0.s8 %v547
        %v549 = vlaneseq
        %v550 = vshrl.u32 %v549, 7
        %v551 = vsub.s32 %v548, %v550
        %v552 = vrot.slane %v544, %v551
        %v554 = vunpack.c.l.s4 1983009808
        %v555 = vunpack.c.0.s8 %v554
        %v556 = vlaneseq
        %v557 = vshrl.u32 %v556, 7
        %v558 = vsub.s32 %v555, %v557
        %v559 = vrot.slane %v545, %v558
        %v560 = vcombine.low %v492, %v498
        %v561 = vcombine.high %v492, %v498
        %v563 = vunpack.c.l.s4 1983009808
        %v564 = vunpack.c.0.s8 %v563
        %v565 = vlaneseq
        %v566 = vshrl.u32 %v565, 7
        %v567 = vsub.s32 %v564, %v566
        %v568 = vrot.slane %v560, %v567
        %v570 = vunpack.c.l.s4 1983009808
        %v571 = vunpack.c.0.s8 %v570
        %v572 = vlaneseq
        %v573 = vshrl.u32 %v572, 7
        %v574 = vsub.s32 %v571, %v573
        %v575 = vrot.slane %v561, %v574
        %v576 = vcombine.low %v520, %v536
        %v577 = vcombine.high %v520, %v536
        %v579 = vunpack.c.l.s4 1934713408
        %v580 = vunpack.c.0.s8 %v579
        %v581 = vlaneseq
        %v582 = vshrl.u32 %v581, 7
        %v583 = vsub.s32 %v580, %v582
        %v584 = vrot.slane %v576, %v583
        %v586 = vunpack.c.l.s4 1934713408
        %v587 = vunpack.c.0.s8 %v586
        %v588 = vlaneseq
        %v589 = vshrl.u32 %v588, 7
        %v590 = vsub.s32 %v587, %v589
        %v591 = vrot.slane %v577, %v590
        %v592 = vcombine.low %v527, %v543
        %v593 = vcombine.high %v527, %v543
        %v595 = vunpack.c.l.s4 1934713408
        %v596 = vunpack.c.0.s8 %v595
        %v597 = vlaneseq
        %v598 = vshrl.u32 %v597, 7
        %v599 = vsub.s32 %v596, %v598
        %v600 = vrot.slane %v592, %v599
        %v602 = vunpack.c.l.s4 1934713408
        %v603 = vunpack.c.0.s8 %v602
        %v604 = vlaneseq
        %v605 = vshrl.u32 %v604, 7
        %v606 = vsub.s32 %v603, %v605
        %v607 = vrot.slane %v593, %v606
        %v608 = vcombine.low %v552, %v568
        %v609 = vcombine.high %v552, %v568
        %v611 = vunpack.c.l.s4 1934713408
        %v612 = vunpack.c.0.s8 %v611
        %v613 = vlaneseq
        %v614 = vshrl.u32 %v613, 7
        %v615 = vsub.s32 %v612, %v614
        %v616 = vrot.slane %v608, %v615
        %v618 = vunpack.c.l.s4 1934713408
        %v619 = vunpack.c.0.s8 %v618
        %v620 = vlaneseq
        %v621 = vshrl.u32 %v620, 7
        %v622 = vsub.s32 %v619, %v621
        %v623 = vrot.slane %v609, %v622
        %v624 = vcombine.low %v559, %v575
        %v625 = vcombine.high %v559, %v575
        %v627 = vunpack.c.l.s4 1934713408
        %v628 = vunpack.c.0.s8 %v627
        %v629 = vlaneseq
        %v630 = vshrl.u32 %v629, 7
        %v631 = vsub.s32 %v628, %v630
        %v632 = vrot.slane %v624, %v631
        %v634 = vunpack.c.l.s4 1934713408
        %v635 = vunpack.c.0.s8 %v634
        %v636 = vlaneseq
        %v637 = vshrl.u32 %v636, 7
        %v638 = vsub.s32 %v635, %v637
        %v639 = vrot.slane %v625, %v638
        %v640 = vcombine.low %v584, %v616
        %v641 = vcombine.high %v584, %v616
        %v642 = vcombine.low %v591, %v623
        %v643 = vcombine.high %v591, %v623
        %v644 = vcombine.low %v600, %v632
        %v645 = vcombine.high %v600, %v632
        %v646 = vcombine.low %v607, %v639
        %v647 = vcombine.high %v607, %v639
        %v648 = vcombine.low %v501, %v507
        %v649 = vcombine.high %v501, %v507
        %v651 = vunpack.c.l.s4 1983009808
        %v652 = vunpack.c.0.s8 %v651
        %v653 = vlaneseq
        %v654 = vshrl.u32 %v653, 7
        %v655 = vsub.s32 %v652, %v654
        %v656 = vrot.slane %v648, %v655
        %v658 = vunpack.c.l.s4 1983009808
        %v659 = vunpack.c.0.s8 %v658
        %v660 = vlaneseq
        %v661 = vshrl.u32 %v660, 7
        %v662 = vsub.s32 %v659, %v661
        %v663 = vrot.slane %v649, %v662
        %v664 = vcombine.low %v504, %v510
        %v665 = vcombine.high %v504, %v510
        %v667 = vunpack.c.l.s4 1983009808
        %v668 = vunpack.c.0.s8 %v667
        %v669 = vlaneseq
        %v670 = vshrl.u32 %v669, 7
        %v671 = vsub.s32 %v668, %v670
        %v672 = vrot.slane %v664, %v671
        %v674 = vunpack.c.l.s4 1983009808
        %v675 = vunpack.c.0.s8 %v674
        %v676 = vlaneseq
        %v677 = vshrl.u32 %v676, 7
        %v678 = vsub.s32 %v675, %v677
        %v679 = vrot.slane %v665, %v678
        %v680 = vcombine.low %v656, %v672
        %v681 = vcombine.high %v656, %v672
        %v683 = vunpack.c.l.s4 1934713408
        %v684 = vunpack.c.0.s8 %v683
        %v685 = vlaneseq
        %v686 = vshrl.u32 %v685, 7
        %v687 = vsub.s32 %v684, %v686
        %v688 = vrot.slane %v680, %v687
        %v690 = vunpack.c.l.s4 1934713408
        %v691 = vunpack.c.0.s8 %v690
        %v692 = vlaneseq
        %v693 = vshrl.u32 %v692, 7
        %v694 = vsub.s32 %v691, %v693
        %v695 = vrot.slane %v681, %v694
        %v696 = vcombine.low %v663, %v679
        %v697 = vcombine.high %v663, %v679
        %v699 = vunpack.c.l.s4 1934713408
        %v700 = vunpack.c.0.s8 %v699
        %v701 = vlaneseq
        %v702 = vshrl.u32 %v701, 7
        %v703 = vsub.s32 %v700, %v702
        %v704 = vrot.slane %v696, %v703
        %v706 = vunpack.c.l.s4 1934713408
        %v707 = vunpack.c.0.s8 %v706
        %v708 = vlaneseq
        %v709 = vshrl.u32 %v708, 7
        %v710 = vsub.s32 %v707, %v709
        %v711 = vrot.slane %v697, %v710
        %v712 = vcombine.high %v688, 0.0
        %v713 = vcombine.high %v695, 0.0
        %v714 = vcombine.high %v704, 0.0
        %v715 = vcombine.high %v711, 0.0
        %v716 = vcombine.low %v640, %v642
        %v717 = vcombine.high %v640, %v642
        %v719 = vunpack.c.l.s4 1983009808
        %v720 = vunpack.c.0.s8 %v719
        %v721 = vlaneseq
        %v722 = vshrl.u32 %v721, 7
        %v723 = vsub.s32 %v720, %v722
        %v724 = vrot.slane %v716, %v723
        %v726 = vunpack.c.l.s4 1983009808
        %v727 = vunpack.c.0.s8 %v726
        %v728 = vlaneseq
        %v729 = vshrl.u32 %v728, 7
        %v730 = vsub.s32 %v727, %v729
        %v731 = vrot.slane %v717, %v730
        %v732 = vcombine.low %v641, %v643
        %v733 = vcombine.high %v641, %v643
        %v735 = vunpack.c.l.s4 1983009808
        %v736 = vunpack.c.0.s8 %v735
        %v737 = vlaneseq
        %v738 = vshrl.u32 %v737, 7
        %v739 = vsub.s32 %v736, %v738
        %v740 = vrot.slane %v732, %v739
        %v742 = vunpack.c.l.s4 1983009808
        %v743 = vunpack.c.0.s8 %v742
        %v744 = vlaneseq
        %v745 = vshrl.u32 %v744, 7
        %v746 = vsub.s32 %v743, %v745
        %v747 = vrot.slane %v733, %v746
        %v748 = vcombine.low %v644, %v646
        %v749 = vcombine.high %v644, %v646
        %v751 = vunpack.c.l.s4 1983009808
        %v752 = vunpack.c.0.s8 %v751
        %v753 = vlaneseq
        %v754 = vshrl.u32 %v753, 7
        %v755 = vsub.s32 %v752, %v754
        %v756 = vrot.slane %v748, %v755
        %v758 = vunpack.c.l.s4 1983009808
        %v759 = vunpack.c.0.s8 %v758
        %v760 = vlaneseq
        %v761 = vshrl.u32 %v760, 7
        %v762 = vsub.s32 %v759, %v761
        %v763 = vrot.slane %v749, %v762
        %v764 = vcombine.low %v645, %v647
        %v765 = vcombine.high %v645, %v647
        %v767 = vunpack.c.l.s4 1983009808
        %v768 = vunpack.c.0.s8 %v767
        %v769 = vlaneseq
        %v770 = vshrl.u32 %v769, 7
        %v771 = vsub.s32 %v768, %v770
        %v772 = vrot.slane %v764, %v771
        %v774 = vunpack.c.l.s4 1983009808
        %v775 = vunpack.c.0.s8 %v774
        %v776 = vlaneseq
        %v777 = vshrl.u32 %v776, 7
        %v778 = vsub.s32 %v775, %v777
        %v779 = vrot.slane %v765, %v778
        %v780 = vcombine.low %v724, %v740
        %v781 = vcombine.high %v724, %v740
        %v783 = vunpack.c.l.s4 1934713408
        %v784 = vunpack.c.0.s8 %v783
        %v785 = vlaneseq
        %v786 = vshrl.u32 %v785, 7
        %v787 = vsub.s32 %v784, %v786
        %v788 = vrot.slane %v780, %v787
        %v790 = vunpack.c.l.s4 1934713408
        %v791 = vunpack.c.0.s8 %v790
        %v792 = vlaneseq
        %v793 = vshrl.u32 %v792, 7
        %v794 = vsub.s32 %v791, %v793
        %v795 = vrot.slane %v781, %v794
        %v796 = vcombine.low %v731, %v747
        %v797 = vcombine.high %v731, %v747
        %v799 = vunpack.c.l.s4 1934713408
        %v800 = vunpack.c.0.s8 %v799
        %v801 = vlaneseq
        %v802 = vshrl.u32 %v801, 7
        %v803 = vsub.s32 %v800, %v802
        %v804 = vrot.slane %v796, %v803
        %v806 = vunpack.c.l.s4 1934713408
        %v807 = vunpack.c.0.s8 %v806
        %v808 = vlaneseq
        %v809 = vshrl.u32 %v808, 7
        %v810 = vsub.s32 %v807, %v809
        %v811 = vrot.slane %v797, %v810
        %v812 = vcombine.low %v756, %v772
        %v813 = vcombine.high %v756, %v772
        %v815 = vunpack.c.l.s4 1934713408
        %v816 = vunpack.c.0.s8 %v815
        %v817 = vlaneseq
        %v818 = vshrl.u32 %v817, 7
        %v819 = vsub.s32 %v816, %v818
        %v820 = vrot.slane %v812, %v819
        %v822 = vunpack.c.l.s4 1934713408
        %v823 = vunpack.c.0.s8 %v822
        %v824 = vlaneseq
        %v825 = vshrl.u32 %v824, 7
        %v826 = vsub.s32 %v823, %v825
        %v827 = vrot.slane %v813, %v826
        %v828 = vcombine.low %v763, %v779
        %v829 = vcombine.high %v763, %v779
        %v831 = vunpack.c.l.s4 1934713408
        %v832 = vunpack.c.0.s8 %v831
        %v833 = vlaneseq
        %v834 = vshrl.u32 %v833, 7
        %v835 = vsub.s32 %v832, %v834
        %v836 = vrot.slane %v828, %v835
        %v838 = vunpack.c.l.s4 1934713408
        %v839 = vunpack.c.0.s8 %v838
        %v840 = vlaneseq
        %v841 = vshrl.u32 %v840, 7
        %v842 = vsub.s32 %v839, %v841
        %v843 = vrot.slane %v829, %v842
        %v844 = vcombine.low %v788, %v820
        %v845 = vcombine.high %v788, %v820
        %v846 = vcombine.low %v795, %v827
        %v847 = vcombine.high %v795, %v827
        %v848 = vcombine.low %v804, %v836
        %v849 = vcombine.high %v804, %v836
        %v850 = vcombine.low %v811, %v843
        %v851 = vcombine.high %v811, %v843
        %v852 = vcombine.low %v688, %v695
        %v854 = vunpack.c.l.s4 1983009808
        %v855 = vunpack.c.0.s8 %v854
        %v856 = vlaneseq
        %v857 = vshrl.u32 %v856, 7
        %v858 = vsub.s32 %v855, %v857
        %v859 = vrot.slane %v852, %v858
        %v860 = vcombine.low %v712, %v713
        %v862 = vunpack.c.l.s4 1983009808
        %v863 = vunpack.c.0.s8 %v862
        %v864 = vlaneseq
        %v865 = vshrl.u32 %v864, 7
        %v866 = vsub.s32 %v863, %v865
        %v867 = vrot.slane %v860, %v866
        %v868 = vcombine.low %v704, %v711
        %v870 = vunpack.c.l.s4 1983009808
        %v871 = vunpack.c.0.s8 %v870
        %v872 = vlaneseq
        %v873 = vshrl.u32 %v872, 7
        %v874 = vsub.s32 %v871, %v873
        %v875 = vrot.slane %v868, %v874
        %v876 = vcombine.low %v714, %v715
        %v878 = vunpack.c.l.s4 1983009808
        %v879 = vunpack.c.0.s8 %v878
        %v880 = vlaneseq
        %v881 = vshrl.u32 %v880, 7
        %v882 = vsub.s32 %v879, %v881
        %v883 = vrot.slane %v876, %v882
        %v884 = vcombine.low %v859, %v867
        %v885 = vcombine.high %v859, %v867
        %v887 = vunpack.c.l.s4 1934713408
        %v888 = vunpack.c.0.s8 %v887
        %v889 = vlaneseq
        %v890 = vshrl.u32 %v889, 7
        %v891 = vsub.s32 %v888, %v890
        %v892 = vrot.slane %v884, %v891
        %v894 = vunpack.c.l.s4 1934713408
        %v895 = vunpack.c.0.s8 %v894
        %v896 = vlaneseq
        %v897 = vshrl.u32 %v896, 7
        %v898 = vsub.s32 %v895, %v897
        %v899 = vrot.slane %v885, %v898
        %v900 = vcombine.low %v875, %v883
        %v901 = vcombine.high %v875, %v883
        %v903 = vunpack.c.l.s4 1934713408
        %v904 = vunpack.c.0.s8 %v903
        %v905 = vlaneseq
        %v906 = vshrl.u32 %v905, 7
        %v907 = vsub.s32 %v904, %v906
        %v908 = vrot.slane %v900, %v907
        %v910 = vunpack.c.l.s4 1934713408
        %v911 = vunpack.c.0.s8 %v910
        %v912 = vlaneseq
        %v913 = vshrl.u32 %v912, 7
        %v914 = vsub.s32 %v911, %v913
        %v915 = vrot.slane %v901, %v914
        %v916 = vcombine.low %v892, %v908
        %v917 = vcombine.high %v892, %v908
        %v918 = vcombine.low %v899, %v915
        %v919 = vcombine.high %v899, %v915
        %v920 = vld [vmem:[%s397] sm:$0xff]
        %v921 = vld [vmem:[%s397 + $0x8] sm:$0xff]
        %v922 = vld [vmem:[%s397 + $0x10] sm:$0xff]
        %v923 = vld [vmem:[%s397 + $0x18] sm:$0xff]
        %vm924 = vcmask 64512
        %v926 = vsel %vm924, %v844, 0
        %v929 = vsel %vm924, %v848, 0
        %931 = vmatprep.subr.mxu0 0.0
        %932 = vmatpush1.xpose.msra.mxu0 %v929
        %933 = vmatprep.subr.mxu0 0.0
        %934 = vmatpush1.xpose.msra.mxu0 0.0
        %935 = vmatprep.subr.mxu0 0.0
        %936 = vmatpush1.xpose.msra.mxu0 0.0
        %937 = vmatprep.subr.mxu0 0.0
        %938 = vmatpush1.xpose.msra.mxu0 0.0
        %939 = vmatprep.subr.mxu0 0.0
        %940 = vmatpush1.xpose.msra.mxu0 0.0
        %941 = vmatprep.subr.mxu0 0.0
        %942 = vmatpush1.xpose.msra.mxu0 0.0
        %943 = vmatprep.subr.mxu0 0.0
        %944 = vmatpush1.xpose.msra.mxu0 0.0
        %945 = vmatprep.subr.mxu0 0.0
        %946 = vmatpush1.xpose.msra.mxu0 0.0
        %947 = vmatprep.subr.mxu0 0.0
        %948 = vmatpush1.xpose.msra.mxu0 0.0
        %949 = vmatprep.subr.mxu0 0.0
        %950 = vmatpush1.xpose.msra.mxu0 0.0
        %951 = vmatprep.subr.mxu0 0.0
        %952 = vmatpush1.xpose.msra.mxu0 0.0
        %953 = vmatprep.subr.mxu0 0.0
        %954 = vmatpush1.xpose.msra.mxu0 0.0
        %955 = vmatprep.subr.mxu0 0.0
        %956 = vmatpush1.xpose.msra.mxu0 0.0
        %957 = vmatprep.subr.mxu0 0.0
        %958 = vmatpush1.xpose.msra.mxu0 0.0
        %959 = vmatprep.subr.mxu0 0.0
        %960 = vmatpush1.xpose.msra.mxu0 0.0
        %961 = vmatprep.subr.mxu0 0.0
        %962 = vmatpush1.xpose.msra.mxu0 0.0
        %963 = vmatprep.subr.mxu0 0.0
        %964 = vmatpush1.xpose.msra.mxu0 0.0
        %965 = vmatprep.subr.mxu0 0.0
        %966 = vmatpush1.xpose.msra.mxu0 0.0
        %967 = vmatprep.subr.mxu0 0.0
        %968 = vmatpush1.xpose.msra.mxu0 0.0
        %969 = vmatprep.subr.mxu0 0.0
        %970 = vmatpush1.xpose.msra.mxu0 0.0
        %971 = vmatprep.subr.mxu0 0.0
        %972 = vmatpush1.xpose.msra.mxu0 0.0
        %973 = vmatprep.subr.mxu0 0.0
        %974 = vmatpush1.xpose.msra.mxu0 0.0
        %975 = vmatprep.subr.mxu0 0.0
        %976 = vmatpush1.xpose.msra.mxu0 0.0
        %977 = vmatprep.subr.mxu0 0.0
        %978 = vmatpush1.xpose.msra.mxu0 0.0
        %979 = vmatprep.subr.mxu0 0.0
        %980 = vmatpush1.xpose.msra.mxu0 0.0
        %981 = vmatprep.subr.mxu0 0.0
        %982 = vmatpush1.xpose.msra.mxu0 0.0
        %983 = vmatprep.subr.mxu0 0.0
        %984 = vmatpush1.xpose.msra.mxu0 0.0
        %985 = vmatprep.subr.mxu0 0.0
        %986 = vmatpush1.xpose.msra.mxu0 0.0
        %987 = vmatprep.subr.mxu0 0.0
        %988 = vmatpush1.xpose.msra.mxu0 0.0
        %989 = vmatprep.subr.mxu0 0.0
        %990 = vmatpush1.xpose.msra.mxu0 0.0
        %991 = vmatprep.subr.mxu0 0.0
        %992 = vmatpush1.xpose.msra.mxu0 0.0
        %993 = vmatprep.subr.mxu0 0.0
        %994 = vmatpush1.xpose.msra.mxu0 0.0
        %995 = vmatprep.mubr.f32.mxu0 0.0
        %996 = vmatmul.mubr.f32.gmra.mrb[0].mxu0 %v926
        %v997 = vpop.f32.mrb[0].mxu0
        %v998 = vadd.f32 %v920, %v997
        %v999 = vpop.f32.mrb[0].mxu0
        %1000 = vdwg.mxu0
        %v1002 = vsel %vm924, %v845, 0
        %v1005 = vsel %vm924, %v849, 0
        %1007 = vmatprep.subr.mxu0 0.0
        %1008 = vmatpush1.xpose.msra.mxu0 %v1005
        %1009 = vmatprep.subr.mxu0 0.0
        %1010 = vmatpush1.xpose.msra.mxu0 0.0
        %1011 = vmatprep.subr.mxu0 0.0
        %1012 = vmatpush1.xpose.msra.mxu0 0.0
        %1013 = vmatprep.subr.mxu0 0.0
        %1014 = vmatpush1.xpose.msra.mxu0 0.0
        %1015 = vmatprep.subr.mxu0 0.0
        %1016 = vmatpush1.xpose.msra.mxu0 0.0
        %1017 = vmatprep.subr.mxu0 0.0
        %1018 = vmatpush1.xpose.msra.mxu0 0.0
        %1019 = vmatprep.subr.mxu0 0.0
        %1020 = vmatpush1.xpose.msra.mxu0 0.0
        %1021 = vmatprep.subr.mxu0 0.0
        %1022 = vmatpush1.xpose.msra.mxu0 0.0
        %1023 = vmatprep.subr.mxu0 0.0
        %1024 = vmatpush1.xpose.msra.mxu0 0.0
        %1025 = vmatprep.subr.mxu0 0.0
        %1026 = vmatpush1.xpose.msra.mxu0 0.0
        %1027 = vmatprep.subr.mxu0 0.0
        %1028 = vmatpush1.xpose.msra.mxu0 0.0
        %1029 = vmatprep.subr.mxu0 0.0
        %1030 = vmatpush1.xpose.msra.mxu0 0.0
        %1031 = vmatprep.subr.mxu0 0.0
        %1032 = vmatpush1.xpose.msra.mxu0 0.0
        %1033 = vmatprep.subr.mxu0 0.0
        %1034 = vmatpush1.xpose.msra.mxu0 0.0
        %1035 = vmatprep.subr.mxu0 0.0
        %1036 = vmatpush1.xpose.msra.mxu0 0.0
        %1037 = vmatprep.subr.mxu0 0.0
        %1038 = vmatpush1.xpose.msra.mxu0 0.0
        %1039 = vmatprep.subr.mxu0 0.0
        %1040 = vmatpush1.xpose.msra.mxu0 0.0
        %1041 = vmatprep.subr.mxu0 0.0
        %1042 = vmatpush1.xpose.msra.mxu0 0.0
        %1043 = vmatprep.subr.mxu0 0.0
        %1044 = vmatpush1.xpose.msra.mxu0 0.0
        %1045 = vmatprep.subr.mxu0 0.0
        %1046 = vmatpush1.xpose.msra.mxu0 0.0
        %1047 = vmatprep.subr.mxu0 0.0
        %1048 = vmatpush1.xpose.msra.mxu0 0.0
        %1049 = vmatprep.subr.mxu0 0.0
        %1050 = vmatpush1.xpose.msra.mxu0 0.0
        %1051 = vmatprep.subr.mxu0 0.0
        %1052 = vmatpush1.xpose.msra.mxu0 0.0
        %1053 = vmatprep.subr.mxu0 0.0
        %1054 = vmatpush1.xpose.msra.mxu0 0.0
        %1055 = vmatprep.subr.mxu0 0.0
        %1056 = vmatpush1.xpose.msra.mxu0 0.0
        %1057 = vmatprep.subr.mxu0 0.0
        %1058 = vmatpush1.xpose.msra.mxu0 0.0
        %1059 = vmatprep.subr.mxu0 0.0
        %1060 = vmatpush1.xpose.msra.mxu0 0.0
        %1061 = vmatprep.subr.mxu0 0.0
        %1062 = vmatpush1.xpose.msra.mxu0 0.0
        %1063 = vmatprep.subr.mxu0 0.0
        %1064 = vmatpush1.xpose.msra.mxu0 0.0
        %1065 = vmatprep.subr.mxu0 0.0
        %1066 = vmatpush1.xpose.msra.mxu0 0.0
        %1067 = vmatprep.subr.mxu0 0.0
        %1068 = vmatpush1.xpose.msra.mxu0 0.0
        %1069 = vmatprep.subr.mxu0 0.0
        %1070 = vmatpush1.xpose.msra.mxu0 0.0
        %1071 = vmatprep.mubr.f32.mxu0 0.0
        %1072 = vmatmul.mubr.f32.gmra.mrb[0].mxu0 %v1002
        %v1073 = vpop.f32.mrb[0].mxu0
        %v1074 = vadd.f32 %v921, %v1073
        %v1075 = vpop.f32.mrb[0].mxu0
        %1076 = vdwg.mxu0
        %v1078 = vsel %vm924, %v846, 0
        %v1081 = vsel %vm924, %v850, 0
        %1083 = vmatprep.subr.mxu0 0.0
        %1084 = vmatpush1.xpose.msra.mxu0 %v1081
        %1085 = vmatprep.subr.mxu0 0.0
        %1086 = vmatpush1.xpose.msra.mxu0 0.0
        %1087 = vmatprep.subr.mxu0 0.0
        %1088 = vmatpush1.xpose.msra.mxu0 0.0
        %1089 = vmatprep.subr.mxu0 0.0
        %1090 = vmatpush1.xpose.msra.mxu0 0.0
        %1091 = vmatprep.subr.mxu0 0.0
        %1092 = vmatpush1.xpose.msra.mxu0 0.0
        %1093 = vmatprep.subr.mxu0 0.0
        %1094 = vmatpush1.xpose.msra.mxu0 0.0
        %1095 = vmatprep.subr.mxu0 0.0
        %1096 = vmatpush1.xpose.msra.mxu0 0.0
        %1097 = vmatprep.subr.mxu0 0.0
        %1098 = vmatpush1.xpose.msra.mxu0 0.0
        %1099 = vmatprep.subr.mxu0 0.0
        %1100 = vmatpush1.xpose.msra.mxu0 0.0
        %1101 = vmatprep.subr.mxu0 0.0
        %1102 = vmatpush1.xpose.msra.mxu0 0.0
        %1103 = vmatprep.subr.mxu0 0.0
        %1104 = vmatpush1.xpose.msra.mxu0 0.0
        %1105 = vmatprep.subr.mxu0 0.0
        %1106 = vmatpush1.xpose.msra.mxu0 0.0
        %1107 = vmatprep.subr.mxu0 0.0
        %1108 = vmatpush1.xpose.msra.mxu0 0.0
        %1109 = vmatprep.subr.mxu0 0.0
        %1110 = vmatpush1.xpose.msra.mxu0 0.0
        %1111 = vmatprep.subr.mxu0 0.0
        %1112 = vmatpush1.xpose.msra.mxu0 0.0
        %1113 = vmatprep.subr.mxu0 0.0
        %1114 = vmatpush1.xpose.msra.mxu0 0.0
        %1115 = vmatprep.subr.mxu0 0.0
        %1116 = vmatpush1.xpose.msra.mxu0 0.0
        %1117 = vmatprep.subr.mxu0 0.0
        %1118 = vmatpush1.xpose.msra.mxu0 0.0
        %1119 = vmatprep.subr.mxu0 0.0
        %1120 = vmatpush1.xpose.msra.mxu0 0.0
        %1121 = vmatprep.subr.mxu0 0.0
        %1122 = vmatpush1.xpose.msra.mxu0 0.0
        %1123 = vmatprep.subr.mxu0 0.0
        %1124 = vmatpush1.xpose.msra.mxu0 0.0
        %1125 = vmatprep.subr.mxu0 0.0
        %1126 = vmatpush1.xpose.msra.mxu0 0.0
        %1127 = vmatprep.subr.mxu0 0.0
        %1128 = vmatpush1.xpose.msra.mxu0 0.0
        %1129 = vmatprep.subr.mxu0 0.0
        %1130 = vmatpush1.xpose.msra.mxu0 0.0
        %1131 = vmatprep.subr.mxu0 0.0
        %1132 = vmatpush1.xpose.msra.mxu0 0.0
        %1133 = vmatprep.subr.mxu0 0.0
        %1134 = vmatpush1.xpose.msra.mxu0 0.0
        %1135 = vmatprep.subr.mxu0 0.0
        %1136 = vmatpush1.xpose.msra.mxu0 0.0
        %1137 = vmatprep.subr.mxu0 0.0
        %1138 = vmatpush1.xpose.msra.mxu0 0.0
        %1139 = vmatprep.subr.mxu0 0.0
        %1140 = vmatpush1.xpose.msra.mxu0 0.0
        %1141 = vmatprep.subr.mxu0 0.0
        %1142 = vmatpush1.xpose.msra.mxu0 0.0
        %1143 = vmatprep.subr.mxu0 0.0
        %1144 = vmatpush1.xpose.msra.mxu0 0.0
        %1145 = vmatprep.subr.mxu0 0.0
        %1146 = vmatpush1.xpose.msra.mxu0 0.0
        %1147 = vmatprep.mubr.f32.mxu0 0.0
        %1148 = vmatmul.mubr.f32.gmra.mrb[0].mxu0 %v1078
        %v1149 = vpop.f32.mrb[0].mxu0
        %v1150 = vadd.f32 %v922, %v1149
        %v1151 = vpop.f32.mrb[0].mxu0
        %1152 = vdwg.mxu0
        %v1154 = vsel %vm924, %v847, 0
        %v1157 = vsel %vm924, %v851, 0
        %1159 = vmatprep.subr.mxu0 0.0
        %1160 = vmatpush1.xpose.msra.mxu0 %v1157
        %1161 = vmatprep.subr.mxu0 0.0
        %1162 = vmatpush1.xpose.msra.mxu0 0.0
        %1163 = vmatprep.subr.mxu0 0.0
        %1164 = vmatpush1.xpose.msra.mxu0 0.0
        %1165 = vmatprep.subr.mxu0 0.0
        %1166 = vmatpush1.xpose.msra.mxu0 0.0
        %1167 = vmatprep.subr.mxu0 0.0
        %1168 = vmatpush1.xpose.msra.mxu0 0.0
        %1169 = vmatprep.subr.mxu0 0.0
        %1170 = vmatpush1.xpose.msra.mxu0 0.0
        %1171 = vmatprep.subr.mxu0 0.0
        %1172 = vmatpush1.xpose.msra.mxu0 0.0
        %1173 = vmatprep.subr.mxu0 0.0
        %1174 = vmatpush1.xpose.msra.mxu0 0.0
        %1175 = vmatprep.subr.mxu0 0.0
        %1176 = vmatpush1.xpose.msra.mxu0 0.0
        %1177 = vmatprep.subr.mxu0 0.0
        %1178 = vmatpush1.xpose.msra.mxu0 0.0
        %1179 = vmatprep.subr.mxu0 0.0
        %1180 = vmatpush1.xpose.msra.mxu0 0.0
        %1181 = vmatprep.subr.mxu0 0.0
        %1182 = vmatpush1.xpose.msra.mxu0 0.0
        %1183 = vmatprep.subr.mxu0 0.0
        %1184 = vmatpush1.xpose.msra.mxu0 0.0
        %1185 = vmatprep.subr.mxu0 0.0
        %1186 = vmatpush1.xpose.msra.mxu0 0.0
        %1187 = vmatprep.subr.mxu0 0.0
        %1188 = vmatpush1.xpose.msra.mxu0 0.0
        %1189 = vmatprep.subr.mxu0 0.0
        %1190 = vmatpush1.xpose.msra.mxu0 0.0
        %1191 = vmatprep.subr.mxu0 0.0
        %1192 = vmatpush1.xpose.msra.mxu0 0.0
        %1193 = vmatprep.subr.mxu0 0.0
        %1194 = vmatpush1.xpose.msra.mxu0 0.0
        %1195 = vmatprep.subr.mxu0 0.0
        %1196 = vmatpush1.xpose.msra.mxu0 0.0
        %1197 = vmatprep.subr.mxu0 0.0
        %1198 = vmatpush1.xpose.msra.mxu0 0.0
        %1199 = vmatprep.subr.mxu0 0.0
        %1200 = vmatpush1.xpose.msra.mxu0 0.0
        %1201 = vmatprep.subr.mxu0 0.0
        %1202 = vmatpush1.xpose.msra.mxu0 0.0
        %1203 = vmatprep.subr.mxu0 0.0
        %1204 = vmatpush1.xpose.msra.mxu0 0.0
        %1205 = vmatprep.subr.mxu0 0.0
        %1206 = vmatpush1.xpose.msra.mxu0 0.0
        %1207 = vmatprep.subr.mxu0 0.0
        %1208 = vmatpush1.xpose.msra.mxu0 0.0
        %1209 = vmatprep.subr.mxu0 0.0
        %1210 = vmatpush1.xpose.msra.mxu0 0.0
        %1211 = vmatprep.subr.mxu0 0.0
        %1212 = vmatpush1.xpose.msra.mxu0 0.0
        %1213 = vmatprep.subr.mxu0 0.0
        %1214 = vmatpush1.xpose.msra.mxu0 0.0
        %1215 = vmatprep.subr.mxu0 0.0
        %1216 = vmatpush1.xpose.msra.mxu0 0.0
        %1217 = vmatprep.subr.mxu0 0.0
        %1218 = vmatpush1.xpose.msra.mxu0 0.0
        %1219 = vmatprep.subr.mxu0 0.0
        %1220 = vmatpush1.xpose.msra.mxu0 0.0
        %1221 = vmatprep.subr.mxu0 0.0
        %1222 = vmatpush1.xpose.msra.mxu0 0.0
        %1223 = vmatprep.mubr.f32.mxu0 0.0
        %1224 = vmatmul.mubr.f32.gmra.mrb[0].mxu0 %v1154
        %v1225 = vpop.f32.mrb[0].mxu0
        %v1226 = vadd.f32 %v923, %v1225
        %v1227 = vpop.f32.mrb[0].mxu0
        %1228 = vdwg.mxu0
        %v1229 = vsel %vm924, %v998, -inf
        %1230 = vmax.xlane.f32.xlu0 %v1229
        %v1231 = vpop.xlane.xlu0 %1230
        %v1232 = vsel %vm924, %v1074, -inf
        %1233 = vmax.xlane.f32.xlu0 %v1232
        %v1234 = vpop.xlane.xlu0 %1233
        %v1235 = vsel %vm924, %v1150, -inf
        %1236 = vmax.xlane.f32.xlu0 %v1235
        %v1237 = vpop.xlane.xlu0 %1236
        %v1238 = vsel %vm924, %v1226, -inf
        %1239 = vmax.xlane.f32.xlu0 %v1238
        %v1240 = vpop.xlane.xlu0 %1239
        %v1241 = vsub.f32 %v998, %v1231
        %v1242 = vsub.f32 %v1074, %v1234
        %v1243 = vsub.f32 %v1150, %v1237
        %v1244 = vsub.f32 %v1226, %v1240
        %v1245 = vmul.f32 %v1241, 1.442695
        %v1246 = vpow.pop %v1245
        %v1247 = vmul.f32 %v1242, 1.442695
        %v1248 = vpow.pop %v1247
        %v1249 = vmul.f32 %v1243, 1.442695
        %v1250 = vpow.pop %v1249
        %v1251 = vmul.f32 %v1244, 1.442695
        %v1252 = vpow.pop %v1251
        %v1253 = vsel %vm924, %v1246, 0.0
        %1254 = vadd.xlane.f32.xlu0 %v1253
        %v1255 = vpop.xlane.xlu0 %1254
        %v1256 = vsel %vm924, %v1248, 0.0
        %1257 = vadd.xlane.f32.xlu0 %v1256
        %v1258 = vpop.xlane.xlu0 %1257
        %v1259 = vsel %vm924, %v1250, 0.0
        %1260 = vadd.xlane.f32.xlu0 %v1259
        %v1261 = vpop.xlane.xlu0 %1260
        %v1262 = vsel %vm924, %v1252, 0.0
        %1263 = vadd.xlane.f32.xlu0 %v1262
        %v1264 = vpop.xlane.xlu0 %1263
        %v1265 = vrcp.pop %v1255
        %v1266 = vrcp.pop %v1258
        %v1267 = vrcp.pop %v1261
        %v1268 = vrcp.pop %v1264
        %v1269 = vmul.f32 %v1246, %v1265
        %v1270 = vmul.f32 %v1248, %v1266
        %v1271 = vmul.f32 %v1250, %v1267
        %v1272 = vmul.f32 %v1252, %v1268
        %v1274 = vsel %vm924, %v1269, 0
        %1276 = vmatprep.subr.mxu0 0.0
        %1277 = vmatpush1.msra.mxu0 %v916
        %1278 = vmatprep.subr.mxu0 0.0
        %1279 = vmatpush1.msra.mxu0 0.0
        %1280 = vmatprep.subr.mxu0 0.0
        %1281 = vmatpush1.msra.mxu0 0.0
        %1282 = vmatprep.subr.mxu0 0.0
        %1283 = vmatpush1.msra.mxu0 0.0
        %1284 = vmatprep.subr.mxu0 0.0
        %1285 = vmatpush1.msra.mxu0 0.0
        %1286 = vmatprep.subr.mxu0 0.0
        %1287 = vmatpush1.msra.mxu0 0.0
        %1288 = vmatprep.subr.mxu0 0.0
        %1289 = vmatpush1.msra.mxu0 0.0
        %1290 = vmatprep.subr.mxu0 0.0
        %1291 = vmatpush1.msra.mxu0 0.0
        %1292 = vmatprep.subr.mxu0 0.0
        %1293 = vmatpush1.msra.mxu0 0.0
        %1294 = vmatprep.subr.mxu0 0.0
        %1295 = vmatpush1.msra.mxu0 0.0
        %1296 = vmatprep.subr.mxu0 0.0
        %1297 = vmatpush1.msra.mxu0 0.0
        %1298 = vmatprep.subr.mxu0 0.0
        %1299 = vmatpush1.msra.mxu0 0.0
        %1300 = vmatprep.subr.mxu0 0.0
        %1301 = vmatpush1.msra.mxu0 0.0
        %1302 = vmatprep.subr.mxu0 0.0
        %1303 = vmatpush1.msra.mxu0 0.0
        %1304 = vmatprep.subr.mxu0 0.0
        %1305 = vmatpush1.msra.mxu0 0.0
        %1306 = vmatprep.subr.mxu0 0.0
        %1307 = vmatpush1.msra.mxu0 0.0
        %1308 = vmatprep.subr.mxu0 0.0
        %1309 = vmatpush1.msra.mxu0 0.0
        %1310 = vmatprep.subr.mxu0 0.0
        %1311 = vmatpush1.msra.mxu0 0.0
        %1312 = vmatprep.subr.mxu0 0.0
        %1313 = vmatpush1.msra.mxu0 0.0
        %1314 = vmatprep.subr.mxu0 0.0
        %1315 = vmatpush1.msra.mxu0 0.0
        %1316 = vmatprep.subr.mxu0 0.0
        %1317 = vmatpush1.msra.mxu0 0.0
        %1318 = vmatprep.subr.mxu0 0.0
        %1319 = vmatpush1.msra.mxu0 0.0
        %1320 = vmatprep.subr.mxu0 0.0
        %1321 = vmatpush1.msra.mxu0 0.0
        %1322 = vmatprep.subr.mxu0 0.0
        %1323 = vmatpush1.msra.mxu0 0.0
        %1324 = vmatprep.subr.mxu0 0.0
        %1325 = vmatpush1.msra.mxu0 0.0
        %1326 = vmatprep.subr.mxu0 0.0
        %1327 = vmatpush1.msra.mxu0 0.0
        %1328 = vmatprep.subr.mxu0 0.0
        %1329 = vmatpush1.msra.mxu0 0.0
        %1330 = vmatprep.subr.mxu0 0.0
        %1331 = vmatpush1.msra.mxu0 0.0
        %1332 = vmatprep.subr.mxu0 0.0
        %1333 = vmatpush1.msra.mxu0 0.0
        %1334 = vmatprep.subr.mxu0 0.0
        %1335 = vmatpush1.msra.mxu0 0.0
        %1336 = vmatprep.subr.mxu0 0.0
        %1337 = vmatpush1.msra.mxu0 0.0
        %1338 = vmatprep.subr.mxu0 0.0
        %1339 = vmatpush1.msra.mxu0 0.0
        %1340 = vmatprep.mubr.f32.mxu0 0.0
        %1341 = vmatmul.mubr.f32.gmra.mrb[0].mxu0 %v1274
        %v1342 = vpop.f32.mrb[0].mxu0
        %v1343 = vadd.f32 0.0, %v1342
        %v1344 = vpop.f32.mrb[0].mxu0
        %1345 = vdwg.mxu0
        %v1347 = vsel %vm924, %v1270, 0
        %1349 = vmatprep.subr.mxu0 0.0
        %1350 = vmatpush1.msra.mxu0 %v917
        %1351 = vmatprep.subr.mxu0 0.0
        %1352 = vmatpush1.msra.mxu0 0.0
        %1353 = vmatprep.subr.mxu0 0.0
        %1354 = vmatpush1.msra.mxu0 0.0
        %1355 = vmatprep.subr.mxu0 0.0
        %1356 = vmatpush1.msra.mxu0 0.0
        %1357 = vmatprep.subr.mxu0 0.0
        %1358 = vmatpush1.msra.mxu0 0.0
        %1359 = vmatprep.subr.mxu0 0.0
        %1360 = vmatpush1.msra.mxu0 0.0
        %1361 = vmatprep.subr.mxu0 0.0
        %1362 = vmatpush1.msra.mxu0 0.0
        %1363 = vmatprep.subr.mxu0 0.0
        %1364 = vmatpush1.msra.mxu0 0.0
        %1365 = vmatprep.subr.mxu0 0.0
        %1366 = vmatpush1.msra.mxu0 0.0
        %1367 = vmatprep.subr.mxu0 0.0
        %1368 = vmatpush1.msra.mxu0 0.0
        %1369 = vmatprep.subr.mxu0 0.0
        %1370 = vmatpush1.msra.mxu0 0.0
        %1371 = vmatprep.subr.mxu0 0.0
        %1372 = vmatpush1.msra.mxu0 0.0
        %1373 = vmatprep.subr.mxu0 0.0
        %1374 = vmatpush1.msra.mxu0 0.0
        %1375 = vmatprep.subr.mxu0 0.0
        %1376 = vmatpush1.msra.mxu0 0.0
        %1377 = vmatprep.subr.mxu0 0.0
        %1378 = vmatpush1.msra.mxu0 0.0
        %1379 = vmatprep.subr.mxu0 0.0
        %1380 = vmatpush1.msra.mxu0 0.0
        %1381 = vmatprep.subr.mxu0 0.0
        %1382 = vmatpush1.msra.mxu0 0.0
        %1383 = vmatprep.subr.mxu0 0.0
        %1384 = vmatpush1.msra.mxu0 0.0
        %1385 = vmatprep.subr.mxu0 0.0
        %1386 = vmatpush1.msra.mxu0 0.0
        %1387 = vmatprep.subr.mxu0 0.0
        %1388 = vmatpush1.msra.mxu0 0.0
        %1389 = vmatprep.subr.mxu0 0.0
        %1390 = vmatpush1.msra.mxu0 0.0
        %1391 = vmatprep.subr.mxu0 0.0
        %1392 = vmatpush1.msra.mxu0 0.0
        %1393 = vmatprep.subr.mxu0 0.0
        %1394 = vmatpush1.msra.mxu0 0.0
        %1395 = vmatprep.subr.mxu0 0.0
        %1396 = vmatpush1.msra.mxu0 0.0
        %1397 = vmatprep.subr.mxu0 0.0
        %1398 = vmatpush1.msra.mxu0 0.0
        %1399 = vmatprep.subr.mxu0 0.0
        %1400 = vmatpush1.msra.mxu0 0.0
        %1401 = vmatprep.subr.mxu0 0.0
        %1402 = vmatpush1.msra.mxu0 0.0
        %1403 = vmatprep.subr.mxu0 0.0
        %1404 = vmatpush1.msra.mxu0 0.0
        %1405 = vmatprep.subr.mxu0 0.0
        %1406 = vmatpush1.msra.mxu0 0.0
        %1407 = vmatprep.subr.mxu0 0.0
        %1408 = vmatpush1.msra.mxu0 0.0
        %1409 = vmatprep.subr.mxu0 0.0
        %1410 = vmatpush1.msra.mxu0 0.0
        %1411 = vmatprep.subr.mxu0 0.0
        %1412 = vmatpush1.msra.mxu0 0.0
        %1413 = vmatprep.mubr.f32.mxu0 0.0
        %1414 = vmatmul.mubr.f32.gmra.mrb[0].mxu0 %v1347
        %v1415 = vpop.f32.mrb[0].mxu0
        %v1416 = vadd.f32 0.0, %v1415
        %v1417 = vpop.f32.mrb[0].mxu0
        %1418 = vdwg.mxu0
        %v1420 = vsel %vm924, %v1271, 0
        %1422 = vmatprep.subr.mxu0 0.0
        %1423 = vmatpush1.msra.mxu0 %v918
        %1424 = vmatprep.subr.mxu0 0.0
        %1425 = vmatpush1.msra.mxu0 0.0
        %1426 = vmatprep.subr.mxu0 0.0
        %1427 = vmatpush1.msra.mxu0 0.0
        %1428 = vmatprep.subr.mxu0 0.0
        %1429 = vmatpush1.msra.mxu0 0.0
        %1430 = vmatprep.subr.mxu0 0.0
        %1431 = vmatpush1.msra.mxu0 0.0
        %1432 = vmatprep.subr.mxu0 0.0
        %1433 = vmatpush1.msra.mxu0 0.0
        %1434 = vmatprep.subr.mxu0 0.0
        %1435 = vmatpush1.msra.mxu0 0.0
        %1436 = vmatprep.subr.mxu0 0.0
        %1437 = vmatpush1.msra.mxu0 0.0
        %1438 = vmatprep.subr.mxu0 0.0
        %1439 = vmatpush1.msra.mxu0 0.0
        %1440 = vmatprep.subr.mxu0 0.0
        %1441 = vmatpush1.msra.mxu0 0.0
        %1442 = vmatprep.subr.mxu0 0.0
        %1443 = vmatpush1.msra.mxu0 0.0
        %1444 = vmatprep.subr.mxu0 0.0
        %1445 = vmatpush1.msra.mxu0 0.0
        %1446 = vmatprep.subr.mxu0 0.0
        %1447 = vmatpush1.msra.mxu0 0.0
        %1448 = vmatprep.subr.mxu0 0.0
        %1449 = vmatpush1.msra.mxu0 0.0
        %1450 = vmatprep.subr.mxu0 0.0
        %1451 = vmatpush1.msra.mxu0 0.0
        %1452 = vmatprep.subr.mxu0 0.0
        %1453 = vmatpush1.msra.mxu0 0.0
        %1454 = vmatprep.subr.mxu0 0.0
        %1455 = vmatpush1.msra.mxu0 0.0
        %1456 = vmatprep.subr.mxu0 0.0
        %1457 = vmatpush1.msra.mxu0 0.0
        %1458 = vmatprep.subr.mxu0 0.0
        %1459 = vmatpush1.msra.mxu0 0.0
        %1460 = vmatprep.subr.mxu0 0.0
        %1461 = vmatpush1.msra.mxu0 0.0
        %1462 = vmatprep.subr.mxu0 0.0
        %1463 = vmatpush1.msra.mxu0 0.0
        %1464 = vmatprep.subr.mxu0 0.0
        %1465 = vmatpush1.msra.mxu0 0.0
        %1466 = vmatprep.subr.mxu0 0.0
        %1467 = vmatpush1.msra.mxu0 0.0
        %1468 = vmatprep.subr.mxu0 0.0
        %1469 = vmatpush1.msra.mxu0 0.0
        %1470 = vmatprep.subr.mxu0 0.0
        %1471 = vmatpush1.msra.mxu0 0.0
        %1472 = vmatprep.subr.mxu0 0.0
        %1473 = vmatpush1.msra.mxu0 0.0
        %1474 = vmatprep.subr.mxu0 0.0
        %1475 = vmatpush1.msra.mxu0 0.0
        %1476 = vmatprep.subr.mxu0 0.0
        %1477 = vmatpush1.msra.mxu0 0.0
        %1478 = vmatprep.subr.mxu0 0.0
        %1479 = vmatpush1.msra.mxu0 0.0
        %1480 = vmatprep.subr.mxu0 0.0
        %1481 = vmatpush1.msra.mxu0 0.0
        %1482 = vmatprep.subr.mxu0 0.0
        %1483 = vmatpush1.msra.mxu0 0.0
        %1484 = vmatprep.subr.mxu0 0.0
        %1485 = vmatpush1.msra.mxu0 0.0
        %1486 = vmatprep.mubr.f32.mxu0 0.0
        %1487 = vmatmul.mubr.f32.gmra.mrb[0].mxu0 %v1420
        %v1488 = vpop.f32.mrb[0].mxu0
        %v1489 = vadd.f32 0.0, %v1488
        %v1490 = vpop.f32.mrb[0].mxu0
        %1491 = vdwg.mxu0
        %v1493 = vsel %vm924, %v1272, 0
        %1495 = vmatprep.subr.mxu0 0.0
        %1496 = vmatpush1.msra.mxu0 %v919
        %1497 = vmatprep.subr.mxu0 0.0
        %1498 = vmatpush1.msra.mxu0 0.0
        %1499 = vmatprep.subr.mxu0 0.0
        %1500 = vmatpush1.msra.mxu0 0.0
        %1501 = vmatprep.subr.mxu0 0.0
        %1502 = vmatpush1.msra.mxu0 0.0
        %1503 = vmatprep.subr.mxu0 0.0
        %1504 = vmatpush1.msra.mxu0 0.0
        %1505 = vmatprep.subr.mxu0 0.0
        %1506 = vmatpush1.msra.mxu0 0.0
        %1507 = vmatprep.subr.mxu0 0.0
        %1508 = vmatpush1.msra.mxu0 0.0
        %1509 = vmatprep.subr.mxu0 0.0
        %1510 = vmatpush1.msra.mxu0 0.0
        %1511 = vmatprep.subr.mxu0 0.0
        %1512 = vmatpush1.msra.mxu0 0.0
        %1513 = vmatprep.subr.mxu0 0.0
        %1514 = vmatpush1.msra.mxu0 0.0
        %1515 = vmatprep.subr.mxu0 0.0
        %1516 = vmatpush1.msra.mxu0 0.0
        %1517 = vmatprep.subr.mxu0 0.0
        %1518 = vmatpush1.msra.mxu0 0.0
        %1519 = vmatprep.subr.mxu0 0.0
        %1520 = vmatpush1.msra.mxu0 0.0
        %1521 = vmatprep.subr.mxu0 0.0
        %1522 = vmatpush1.msra.mxu0 0.0
        %1523 = vmatprep.subr.mxu0 0.0
        %1524 = vmatpush1.msra.mxu0 0.0
        %1525 = vmatprep.subr.mxu0 0.0
        %1526 = vmatpush1.msra.mxu0 0.0
        %1527 = vmatprep.subr.mxu0 0.0
        %1528 = vmatpush1.msra.mxu0 0.0
        %1529 = vmatprep.subr.mxu0 0.0
        %1530 = vmatpush1.msra.mxu0 0.0
        %1531 = vmatprep.subr.mxu0 0.0
        %1532 = vmatpush1.msra.mxu0 0.0
        %1533 = vmatprep.subr.mxu0 0.0
        %1534 = vmatpush1.msra.mxu0 0.0
        %1535 = vmatprep.subr.mxu0 0.0
        %1536 = vmatpush1.msra.mxu0 0.0
        %1537 = vmatprep.subr.mxu0 0.0
        %1538 = vmatpush1.msra.mxu0 0.0
        %1539 = vmatprep.subr.mxu0 0.0
        %1540 = vmatpush1.msra.mxu0 0.0
        %1541 = vmatprep.subr.mxu0 0.0
        %1542 = vmatpush1.msra.mxu0 0.0
        %1543 = vmatprep.subr.mxu0 0.0
        %1544 = vmatpush1.msra.mxu0 0.0
        %1545 = vmatprep.subr.mxu0 0.0
        %1546 = vmatpush1.msra.mxu0 0.0
        %1547 = vmatprep.subr.mxu0 0.0
        %1548 = vmatpush1.msra.mxu0 0.0
        %1549 = vmatprep.subr.mxu0 0.0
        %1550 = vmatpush1.msra.mxu0 0.0
        %1551 = vmatprep.subr.mxu0 0.0
        %1552 = vmatpush1.msra.mxu0 0.0
        %1553 = vmatprep.subr.mxu0 0.0
        %1554 = vmatpush1.msra.mxu0 0.0
        %1555 = vmatprep.subr.mxu0 0.0
        %1556 = vmatpush1.msra.mxu0 0.0
        %1557 = vmatprep.subr.mxu0 0.0
        %1558 = vmatpush1.msra.mxu0 0.0
        %1559 = vmatprep.mubr.f32.mxu0 0.0
        %1560 = vmatmul.mubr.f32.gmra.mrb[0].mxu0 %v1493
        %v1561 = vpop.f32.mrb[0].mxu0
        %v1562 = vadd.f32 0.0, %v1561
        %v1563 = vpop.f32.mrb[0].mxu0
        %1564 = vdwg.mxu0
        %v1565 = vpack.c.bf16 %v1343, %v1343
        %v1566 = vpack.c.bf16 %v1416, %v1416
        %v1567 = vpack.c.bf16 %v1489, %v1489
        %v1568 = vpack.c.bf16 %v1562, %v1562
        %v1569 = vld [vmem:[%s6] sm:$0xf]
        %v1570 = vld [vmem:[%s6 + $0x4] sm:$0xf]
        %v1571 = vld [vmem:[%s6 + $0x8] sm:$0xf]
        %v1572 = vld [vmem:[%s6 + $0xc] sm:$0xf]
        %v1574 = vsel %vm924, %v1565, 0
        %vm1576 = vcmask 1043456
        %v1578 = vsel %vm1576, %v1569, 0
        %1580 = vmatprep.subr.bf16.mxu0 0
        %1581 = vmatpush1.bf16.msra.mxu0 %v1578
        %1582 = vmatprep.subr.bf16.mxu0 0
        %1583 = vmatpush1.bf16.msra.mxu0 0
        %1584 = vmatprep.subr.bf16.mxu0 0
        %1585 = vmatpush1.bf16.msra.mxu0 0
        %1586 = vmatprep.subr.bf16.mxu0 0
        %1587 = vmatpush1.bf16.msra.mxu0 0
        %1588 = vmatprep.subr.bf16.mxu0 0
        %1589 = vmatpush1.bf16.msra.mxu0 0
        %1590 = vmatprep.subr.bf16.mxu0 0
        %1591 = vmatpush1.bf16.msra.mxu0 0
        %1592 = vmatprep.subr.bf16.mxu0 0
        %1593 = vmatpush1.bf16.msra.mxu0 0
        %1594 = vmatprep.subr.bf16.mxu0 0
        %1595 = vmatpush1.bf16.msra.mxu0 0
        %1596 = vmatprep.subr.bf16.mxu0 0
        %1597 = vmatpush1.bf16.msra.mxu0 0
        %1598 = vmatprep.subr.bf16.mxu0 0
        %1599 = vmatpush1.bf16.msra.mxu0 0
        %1600 = vmatprep.subr.bf16.mxu0 0
        %1601 = vmatpush1.bf16.msra.mxu0 0
        %1602 = vmatprep.subr.bf16.mxu0 0
        %1603 = vmatpush1.bf16.msra.mxu0 0
        %1604 = vmatprep.subr.bf16.mxu0 0
        %1605 = vmatpush1.bf16.msra.mxu0 0
        %1606 = vmatprep.subr.bf16.mxu0 0
        %1607 = vmatpush1.bf16.msra.mxu0 0
        %1608 = vmatprep.subr.bf16.mxu0 0
        %1609 = vmatpush1.bf16.msra.mxu0 0
        %1610 = vmatprep.subr.bf16.mxu0 0
        %1611 = vmatpush1.bf16.msra.mxu0 0
        %1612 = vmatprep.mubr.bf16.mxu0 0
        %1613 = vmatmul.mubr.bf16.gmra.mrb[0].mxu0 %v1574
        %v1614 = vpop.f32.mrb[0].mxu0
        %v1615 = vadd.f32 0.0, %v1614
        %v1616 = vpop.f32.mrb[0].mxu0
        %v1617 = vpop.f32.mrb[0].mxu0
        %v1618 = vpop.f32.mrb[0].mxu0
        %1619 = vdwg.mxu0
        %v1621 = vsel %vm924, %v1566, 0
        %v1624 = vsel %vm1576, %v1570, 0
        %1626 = vmatprep.subr.bf16.mxu0 0
        %1627 = vmatpush1.bf16.msra.mxu0 %v1624
        %1628 = vmatprep.subr.bf16.mxu0 0
        %1629 = vmatpush1.bf16.msra.mxu0 0
        %1630 = vmatprep.subr.bf16.mxu0 0
        %1631 = vmatpush1.bf16.msra.mxu0 0
        %1632 = vmatprep.subr.bf16.mxu0 0
        %1633 = vmatpush1.bf16.msra.mxu0 0
        %1634 = vmatprep.subr.bf16.mxu0 0
        %1635 = vmatpush1.bf16.msra.mxu0 0
        %1636 = vmatprep.subr.bf16.mxu0 0
        %1637 = vmatpush1.bf16.msra.mxu0 0
        %1638 = vmatprep.subr.bf16.mxu0 0
        %1639 = vmatpush1.bf16.msra.mxu0 0
        %1640 = vmatprep.subr.bf16.mxu0 0
        %1641 = vmatpush1.bf16.msra.mxu0 0
        %1642 = vmatprep.subr.bf16.mxu0 0
        %1643 = vmatpush1.bf16.msra.mxu0 0
        %1644 = vmatprep.subr.bf16.mxu0 0
        %1645 = vmatpush1.bf16.msra.mxu0 0
        %1646 = vmatprep.subr.bf16.mxu0 0
        %1647 = vmatpush1.bf16.msra.mxu0 0
        %1648 = vmatprep.subr.bf16.mxu0 0
        %1649 = vmatpush1.bf16.msra.mxu0 0
        %1650 = vmatprep.subr.bf16.mxu0 0
        %1651 = vmatpush1.bf16.msra.mxu0 0
        %1652 = vmatprep.subr.bf16.mxu0 0
        %1653 = vmatpush1.bf16.msra.mxu0 0
        %1654 = vmatprep.subr.bf16.mxu0 0
        %1655 = vmatpush1.bf16.msra.mxu0 0
        %1656 = vmatprep.subr.bf16.mxu0 0
        %1657 = vmatpush1.bf16.msra.mxu0 0
        %1658 = vmatprep.mubr.bf16.mxu0 0
        %1659 = vmatmul.mubr.bf16.gmra.mrb[0].mxu0 %v1621
        %v1660 = vpop.f32.mrb[0].mxu0
        %v1661 = vadd.f32 0.0, %v1660
        %v1662 = vpop.f32.mrb[0].mxu0
        %v1663 = vpop.f32.mrb[0].mxu0
        %v1664 = vpop.f32.mrb[0].mxu0
        %1665 = vdwg.mxu0
        %v1667 = vsel %vm924, %v1567, 0
        %v1670 = vsel %vm1576, %v1571, 0
        %1672 = vmatprep.subr.bf16.mxu0 0
        %1673 = vmatpush1.bf16.msra.mxu0 %v1670
        %1674 = vmatprep.subr.bf16.mxu0 0
        %1675 = vmatpush1.bf16.msra.mxu0 0
        %1676 = vmatprep.subr.bf16.mxu0 0
        %1677 = vmatpush1.bf16.msra.mxu0 0
        %1678 = vmatprep.subr.bf16.mxu0 0
        %1679 = vmatpush1.bf16.msra.mxu0 0
        %1680 = vmatprep.subr.bf16.mxu0 0
        %1681 = vmatpush1.bf16.msra.mxu0 0
        %1682 = vmatprep.subr.bf16.mxu0 0
        %1683 = vmatpush1.bf16.msra.mxu0 0
        %1684 = vmatprep.subr.bf16.mxu0 0
        %1685 = vmatpush1.bf16.msra.mxu0 0
        %1686 = vmatprep.subr.bf16.mxu0 0
        %1687 = vmatpush1.bf16.msra.mxu0 0
        %1688 = vmatprep.subr.bf16.mxu0 0
        %1689 = vmatpush1.bf16.msra.mxu0 0
        %1690 = vmatprep.subr.bf16.mxu0 0
        %1691 = vmatpush1.bf16.msra.mxu0 0
        %1692 = vmatprep.subr.bf16.mxu0 0
        %1693 = vmatpush1.bf16.msra.mxu0 0
        %1694 = vmatprep.subr.bf16.mxu0 0
        %1695 = vmatpush1.bf16.msra.mxu0 0
        %1696 = vmatprep.subr.bf16.mxu0 0
        %1697 = vmatpush1.bf16.msra.mxu0 0
        %1698 = vmatprep.subr.bf16.mxu0 0
        %1699 = vmatpush1.bf16.msra.mxu0 0
        %1700 = vmatprep.subr.bf16.mxu0 0
        %1701 = vmatpush1.bf16.msra.mxu0 0
        %1702 = vmatprep.subr.bf16.mxu0 0
        %1703 = vmatpush1.bf16.msra.mxu0 0
        %1704 = vmatprep.mubr.bf16.mxu0 0
        %1705 = vmatmul.mubr.bf16.gmra.mrb[0].mxu0 %v1667
        %v1706 = vpop.f32.mrb[0].mxu0
        %v1707 = vadd.f32 0.0, %v1706
        %v1708 = vpop.f32.mrb[0].mxu0
        %v1709 = vpop.f32.mrb[0].mxu0
        %v1710 = vpop.f32.mrb[0].mxu0
        %1711 = vdwg.mxu0
        %v1713 = vsel %vm924, %v1568, 0
        %v1716 = vsel %vm1576, %v1572, 0
        %1718 = vmatprep.subr.bf16.mxu0 0
        %1719 = vmatpush1.bf16.msra.mxu0 %v1716
        %1720 = vmatprep.subr.bf16.mxu0 0
        %1721 = vmatpush1.bf16.msra.mxu0 0
        %1722 = vmatprep.subr.bf16.mxu0 0
        %1723 = vmatpush1.bf16.msra.mxu0 0
        %1724 = vmatprep.subr.bf16.mxu0 0
        %1725 = vmatpush1.bf16.msra.mxu0 0
        %1726 = vmatprep.subr.bf16.mxu0 0
        %1727 = vmatpush1.bf16.msra.mxu0 0
        %1728 = vmatprep.subr.bf16.mxu0 0
        %1729 = vmatpush1.bf16.msra.mxu0 0
        %1730 = vmatprep.subr.bf16.mxu0 0
        %1731 = vmatpush1.bf16.msra.mxu0 0
        %1732 = vmatprep.subr.bf16.mxu0 0
        %1733 = vmatpush1.bf16.msra.mxu0 0
        %1734 = vmatprep.subr.bf16.mxu0 0
        %1735 = vmatpush1.bf16.msra.mxu0 0
        %1736 = vmatprep.subr.bf16.mxu0 0
        %1737 = vmatpush1.bf16.msra.mxu0 0
        %1738 = vmatprep.subr.bf16.mxu0 0
        %1739 = vmatpush1.bf16.msra.mxu0 0
        %1740 = vmatprep.subr.bf16.mxu0 0
        %1741 = vmatpush1.bf16.msra.mxu0 0
        %1742 = vmatprep.subr.bf16.mxu0 0
        %1743 = vmatpush1.bf16.msra.mxu0 0
        %1744 = vmatprep.subr.bf16.mxu0 0
        %1745 = vmatpush1.bf16.msra.mxu0 0
        %1746 = vmatprep.subr.bf16.mxu0 0
        %1747 = vmatpush1.bf16.msra.mxu0 0
        %1748 = vmatprep.subr.bf16.mxu0 0
        %1749 = vmatpush1.bf16.msra.mxu0 0
        %1750 = vmatprep.mubr.bf16.mxu0 0
        %1751 = vmatmul.mubr.bf16.gmra.mrb[0].mxu0 %v1713
        %v1752 = vpop.f32.mrb[0].mxu0
        %v1753 = vadd.f32 0.0, %v1752
        %v1754 = vpop.f32.mrb[0].mxu0
        %v1755 = vpop.f32.mrb[0].mxu0
        %v1756 = vpop.f32.mrb[0].mxu0
        %1757 = vdwg.mxu0
        %v1758 = vsel %vm404, %v1615, 0.0
        %v1759 = vsel %vm404, %v1661, 0.0
        %v1760 = vadd.f32 %v1758, %v1759
        %v1761 = vsel %vm404, %v1707, 0.0
        %v1762 = vadd.f32 %v1760, %v1761
        %v1763 = vsel %vm404, %v1753, 0.0
        %v1764 = vadd.f32 %v1762, %v1763
        %v1765 = vadd.f32 %v399, %v1764
        %v1766 = vld [vmem:[%s4 + $0x1] sm:$0x1]
        %v1767 = vmul.f32 %v1765, %v1765
        %v1768 = vsel %vm404, %v1767, 0.0
        %1769 = vadd.xlane.f32.xlu0 %v1768
        %v1770 = vpop.xlane.xlu0 %1769
        %v1771 = vmul.f32 %v1770, %v408
        %v1772 = vadd.f32 %v1771, 1e-06
        %v1773 = vrsqrt.pop %v1772
        %v1774 = vmul.f32 %v1765, %v1773
        %v1775 = vlaneseq
        %v1776 = vshrl.u32 %v1775, 7
        %v1777 = vsub.s32 0, %v1776
        %v1778 = vrot.slane %v1766, %v1777
        %v1779 = vmul.f32 %v1778, %v1774
        %v1780 = vpack.c.bf16 %v1779, %v1779
        %v1781 = vld [vmem:[%s5 + $0x4] sm:$0xf]
        %v1782 = vld [vmem:[%s5 + $0x14] sm:$0xf]
        %v1783 = vld [vmem:[%s5 + $0x24] sm:$0xf]
        %v1784 = vld [vmem:[%s5 + $0x34] sm:$0xf]
        %v1789 = vunpack.c.l.b16 %v1781
        %v1790 = vunpack.c.l.b16 %v1782
        %v1791 = vunpack.c.l.b16 %v1783
        %v1792 = vunpack.c.l.b16 %v1784
        %v1793 = vpack.c.b16 %v1790, %v1789
        %v1794 = vpack.c.b16 %v1792, %v1791
        %v1798 = vsel %vm404, %v1780, 0
        %1800 = vmatprep.subr.bf16.mxu0 0
        %1801 = vmatpush1.bf16.msra.mxu0 %v1793
        %1802 = vmatprep.subr.bf16.mxu0 0
        %1803 = vmatpush1.bf16.msra.mxu0 %v1794
        %1804 = vmatprep.subr.bf16.mxu0 0
        %1805 = vmatpush1.bf16.msra.mxu0 0
        %1806 = vmatprep.subr.bf16.mxu0 0
        %1807 = vmatpush1.bf16.msra.mxu0 0
        %1808 = vmatprep.subr.bf16.mxu0 0
        %1809 = vmatpush1.bf16.msra.mxu0 0
        %1810 = vmatprep.subr.bf16.mxu0 0
        %1811 = vmatpush1.bf16.msra.mxu0 0
        %1812 = vmatprep.subr.bf16.mxu0 0
        %1813 = vmatpush1.bf16.msra.mxu0 0
        %1814 = vmatprep.subr.bf16.mxu0 0
        %1815 = vmatpush1.bf16.msra.mxu0 0
        %1816 = vmatprep.subr.bf16.mxu0 0
        %1817 = vmatpush1.bf16.msra.mxu0 0
        %1818 = vmatprep.subr.bf16.mxu0 0
        %1819 = vmatpush1.bf16.msra.mxu0 0
        %1820 = vmatprep.subr.bf16.mxu0 0
        %1821 = vmatpush1.bf16.msra.mxu0 0
        %1822 = vmatprep.subr.bf16.mxu0 0
        %1823 = vmatpush1.bf16.msra.mxu0 0
        %1824 = vmatprep.subr.bf16.mxu0 0
        %1825 = vmatpush1.bf16.msra.mxu0 0
        %1826 = vmatprep.subr.bf16.mxu0 0
        %1827 = vmatpush1.bf16.msra.mxu0 0
        %1828 = vmatprep.subr.bf16.mxu0 0
        %1829 = vmatpush1.bf16.msra.mxu0 0
        %1830 = vmatprep.subr.bf16.mxu0 0
        %1831 = vmatpush1.bf16.msra.mxu0 0
        %1832 = vmatprep.mubr.bf16.mxu0 0
        %1833 = vmatmul.mubr.bf16.gmra.mrb[0].mxu0 %v1798
        %v1834 = vpop.f32.mrb[0].mxu0
        %v1835 = vadd.f32 0.0, %v1834
        %v1836 = vpop.f32.mrb[0].mxu0
        %v1837 = vpop.f32.mrb[0].mxu0
        %v1838 = vpop.f32.mrb[0].mxu0
        %1839 = vdwg.mxu0
        %1841 = vrot.lane.b32.xlu0 %v1835, 120
        %v1842 = vpop.permute.xlu0 %1841
        %1844 = vrot.lane.b32.xlu0 %v1835, 112
        %v1845 = vpop.permute.xlu0 %1844
        %1847 = vrot.lane.b32.xlu0 %v1835, 104
        %v1848 = vpop.permute.xlu0 %1847
        %v1850 = vcombine.low %v1835, %v1845
        %v1851 = vcombine.high %v1835, %v1845
        %v1853 = vunpack.c.l.s4 1983009808
        %v1854 = vunpack.c.0.s8 %v1853
        %v1855 = vlaneseq
        %v1856 = vshrl.u32 %v1855, 7
        %v1857 = vsub.s32 %v1854, %v1856
        %v1858 = vrot.slane %v1850, %v1857
        %v1860 = vunpack.c.l.s4 1983009808
        %v1861 = vunpack.c.0.s8 %v1860
        %v1862 = vlaneseq
        %v1863 = vshrl.u32 %v1862, 7
        %v1864 = vsub.s32 %v1861, %v1863
        %v1865 = vrot.slane %v1851, %v1864
        %v1866 = vcombine.low %v1842, %v1848
        %v1867 = vcombine.high %v1842, %v1848
        %v1869 = vunpack.c.l.s4 1983009808
        %v1870 = vunpack.c.0.s8 %v1869
        %v1871 = vlaneseq
        %v1872 = vshrl.u32 %v1871, 7
        %v1873 = vsub.s32 %v1870, %v1872
        %v1874 = vrot.slane %v1866, %v1873
        %v1876 = vunpack.c.l.s4 1983009808
        %v1877 = vunpack.c.0.s8 %v1876
        %v1878 = vlaneseq
        %v1879 = vshrl.u32 %v1878, 7
        %v1880 = vsub.s32 %v1877, %v1879
        %v1881 = vrot.slane %v1867, %v1880
        %v1882 = vcombine.low %v1858, %v1874
        %v1883 = vcombine.high %v1858, %v1874
        %v1885 = vunpack.c.l.s4 1934713408
        %v1886 = vunpack.c.0.s8 %v1885
        %v1887 = vlaneseq
        %v1888 = vshrl.u32 %v1887, 7
        %v1889 = vsub.s32 %v1886, %v1888
        %v1890 = vrot.slane %v1882, %v1889
        %v1892 = vunpack.c.l.s4 1934713408
        %v1893 = vunpack.c.0.s8 %v1892
        %v1894 = vlaneseq
        %v1895 = vshrl.u32 %v1894, 7
        %v1896 = vsub.s32 %v1893, %v1895
        %v1897 = vrot.slane %v1883, %v1896
        %v1898 = vcombine.low %v1865, %v1881
        %v1899 = vcombine.high %v1865, %v1881
        %v1901 = vunpack.c.l.s4 1934713408
        %v1902 = vunpack.c.0.s8 %v1901
        %v1903 = vlaneseq
        %v1904 = vshrl.u32 %v1903, 7
        %v1905 = vsub.s32 %v1902, %v1904
        %v1906 = vrot.slane %v1898, %v1905
        %v1908 = vunpack.c.l.s4 1934713408
        %v1909 = vunpack.c.0.s8 %v1908
        %v1910 = vlaneseq
        %v1911 = vshrl.u32 %v1910, 7
        %v1912 = vsub.s32 %v1909, %v1911
        %v1913 = vrot.slane %v1899, %v1912
        %v1914 = vcombine.high %v1890, 0.0
        %v1915 = vcombine.high %v1897, 0.0
        %v1916 = vcombine.high %v1906, 0.0
        %v1917 = vcombine.high %v1913, 0.0
        %v1918 = vcombine.low %v1890, %v1897
        %v1920 = vunpack.c.l.s4 1983009808
        %v1921 = vunpack.c.0.s8 %v1920
        %v1922 = vlaneseq
        %v1923 = vshrl.u32 %v1922, 7
        %v1924 = vsub.s32 %v1921, %v1923
        %v1925 = vrot.slane %v1918, %v1924
        %v1926 = vcombine.low %v1914, %v1915
        %v1928 = vunpack.c.l.s4 1983009808
        %v1929 = vunpack.c.0.s8 %v1928
        %v1930 = vlaneseq
        %v1931 = vshrl.u32 %v1930, 7
        %v1932 = vsub.s32 %v1929, %v1931
        %v1933 = vrot.slane %v1926, %v1932
        %v1934 = vcombine.low %v1906, %v1913
        %v1936 = vunpack.c.l.s4 1983009808
        %v1937 = vunpack.c.0.s8 %v1936
        %v1938 = vlaneseq
        %v1939 = vshrl.u32 %v1938, 7
        %v1940 = vsub.s32 %v1937, %v1939
        %v1941 = vrot.slane %v1934, %v1940
        %v1942 = vcombine.low %v1916, %v1917
        %v1944 = vunpack.c.l.s4 1983009808
        %v1945 = vunpack.c.0.s8 %v1944
        %v1946 = vlaneseq
        %v1947 = vshrl.u32 %v1946, 7
        %v1948 = vsub.s32 %v1945, %v1947
        %v1949 = vrot.slane %v1942, %v1948
        %v1950 = vcombine.low %v1925, %v1933
        %v1951 = vcombine.high %v1925, %v1933
        %v1953 = vunpack.c.l.s4 1934713408
        %v1954 = vunpack.c.0.s8 %v1953
        %v1955 = vlaneseq
        %v1956 = vshrl.u32 %v1955, 7
        %v1957 = vsub.s32 %v1954, %v1956
        %v1958 = vrot.slane %v1950, %v1957
        %v1960 = vunpack.c.l.s4 1934713408
        %v1961 = vunpack.c.0.s8 %v1960
        %v1962 = vlaneseq
        %v1963 = vshrl.u32 %v1962, 7
        %v1964 = vsub.s32 %v1961, %v1963
        %v1965 = vrot.slane %v1951, %v1964
        %v1966 = vcombine.low %v1941, %v1949
        %v1967 = vcombine.high %v1941, %v1949
        %v1969 = vunpack.c.l.s4 1934713408
        %v1970 = vunpack.c.0.s8 %v1969
        %v1971 = vlaneseq
        %v1972 = vshrl.u32 %v1971, 7
        %v1973 = vsub.s32 %v1970, %v1972
        %v1974 = vrot.slane %v1966, %v1973
        %v1976 = vunpack.c.l.s4 1934713408
        %v1977 = vunpack.c.0.s8 %v1976
        %v1978 = vlaneseq
        %v1979 = vshrl.u32 %v1978, 7
        %v1980 = vsub.s32 %v1977, %v1979
        %v1981 = vrot.slane %v1967, %v1980
        %v1982 = vcombine.low %v1958, %v1974
        %v1983 = vcombine.high %v1958, %v1974
        %v1984 = vcombine.low %v1965, %v1981
        %v1985 = vcombine.high %v1965, %v1981
        %v1986 = vpack.c.bf16 %v401, %v400
        %v1987 = vld [vmem:[%s5 + $0x8] sm:$0xf]
        %v1988 = vld [vmem:[%s5 + $0x18] sm:$0xf]
        %v1989 = vld [vmem:[%s5 + $0x28] sm:$0xf]
        %v1990 = vld [vmem:[%s5 + $0x38] sm:$0xf]
        %v1995 = vunpack.c.l.b16 %v1987
        %v1996 = vunpack.c.l.b16 %v1988
        %v1997 = vunpack.c.l.b16 %v1989
        %v1998 = vunpack.c.l.b16 %v1990
        %v1999 = vpack.c.b16 %v1996, %v1995
        %v2000 = vpack.c.b16 %v1998, %v1997
        %v2004 = vsel %vm404, %v1986, 0
        %2006 = vmatprep.subr.bf16.mxu0 0
        %2007 = vmatpush1.bf16.msra.mxu0 %v1999
        %2008 = vmatprep.subr.bf16.mxu0 0
        %2009 = vmatpush1.bf16.msra.mxu0 %v2000
        %2010 = vmatprep.subr.bf16.mxu0 0
        %2011 = vmatpush1.bf16.msra.mxu0 0
        %2012 = vmatprep.subr.bf16.mxu0 0
        %2013 = vmatpush1.bf16.msra.mxu0 0
        %2014 = vmatprep.subr.bf16.mxu0 0
        %2015 = vmatpush1.bf16.msra.mxu0 0
        %2016 = vmatprep.subr.bf16.mxu0 0
        %2017 = vmatpush1.bf16.msra.mxu0 0
        %2018 = vmatprep.subr.bf16.mxu0 0
        %2019 = vmatpush1.bf16.msra.mxu0 0
        %2020 = vmatprep.subr.bf16.mxu0 0
        %2021 = vmatpush1.bf16.msra.mxu0 0
        %2022 = vmatprep.subr.bf16.mxu0 0
        %2023 = vmatpush1.bf16.msra.mxu0 0
        %2024 = vmatprep.subr.bf16.mxu0 0
        %2025 = vmatpush1.bf16.msra.mxu0 0
        %2026 = vmatprep.subr.bf16.mxu0 0
        %2027 = vmatpush1.bf16.msra.mxu0 0
        %2028 = vmatprep.subr.bf16.mxu0 0
        %2029 = vmatpush1.bf16.msra.mxu0 0
        %2030 = vmatprep.subr.bf16.mxu0 0
        %2031 = vmatpush1.bf16.msra.mxu0 0
        %2032 = vmatprep.subr.bf16.mxu0 0
        %2033 = vmatpush1.bf16.msra.mxu0 0
        %2034 = vmatprep.subr.bf16.mxu0 0
        %2035 = vmatpush1.bf16.msra.mxu0 0
        %2036 = vmatprep.subr.bf16.mxu0 0
        %2037 = vmatpush1.bf16.msra.mxu0 0
        %2038 = vmatprep.mubr.bf16.mxu0 0
        %2039 = vmatmul.mubr.bf16.gmra.mrb[0].mxu0 %v2004
        %v2040 = vpop.f32.mrb[0].mxu0
        %v2041 = vadd.f32 0.0, %v2040
        %v2042 = vpop.f32.mrb[0].mxu0
        %v2043 = vpop.f32.mrb[0].mxu0
        %v2044 = vadd.f32 0.0, %v2043
        %v2045 = vpop.f32.mrb[0].mxu0
        %2046 = vdwg.mxu0
        %2049 = vrot.lane.b32.xlu0 %v2041, 120
        %v2050 = vpop.permute.xlu0 %2049
        %2051 = vrot.lane.b32.xlu0 %v2044, 120
        %v2052 = vpop.permute.xlu0 %2051
        %2055 = vrot.lane.b32.xlu0 %v2041, 112
        %v2056 = vpop.permute.xlu0 %2055
        %2057 = vrot.lane.b32.xlu0 %v2044, 112
        %v2058 = vpop.permute.xlu0 %2057
        %2061 = vrot.lane.b32.xlu0 %v2041, 104
        %v2062 = vpop.permute.xlu0 %2061
        %2063 = vrot.lane.b32.xlu0 %v2044, 104
        %v2064 = vpop.permute.xlu0 %2063
        %2067 = vrot.lane.b32.xlu0 %v2041, 96
        %v2068 = vpop.permute.xlu0 %2067
        %2069 = vrot.lane.b32.xlu0 %v2044, 96
        %v2070 = vpop.permute.xlu0 %2069
        %2073 = vrot.lane.b32.xlu0 %v2041, 88
        %v2074 = vpop.permute.xlu0 %2073
        %2075 = vrot.lane.b32.xlu0 %v2044, 88
        %v2076 = vpop.permute.xlu0 %2075
        %2079 = vrot.lane.b32.xlu0 %v2041, 80
        %v2080 = vpop.permute.xlu0 %2079
        %2081 = vrot.lane.b32.xlu0 %v2044, 80
        %v2082 = vpop.permute.xlu0 %2081
        %2085 = vrot.lane.b32.xlu0 %v2041, 72
        %v2086 = vpop.permute.xlu0 %2085
        %2087 = vrot.lane.b32.xlu0 %v2044, 72
        %v2088 = vpop.permute.xlu0 %2087
        %v2091 = vcombine.low %v2041, %v2056
        %v2092 = vcombine.high %v2041, %v2056
        %v2094 = vunpack.c.l.s4 1983009808
        %v2095 = vunpack.c.0.s8 %v2094
        %v2096 = vlaneseq
        %v2097 = vshrl.u32 %v2096, 7
        %v2098 = vsub.s32 %v2095, %v2097
        %v2099 = vrot.slane %v2091, %v2098
        %v2101 = vunpack.c.l.s4 1983009808
        %v2102 = vunpack.c.0.s8 %v2101
        %v2103 = vlaneseq
        %v2104 = vshrl.u32 %v2103, 7
        %v2105 = vsub.s32 %v2102, %v2104
        %v2106 = vrot.slane %v2092, %v2105
        %v2107 = vcombine.low %v2050, %v2062
        %v2108 = vcombine.high %v2050, %v2062
        %v2110 = vunpack.c.l.s4 1983009808
        %v2111 = vunpack.c.0.s8 %v2110
        %v2112 = vlaneseq
        %v2113 = vshrl.u32 %v2112, 7
        %v2114 = vsub.s32 %v2111, %v2113
        %v2115 = vrot.slane %v2107, %v2114
        %v2117 = vunpack.c.l.s4 1983009808
        %v2118 = vunpack.c.0.s8 %v2117
        %v2119 = vlaneseq
        %v2120 = vshrl.u32 %v2119, 7
        %v2121 = vsub.s32 %v2118, %v2120
        %v2122 = vrot.slane %v2108, %v2121
        %v2123 = vcombine.low %v2068, %v2080
        %v2124 = vcombine.high %v2068, %v2080
        %v2126 = vunpack.c.l.s4 1983009808
        %v2127 = vunpack.c.0.s8 %v2126
        %v2128 = vlaneseq
        %v2129 = vshrl.u32 %v2128, 7
        %v2130 = vsub.s32 %v2127, %v2129
        %v2131 = vrot.slane %v2123, %v2130
        %v2133 = vunpack.c.l.s4 1983009808
        %v2134 = vunpack.c.0.s8 %v2133
        %v2135 = vlaneseq
        %v2136 = vshrl.u32 %v2135, 7
        %v2137 = vsub.s32 %v2134, %v2136
        %v2138 = vrot.slane %v2124, %v2137
        %v2139 = vcombine.low %v2074, %v2086
        %v2140 = vcombine.high %v2074, %v2086
        %v2142 = vunpack.c.l.s4 1983009808
        %v2143 = vunpack.c.0.s8 %v2142
        %v2144 = vlaneseq
        %v2145 = vshrl.u32 %v2144, 7
        %v2146 = vsub.s32 %v2143, %v2145
        %v2147 = vrot.slane %v2139, %v2146
        %v2149 = vunpack.c.l.s4 1983009808
        %v2150 = vunpack.c.0.s8 %v2149
        %v2151 = vlaneseq
        %v2152 = vshrl.u32 %v2151, 7
        %v2153 = vsub.s32 %v2150, %v2152
        %v2154 = vrot.slane %v2140, %v2153
        %v2155 = vcombine.low %v2099, %v2115
        %v2156 = vcombine.high %v2099, %v2115
        %v2158 = vunpack.c.l.s4 1934713408
        %v2159 = vunpack.c.0.s8 %v2158
        %v2160 = vlaneseq
        %v2161 = vshrl.u32 %v2160, 7
        %v2162 = vsub.s32 %v2159, %v2161
        %v2163 = vrot.slane %v2155, %v2162
        %v2165 = vunpack.c.l.s4 1934713408
        %v2166 = vunpack.c.0.s8 %v2165
        %v2167 = vlaneseq
        %v2168 = vshrl.u32 %v2167, 7
        %v2169 = vsub.s32 %v2166, %v2168
        %v2170 = vrot.slane %v2156, %v2169
        %v2171 = vcombine.low %v2106, %v2122
        %v2172 = vcombine.high %v2106, %v2122
        %v2174 = vunpack.c.l.s4 1934713408
        %v2175 = vunpack.c.0.s8 %v2174
        %v2176 = vlaneseq
        %v2177 = vshrl.u32 %v2176, 7
        %v2178 = vsub.s32 %v2175, %v2177
        %v2179 = vrot.slane %v2171, %v2178
        %v2181 = vunpack.c.l.s4 1934713408
        %v2182 = vunpack.c.0.s8 %v2181
        %v2183 = vlaneseq
        %v2184 = vshrl.u32 %v2183, 7
        %v2185 = vsub.s32 %v2182, %v2184
        %v2186 = vrot.slane %v2172, %v2185
        %v2187 = vcombine.low %v2131, %v2147
        %v2188 = vcombine.high %v2131, %v2147
        %v2190 = vunpack.c.l.s4 1934713408
        %v2191 = vunpack.c.0.s8 %v2190
        %v2192 = vlaneseq
        %v2193 = vshrl.u32 %v2192, 7
        %v2194 = vsub.s32 %v2191, %v2193
        %v2195 = vrot.slane %v2187, %v2194
        %v2197 = vunpack.c.l.s4 1934713408
        %v2198 = vunpack.c.0.s8 %v2197
        %v2199 = vlaneseq
        %v2200 = vshrl.u32 %v2199, 7
        %v2201 = vsub.s32 %v2198, %v2200
        %v2202 = vrot.slane %v2188, %v2201
        %v2203 = vcombine.low %v2138, %v2154
        %v2204 = vcombine.high %v2138, %v2154
        %v2206 = vunpack.c.l.s4 1934713408
        %v2207 = vunpack.c.0.s8 %v2206
        %v2208 = vlaneseq
        %v2209 = vshrl.u32 %v2208, 7
        %v2210 = vsub.s32 %v2207, %v2209
        %v2211 = vrot.slane %v2203, %v2210
        %v2213 = vunpack.c.l.s4 1934713408
        %v2214 = vunpack.c.0.s8 %v2213
        %v2215 = vlaneseq
        %v2216 = vshrl.u32 %v2215, 7
        %v2217 = vsub.s32 %v2214, %v2216
        %v2218 = vrot.slane %v2204, %v2217
        %v2219 = vcombine.low %v2163, %v2195
        %v2220 = vcombine.high %v2163, %v2195
        %v2221 = vcombine.low %v2170, %v2202
        %v2222 = vcombine.high %v2170, %v2202
        %v2223 = vcombine.low %v2179, %v2211
        %v2224 = vcombine.high %v2179, %v2211
        %v2225 = vcombine.low %v2186, %v2218
        %v2226 = vcombine.high %v2186, %v2218
        %v2227 = vcombine.low %v2044, %v2058
        %v2228 = vcombine.high %v2044, %v2058
        %v2230 = vunpack.c.l.s4 1983009808
        %v2231 = vunpack.c.0.s8 %v2230
        %v2232 = vlaneseq
        %v2233 = vshrl.u32 %v2232, 7
        %v2234 = vsub.s32 %v2231, %v2233
        %v2235 = vrot.slane %v2227, %v2234
        %v2237 = vunpack.c.l.s4 1983009808
        %v2238 = vunpack.c.0.s8 %v2237
        %v2239 = vlaneseq
        %v2240 = vshrl.u32 %v2239, 7
        %v2241 = vsub.s32 %v2238, %v2240
        %v2242 = vrot.slane %v2228, %v2241
        %v2243 = vcombine.low %v2052, %v2064
        %v2244 = vcombine.high %v2052, %v2064
        %v2246 = vunpack.c.l.s4 1983009808
        %v2247 = vunpack.c.0.s8 %v2246
        %v2248 = vlaneseq
        %v2249 = vshrl.u32 %v2248, 7
        %v2250 = vsub.s32 %v2247, %v2249
        %v2251 = vrot.slane %v2243, %v2250
        %v2253 = vunpack.c.l.s4 1983009808
        %v2254 = vunpack.c.0.s8 %v2253
        %v2255 = vlaneseq
        %v2256 = vshrl.u32 %v2255, 7
        %v2257 = vsub.s32 %v2254, %v2256
        %v2258 = vrot.slane %v2244, %v2257
        %v2259 = vcombine.low %v2070, %v2082
        %v2260 = vcombine.high %v2070, %v2082
        %v2262 = vunpack.c.l.s4 1983009808
        %v2263 = vunpack.c.0.s8 %v2262
        %v2264 = vlaneseq
        %v2265 = vshrl.u32 %v2264, 7
        %v2266 = vsub.s32 %v2263, %v2265
        %v2267 = vrot.slane %v2259, %v2266
        %v2269 = vunpack.c.l.s4 1983009808
        %v2270 = vunpack.c.0.s8 %v2269
        %v2271 = vlaneseq
        %v2272 = vshrl.u32 %v2271, 7
        %v2273 = vsub.s32 %v2270, %v2272
        %v2274 = vrot.slane %v2260, %v2273
        %v2275 = vcombine.low %v2076, %v2088
        %v2276 = vcombine.high %v2076, %v2088
        %v2278 = vunpack.c.l.s4 1983009808
        %v2279 = vunpack.c.0.s8 %v2278
        %v2280 = vlaneseq
        %v2281 = vshrl.u32 %v2280, 7
        %v2282 = vsub.s32 %v2279, %v2281
        %v2283 = vrot.slane %v2275, %v2282
        %v2285 = vunpack.c.l.s4 1983009808
        %v2286 = vunpack.c.0.s8 %v2285
        %v2287 = vlaneseq
        %v2288 = vshrl.u32 %v2287, 7
        %v2289 = vsub.s32 %v2286, %v2288
        %v2290 = vrot.slane %v2276, %v2289
        %v2291 = vcombine.low %v2235, %v2251
        %v2292 = vcombine.high %v2235, %v2251
        %v2294 = vunpack.c.l.s4 1934713408
        %v2295 = vunpack.c.0.s8 %v2294
        %v2296 = vlaneseq
        %v2297 = vshrl.u32 %v2296, 7
        %v2298 = vsub.s32 %v2295, %v2297
        %v2299 = vrot.slane %v2291, %v2298
        %v2301 = vunpack.c.l.s4 1934713408
        %v2302 = vunpack.c.0.s8 %v2301
        %v2303 = vlaneseq
        %v2304 = vshrl.u32 %v2303, 7
        %v2305 = vsub.s32 %v2302, %v2304
        %v2306 = vrot.slane %v2292, %v2305
        %v2307 = vcombine.low %v2242, %v2258
        %v2308 = vcombine.high %v2242, %v2258
        %v2310 = vunpack.c.l.s4 1934713408
        %v2311 = vunpack.c.0.s8 %v2310
        %v2312 = vlaneseq
        %v2313 = vshrl.u32 %v2312, 7
        %v2314 = vsub.s32 %v2311, %v2313
        %v2315 = vrot.slane %v2307, %v2314
        %v2317 = vunpack.c.l.s4 1934713408
        %v2318 = vunpack.c.0.s8 %v2317
        %v2319 = vlaneseq
        %v2320 = vshrl.u32 %v2319, 7
        %v2321 = vsub.s32 %v2318, %v2320
        %v2322 = vrot.slane %v2308, %v2321
        %v2323 = vcombine.low %v2267, %v2283
        %v2324 = vcombine.high %v2267, %v2283
        %v2326 = vunpack.c.l.s4 1934713408
        %v2327 = vunpack.c.0.s8 %v2326
        %v2328 = vlaneseq
        %v2329 = vshrl.u32 %v2328, 7
        %v2330 = vsub.s32 %v2327, %v2329
        %v2331 = vrot.slane %v2323, %v2330
        %v2333 = vunpack.c.l.s4 1934713408
        %v2334 = vunpack.c.0.s8 %v2333
        %v2335 = vlaneseq
        %v2336 = vshrl.u32 %v2335, 7
        %v2337 = vsub.s32 %v2334, %v2336
        %v2338 = vrot.slane %v2324, %v2337
        %v2339 = vcombine.low %v2274, %v2290
        %v2340 = vcombine.high %v2274, %v2290
        %v2342 = vunpack.c.l.s4 1934713408
        %v2343 = vunpack.c.0.s8 %v2342
        %v2344 = vlaneseq
        %v2345 = vshrl.u32 %v2344, 7
        %v2346 = vsub.s32 %v2343, %v2345
        %v2347 = vrot.slane %v2339, %v2346
        %v2349 = vunpack.c.l.s4 1934713408
        %v2350 = vunpack.c.0.s8 %v2349
        %v2351 = vlaneseq
        %v2352 = vshrl.u32 %v2351, 7
        %v2353 = vsub.s32 %v2350, %v2352
        %v2354 = vrot.slane %v2340, %v2353
        %v2355 = vcombine.low %v2299, %v2331
        %v2356 = vcombine.high %v2299, %v2331
        %v2357 = vcombine.low %v2306, %v2338
        %v2358 = vcombine.high %v2306, %v2338
        %v2359 = vcombine.low %v2315, %v2347
        %v2360 = vcombine.high %v2315, %v2347
        %v2361 = vcombine.low %v2322, %v2354
        %v2362 = vcombine.high %v2322, %v2354
        %v2363 = vcombine.low %v2219, %v2221
        %v2364 = vcombine.high %v2219, %v2221
        %v2366 = vunpack.c.l.s4 1983009808
        %v2367 = vunpack.c.0.s8 %v2366
        %v2368 = vlaneseq
        %v2369 = vshrl.u32 %v2368, 7
        %v2370 = vsub.s32 %v2367, %v2369
        %v2371 = vrot.slane %v2363, %v2370
        %v2373 = vunpack.c.l.s4 1983009808
        %v2374 = vunpack.c.0.s8 %v2373
        %v2375 = vlaneseq
        %v2376 = vshrl.u32 %v2375, 7
        %v2377 = vsub.s32 %v2374, %v2376
        %v2378 = vrot.slane %v2364, %v2377
        %v2379 = vcombine.low %v2220, %v2222
        %v2380 = vcombine.high %v2220, %v2222
        %v2382 = vunpack.c.l.s4 1983009808
        %v2383 = vunpack.c.0.s8 %v2382
        %v2384 = vlaneseq
        %v2385 = vshrl.u32 %v2384, 7
        %v2386 = vsub.s32 %v2383, %v2385
        %v2387 = vrot.slane %v2379, %v2386
        %v2389 = vunpack.c.l.s4 1983009808
        %v2390 = vunpack.c.0.s8 %v2389
        %v2391 = vlaneseq
        %v2392 = vshrl.u32 %v2391, 7
        %v2393 = vsub.s32 %v2390, %v2392
        %v2394 = vrot.slane %v2380, %v2393
        %v2395 = vcombine.low %v2223, %v2225
        %v2396 = vcombine.high %v2223, %v2225
        %v2398 = vunpack.c.l.s4 1983009808
        %v2399 = vunpack.c.0.s8 %v2398
        %v2400 = vlaneseq
        %v2401 = vshrl.u32 %v2400, 7
        %v2402 = vsub.s32 %v2399, %v2401
        %v2403 = vrot.slane %v2395, %v2402
        %v2405 = vunpack.c.l.s4 1983009808
        %v2406 = vunpack.c.0.s8 %v2405
        %v2407 = vlaneseq
        %v2408 = vshrl.u32 %v2407, 7
        %v2409 = vsub.s32 %v2406, %v2408
        %v2410 = vrot.slane %v2396, %v2409
        %v2411 = vcombine.low %v2224, %v2226
        %v2412 = vcombine.high %v2224, %v2226
        %v2414 = vunpack.c.l.s4 1983009808
        %v2415 = vunpack.c.0.s8 %v2414
        %v2416 = vlaneseq
        %v2417 = vshrl.u32 %v2416, 7
        %v2418 = vsub.s32 %v2415, %v2417
        %v2419 = vrot.slane %v2411, %v2418
        %v2421 = vunpack.c.l.s4 1983009808
        %v2422 = vunpack.c.0.s8 %v2421
        %v2423 = vlaneseq
        %v2424 = vshrl.u32 %v2423, 7
        %v2425 = vsub.s32 %v2422, %v2424
        %v2426 = vrot.slane %v2412, %v2425
        %v2427 = vcombine.low %v2371, %v2387
        %v2428 = vcombine.high %v2371, %v2387
        %v2430 = vunpack.c.l.s4 1934713408
        %v2431 = vunpack.c.0.s8 %v2430
        %v2432 = vlaneseq
        %v2433 = vshrl.u32 %v2432, 7
        %v2434 = vsub.s32 %v2431, %v2433
        %v2435 = vrot.slane %v2427, %v2434
        %v2437 = vunpack.c.l.s4 1934713408
        %v2438 = vunpack.c.0.s8 %v2437
        %v2439 = vlaneseq
        %v2440 = vshrl.u32 %v2439, 7
        %v2441 = vsub.s32 %v2438, %v2440
        %v2442 = vrot.slane %v2428, %v2441
        %v2443 = vcombine.low %v2378, %v2394
        %v2444 = vcombine.high %v2378, %v2394
        %v2446 = vunpack.c.l.s4 1934713408
        %v2447 = vunpack.c.0.s8 %v2446
        %v2448 = vlaneseq
        %v2449 = vshrl.u32 %v2448, 7
        %v2450 = vsub.s32 %v2447, %v2449
        %v2451 = vrot.slane %v2443, %v2450
        %v2453 = vunpack.c.l.s4 1934713408
        %v2454 = vunpack.c.0.s8 %v2453
        %v2455 = vlaneseq
        %v2456 = vshrl.u32 %v2455, 7
        %v2457 = vsub.s32 %v2454, %v2456
        %v2458 = vrot.slane %v2444, %v2457
        %v2459 = vcombine.low %v2403, %v2419
        %v2460 = vcombine.high %v2403, %v2419
        %v2462 = vunpack.c.l.s4 1934713408
        %v2463 = vunpack.c.0.s8 %v2462
        %v2464 = vlaneseq
        %v2465 = vshrl.u32 %v2464, 7
        %v2466 = vsub.s32 %v2463, %v2465
        %v2467 = vrot.slane %v2459, %v2466
        %v2469 = vunpack.c.l.s4 1934713408
        %v2470 = vunpack.c.0.s8 %v2469
        %v2471 = vlaneseq
        %v2472 = vshrl.u32 %v2471, 7
        %v2473 = vsub.s32 %v2470, %v2472
        %v2474 = vrot.slane %v2460, %v2473
        %v2475 = vcombine.low %v2410, %v2426
        %v2476 = vcombine.high %v2410, %v2426
        %v2478 = vunpack.c.l.s4 1934713408
        %v2479 = vunpack.c.0.s8 %v2478
        %v2480 = vlaneseq
        %v2481 = vshrl.u32 %v2480, 7
        %v2482 = vsub.s32 %v2479, %v2481
        %v2483 = vrot.slane %v2475, %v2482
        %v2485 = vunpack.c.l.s4 1934713408
        %v2486 = vunpack.c.0.s8 %v2485
        %v2487 = vlaneseq
        %v2488 = vshrl.u32 %v2487, 7
        %v2489 = vsub.s32 %v2486, %v2488
        %v2490 = vrot.slane %v2476, %v2489
        %v2491 = vcombine.low %v2435, %v2467
        %v2492 = vcombine.high %v2435, %v2467
        %v2493 = vcombine.low %v2442, %v2474
        %v2494 = vcombine.high %v2442, %v2474
        %v2495 = vcombine.low %v2451, %v2483
        %v2496 = vcombine.high %v2451, %v2483
        %v2497 = vcombine.low %v2458, %v2490
        %v2498 = vcombine.high %v2458, %v2490
        %v2499 = vcombine.low %v2355, %v2357
        %v2500 = vcombine.high %v2355, %v2357
        %v2502 = vunpack.c.l.s4 1983009808
        %v2503 = vunpack.c.0.s8 %v2502
        %v2504 = vlaneseq
        %v2505 = vshrl.u32 %v2504, 7
        %v2506 = vsub.s32 %v2503, %v2505
        %v2507 = vrot.slane %v2499, %v2506
        %v2509 = vunpack.c.l.s4 1983009808
        %v2510 = vunpack.c.0.s8 %v2509
        %v2511 = vlaneseq
        %v2512 = vshrl.u32 %v2511, 7
        %v2513 = vsub.s32 %v2510, %v2512
        %v2514 = vrot.slane %v2500, %v2513
        %v2515 = vcombine.low %v2356, %v2358
        %v2516 = vcombine.high %v2356, %v2358
        %v2518 = vunpack.c.l.s4 1983009808
        %v2519 = vunpack.c.0.s8 %v2518
        %v2520 = vlaneseq
        %v2521 = vshrl.u32 %v2520, 7
        %v2522 = vsub.s32 %v2519, %v2521
        %v2523 = vrot.slane %v2515, %v2522
        %v2525 = vunpack.c.l.s4 1983009808
        %v2526 = vunpack.c.0.s8 %v2525
        %v2527 = vlaneseq
        %v2528 = vshrl.u32 %v2527, 7
        %v2529 = vsub.s32 %v2526, %v2528
        %v2530 = vrot.slane %v2516, %v2529
        %v2531 = vcombine.low %v2359, %v2361
        %v2532 = vcombine.high %v2359, %v2361
        %v2534 = vunpack.c.l.s4 1983009808
        %v2535 = vunpack.c.0.s8 %v2534
        %v2536 = vlaneseq
        %v2537 = vshrl.u32 %v2536, 7
        %v2538 = vsub.s32 %v2535, %v2537
        %v2539 = vrot.slane %v2531, %v2538
        %v2541 = vunpack.c.l.s4 1983009808
        %v2542 = vunpack.c.0.s8 %v2541
        %v2543 = vlaneseq
        %v2544 = vshrl.u32 %v2543, 7
        %v2545 = vsub.s32 %v2542, %v2544
        %v2546 = vrot.slane %v2532, %v2545
        %v2547 = vcombine.low %v2360, %v2362
        %v2548 = vcombine.high %v2360, %v2362
        %v2550 = vunpack.c.l.s4 1983009808
        %v2551 = vunpack.c.0.s8 %v2550
        %v2552 = vlaneseq
        %v2553 = vshrl.u32 %v2552, 7
        %v2554 = vsub.s32 %v2551, %v2553
        %v2555 = vrot.slane %v2547, %v2554
        %v2557 = vunpack.c.l.s4 1983009808
        %v2558 = vunpack.c.0.s8 %v2557
        %v2559 = vlaneseq
        %v2560 = vshrl.u32 %v2559, 7
        %v2561 = vsub.s32 %v2558, %v2560
        %v2562 = vrot.slane %v2548, %v2561
        %v2563 = vcombine.low %v2507, %v2523
        %v2564 = vcombine.high %v2507, %v2523
        %v2566 = vunpack.c.l.s4 1934713408
        %v2567 = vunpack.c.0.s8 %v2566
        %v2568 = vlaneseq
        %v2569 = vshrl.u32 %v2568, 7
        %v2570 = vsub.s32 %v2567, %v2569
        %v2571 = vrot.slane %v2563, %v2570
        %v2573 = vunpack.c.l.s4 1934713408
        %v2574 = vunpack.c.0.s8 %v2573
        %v2575 = vlaneseq
        %v2576 = vshrl.u32 %v2575, 7
        %v2577 = vsub.s32 %v2574, %v2576
        %v2578 = vrot.slane %v2564, %v2577
        %v2579 = vcombine.low %v2514, %v2530
        %v2580 = vcombine.high %v2514, %v2530
        %v2582 = vunpack.c.l.s4 1934713408
        %v2583 = vunpack.c.0.s8 %v2582
        %v2584 = vlaneseq
        %v2585 = vshrl.u32 %v2584, 7
        %v2586 = vsub.s32 %v2583, %v2585
        %v2587 = vrot.slane %v2579, %v2586
        %v2589 = vunpack.c.l.s4 1934713408
        %v2590 = vunpack.c.0.s8 %v2589
        %v2591 = vlaneseq
        %v2592 = vshrl.u32 %v2591, 7
        %v2593 = vsub.s32 %v2590, %v2592
        %v2594 = vrot.slane %v2580, %v2593
        %v2595 = vcombine.low %v2539, %v2555
        %v2596 = vcombine.high %v2539, %v2555
        %v2598 = vunpack.c.l.s4 1934713408
        %v2599 = vunpack.c.0.s8 %v2598
        %v2600 = vlaneseq
        %v2601 = vshrl.u32 %v2600, 7
        %v2602 = vsub.s32 %v2599, %v2601
        %v2603 = vrot.slane %v2595, %v2602
        %v2605 = vunpack.c.l.s4 1934713408
        %v2606 = vunpack.c.0.s8 %v2605
        %v2607 = vlaneseq
        %v2608 = vshrl.u32 %v2607, 7
        %v2609 = vsub.s32 %v2606, %v2608
        %v2610 = vrot.slane %v2596, %v2609
        %v2611 = vcombine.low %v2546, %v2562
        %v2612 = vcombine.high %v2546, %v2562
        %v2614 = vunpack.c.l.s4 1934713408
        %v2615 = vunpack.c.0.s8 %v2614
        %v2616 = vlaneseq
        %v2617 = vshrl.u32 %v2616, 7
        %v2618 = vsub.s32 %v2615, %v2617
        %v2619 = vrot.slane %v2611, %v2618
        %v2621 = vunpack.c.l.s4 1934713408
        %v2622 = vunpack.c.0.s8 %v2621
        %v2623 = vlaneseq
        %v2624 = vshrl.u32 %v2623, 7
        %v2625 = vsub.s32 %v2622, %v2624
        %v2626 = vrot.slane %v2612, %v2625
        %v2627 = vcombine.low %v2571, %v2603
        %v2628 = vcombine.high %v2571, %v2603
        %v2629 = vcombine.low %v2578, %v2610
        %v2630 = vcombine.high %v2578, %v2610
        %v2631 = vcombine.low %v2587, %v2619
        %v2632 = vcombine.high %v2587, %v2619
        %v2633 = vcombine.low %v2594, %v2626
        %v2634 = vcombine.high %v2594, %v2626
        %v2635 = vld [vmem:[%s340] sm:$0xff]
        %v2637 = vsel %vm924, %v1982, 0
        %v2640 = vsel %vm924, %v2491, 0
        %v2643 = vsel %vm924, %v2627, 0
        %2645 = vmatprep.subr.mxu0 0.0
        %2646 = vmatpush1.xpose.msra.mxu0 %v2640
        %2647 = vmatprep.subr.mxu0 0.0
        %2648 = vmatpush1.xpose.msra.mxu0 %v2643
        %2649 = vmatprep.subr.mxu0 0.0
        %2650 = vmatpush1.xpose.msra.mxu0 0.0
        %2651 = vmatprep.subr.mxu0 0.0
        %2652 = vmatpush1.xpose.msra.mxu0 0.0
        %2653 = vmatprep.subr.mxu0 0.0
        %2654 = vmatpush1.xpose.msra.mxu0 0.0
        %2655 = vmatprep.subr.mxu0 0.0
        %2656 = vmatpush1.xpose.msra.mxu0 0.0
        %2657 = vmatprep.subr.mxu0 0.0
        %2658 = vmatpush1.xpose.msra.mxu0 0.0
        %2659 = vmatprep.subr.mxu0 0.0
        %2660 = vmatpush1.xpose.msra.mxu0 0.0
        %2661 = vmatprep.subr.mxu0 0.0
        %2662 = vmatpush1.xpose.msra.mxu0 0.0
        %2663 = vmatprep.subr.mxu0 0.0
        %2664 = vmatpush1.xpose.msra.mxu0 0.0
        %2665 = vmatprep.subr.mxu0 0.0
        %2666 = vmatpush1.xpose.msra.mxu0 0.0
        %2667 = vmatprep.subr.mxu0 0.0
        %2668 = vmatpush1.xpose.msra.mxu0 0.0
        %2669 = vmatprep.subr.mxu0 0.0
        %2670 = vmatpush1.xpose.msra.mxu0 0.0
        %2671 = vmatprep.subr.mxu0 0.0
        %2672 = vmatpush1.xpose.msra.mxu0 0.0
        %2673 = vmatprep.subr.mxu0 0.0
        %2674 = vmatpush1.xpose.msra.mxu0 0.0
        %2675 = vmatprep.subr.mxu0 0.0
        %2676 = vmatpush1.xpose.msra.mxu0 0.0
        %2677 = vmatprep.subr.mxu0 0.0
        %2678 = vmatpush1.xpose.msra.mxu0 0.0
        %2679 = vmatprep.subr.mxu0 0.0
        %2680 = vmatpush1.xpose.msra.mxu0 0.0
        %2681 = vmatprep.subr.mxu0 0.0
        %2682 = vmatpush1.xpose.msra.mxu0 0.0
        %2683 = vmatprep.subr.mxu0 0.0
        %2684 = vmatpush1.xpose.msra.mxu0 0.0
        %2685 = vmatprep.subr.mxu0 0.0
        %2686 = vmatpush1.xpose.msra.mxu0 0.0
        %2687 = vmatprep.subr.mxu0 0.0
        %2688 = vmatpush1.xpose.msra.mxu0 0.0
        %2689 = vmatprep.subr.mxu0 0.0
        %2690 = vmatpush1.xpose.msra.mxu0 0.0
        %2691 = vmatprep.subr.mxu0 0.0
        %2692 = vmatpush1.xpose.msra.mxu0 0.0
        %2693 = vmatprep.subr.mxu0 0.0
        %2694 = vmatpush1.xpose.msra.mxu0 0.0
        %2695 = vmatprep.subr.mxu0 0.0
        %2696 = vmatpush1.xpose.msra.mxu0 0.0
        %2697 = vmatprep.subr.mxu0 0.0
        %2698 = vmatpush1.xpose.msra.mxu0 0.0
        %2699 = vmatprep.subr.mxu0 0.0
        %2700 = vmatpush1.xpose.msra.mxu0 0.0
        %2701 = vmatprep.subr.mxu0 0.0
        %2702 = vmatpush1.xpose.msra.mxu0 0.0
        %2703 = vmatprep.subr.mxu0 0.0
        %2704 = vmatpush1.xpose.msra.mxu0 0.0
        %2705 = vmatprep.subr.mxu0 0.0
        %2706 = vmatpush1.xpose.msra.mxu0 0.0
        %2707 = vmatprep.subr.mxu0 0.0
        %2708 = vmatpush1.xpose.msra.mxu0 0.0
        %2709 = vmatprep.mubr.f32.mxu0 0.0
        %2710 = vmatmul.mubr.f32.gmra.mrb[0].mxu0 %v2637
        %v2711 = vpop.f32.mrb[0].mxu0
        %v2712 = vadd.f32 %v2635, %v2711
        %v2713 = vpop.f32.mrb[0].mxu0
        %2714 = vdwg.mxu0
        %v2716 = vsel %vm924, %v1983, 0
        %v2719 = vsel %vm924, %v2492, 0
        %v2722 = vsel %vm924, %v2628, 0
        %2724 = vmatprep.subr.mxu0 0.0
        %2725 = vmatpush1.xpose.msra.mxu0 %v2719
        %2726 = vmatprep.subr.mxu0 0.0
        %2727 = vmatpush1.xpose.msra.mxu0 %v2722
        %2728 = vmatprep.subr.mxu0 0.0
        %2729 = vmatpush1.xpose.msra.mxu0 0.0
        %2730 = vmatprep.subr.mxu0 0.0
        %2731 = vmatpush1.xpose.msra.mxu0 0.0
        %2732 = vmatprep.subr.mxu0 0.0
        %2733 = vmatpush1.xpose.msra.mxu0 0.0
        %2734 = vmatprep.subr.mxu0 0.0
        %2735 = vmatpush1.xpose.msra.mxu0 0.0
        %2736 = vmatprep.subr.mxu0 0.0
        %2737 = vmatpush1.xpose.msra.mxu0 0.0
        %2738 = vmatprep.subr.mxu0 0.0
        %2739 = vmatpush1.xpose.msra.mxu0 0.0
        %2740 = vmatprep.subr.mxu0 0.0
        %2741 = vmatpush1.xpose.msra.mxu0 0.0
        %2742 = vmatprep.subr.mxu0 0.0
        %2743 = vmatpush1.xpose.msra.mxu0 0.0
        %2744 = vmatprep.subr.mxu0 0.0
        %2745 = vmatpush1.xpose.msra.mxu0 0.0
        %2746 = vmatprep.subr.mxu0 0.0
        %2747 = vmatpush1.xpose.msra.mxu0 0.0
        %2748 = vmatprep.subr.mxu0 0.0
        %2749 = vmatpush1.xpose.msra.mxu0 0.0
        %2750 = vmatprep.subr.mxu0 0.0
        %2751 = vmatpush1.xpose.msra.mxu0 0.0
        %2752 = vmatprep.subr.mxu0 0.0
        %2753 = vmatpush1.xpose.msra.mxu0 0.0
        %2754 = vmatprep.subr.mxu0 0.0
        %2755 = vmatpush1.xpose.msra.mxu0 0.0
        %2756 = vmatprep.subr.mxu0 0.0
        %2757 = vmatpush1.xpose.msra.mxu0 0.0
        %2758 = vmatprep.subr.mxu0 0.0
        %2759 = vmatpush1.xpose.msra.mxu0 0.0
        %2760 = vmatprep.subr.mxu0 0.0
        %2761 = vmatpush1.xpose.msra.mxu0 0.0
        %2762 = vmatprep.subr.mxu0 0.0
        %2763 = vmatpush1.xpose.msra.mxu0 0.0
        %2764 = vmatprep.subr.mxu0 0.0
        %2765 = vmatpush1.xpose.msra.mxu0 0.0
        %2766 = vmatprep.subr.mxu0 0.0
        %2767 = vmatpush1.xpose.msra.mxu0 0.0
        %2768 = vmatprep.subr.mxu0 0.0
        %2769 = vmatpush1.xpose.msra.mxu0 0.0
        %2770 = vmatprep.subr.mxu0 0.0
        %2771 = vmatpush1.xpose.msra.mxu0 0.0
        %2772 = vmatprep.subr.mxu0 0.0
        %2773 = vmatpush1.xpose.msra.mxu0 0.0
        %2774 = vmatprep.subr.mxu0 0.0
        %2775 = vmatpush1.xpose.msra.mxu0 0.0
        %2776 = vmatprep.subr.mxu0 0.0
        %2777 = vmatpush1.xpose.msra.mxu0 0.0
        %2778 = vmatprep.subr.mxu0 0.0
        %2779 = vmatpush1.xpose.msra.mxu0 0.0
        %2780 = vmatprep.subr.mxu0 0.0
        %2781 = vmatpush1.xpose.msra.mxu0 0.0
        %2782 = vmatprep.subr.mxu0 0.0
        %2783 = vmatpush1.xpose.msra.mxu0 0.0
        %2784 = vmatprep.subr.mxu0 0.0
        %2785 = vmatpush1.xpose.msra.mxu0 0.0
        %2786 = vmatprep.subr.mxu0 0.0
        %2787 = vmatpush1.xpose.msra.mxu0 0.0
        %2788 = vmatprep.mubr.f32.mxu0 0.0
        %2789 = vmatmul.mubr.f32.gmra.mrb[0].mxu0 %v2716
        %v2790 = vpop.f32.mrb[0].mxu0
        %v2791 = vadd.f32 %v2635, %v2790
        %v2792 = vpop.f32.mrb[0].mxu0
        %2793 = vdwg.mxu0
        %v2795 = vsel %vm924, %v1984, 0
        %v2798 = vsel %vm924, %v2493, 0
        %v2801 = vsel %vm924, %v2629, 0
        %2803 = vmatprep.subr.mxu0 0.0
        %2804 = vmatpush1.xpose.msra.mxu0 %v2798
        %2805 = vmatprep.subr.mxu0 0.0
        %2806 = vmatpush1.xpose.msra.mxu0 %v2801
        %2807 = vmatprep.subr.mxu0 0.0
        %2808 = vmatpush1.xpose.msra.mxu0 0.0
        %2809 = vmatprep.subr.mxu0 0.0
        %2810 = vmatpush1.xpose.msra.mxu0 0.0
        %2811 = vmatprep.subr.mxu0 0.0
        %2812 = vmatpush1.xpose.msra.mxu0 0.0
        %2813 = vmatprep.subr.mxu0 0.0
        %2814 = vmatpush1.xpose.msra.mxu0 0.0
        %2815 = vmatprep.subr.mxu0 0.0
        %2816 = vmatpush1.xpose.msra.mxu0 0.0
        %2817 = vmatprep.subr.mxu0 0.0
        %2818 = vmatpush1.xpose.msra.mxu0 0.0
        %2819 = vmatprep.subr.mxu0 0.0
        %2820 = vmatpush1.xpose.msra.mxu0 0.0
        %2821 = vmatprep.subr.mxu0 0.0
        %2822 = vmatpush1.xpose.msra.mxu0 0.0
        %2823 = vmatprep.subr.mxu0 0.0
        %2824 = vmatpush1.xpose.msra.mxu0 0.0
        %2825 = vmatprep.subr.mxu0 0.0
        %2826 = vmatpush1.xpose.msra.mxu0 0.0
        %2827 = vmatprep.subr.mxu0 0.0
        %2828 = vmatpush1.xpose.msra.mxu0 0.0
        %2829 = vmatprep.subr.mxu0 0.0
        %2830 = vmatpush1.xpose.msra.mxu0 0.0
        %2831 = vmatprep.subr.mxu0 0.0
        %2832 = vmatpush1.xpose.msra.mxu0 0.0
        %2833 = vmatprep.subr.mxu0 0.0
        %2834 = vmatpush1.xpose.msra.mxu0 0.0
        %2835 = vmatprep.subr.mxu0 0.0
        %2836 = vmatpush1.xpose.msra.mxu0 0.0
        %2837 = vmatprep.subr.mxu0 0.0
        %2838 = vmatpush1.xpose.msra.mxu0 0.0
        %2839 = vmatprep.subr.mxu0 0.0
        %2840 = vmatpush1.xpose.msra.mxu0 0.0
        %2841 = vmatprep.subr.mxu0 0.0
        %2842 = vmatpush1.xpose.msra.mxu0 0.0
        %2843 = vmatprep.subr.mxu0 0.0
        %2844 = vmatpush1.xpose.msra.mxu0 0.0
        %2845 = vmatprep.subr.mxu0 0.0
        %2846 = vmatpush1.xpose.msra.mxu0 0.0
        %2847 = vmatprep.subr.mxu0 0.0
        %2848 = vmatpush1.xpose.msra.mxu0 0.0
        %2849 = vmatprep.subr.mxu0 0.0
        %2850 = vmatpush1.xpose.msra.mxu0 0.0
        %2851 = vmatprep.subr.mxu0 0.0
        %2852 = vmatpush1.xpose.msra.mxu0 0.0
        %2853 = vmatprep.subr.mxu0 0.0
        %2854 = vmatpush1.xpose.msra.mxu0 0.0
        %2855 = vmatprep.subr.mxu0 0.0
        %2856 = vmatpush1.xpose.msra.mxu0 0.0
        %2857 = vmatprep.subr.mxu0 0.0
        %2858 = vmatpush1.xpose.msra.mxu0 0.0
        %2859 = vmatprep.subr.mxu0 0.0
        %2860 = vmatpush1.xpose.msra.mxu0 0.0
        %2861 = vmatprep.subr.mxu0 0.0
        %2862 = vmatpush1.xpose.msra.mxu0 0.0
        %2863 = vmatprep.subr.mxu0 0.0
        %2864 = vmatpush1.xpose.msra.mxu0 0.0
        %2865 = vmatprep.subr.mxu0 0.0
        %2866 = vmatpush1.xpose.msra.mxu0 0.0
        %2867 = vmatprep.mubr.f32.mxu0 0.0
        %2868 = vmatmul.mubr.f32.gmra.mrb[0].mxu0 %v2795
        %v2869 = vpop.f32.mrb[0].mxu0
        %v2870 = vadd.f32 %v2635, %v2869
        %v2871 = vpop.f32.mrb[0].mxu0
        %2872 = vdwg.mxu0
        %v2874 = vsel %vm924, %v1985, 0
        %v2877 = vsel %vm924, %v2494, 0
        %v2880 = vsel %vm924, %v2630, 0
        %2882 = vmatprep.subr.mxu0 0.0
        %2883 = vmatpush1.xpose.msra.mxu0 %v2877
        %2884 = vmatprep.subr.mxu0 0.0
        %2885 = vmatpush1.xpose.msra.mxu0 %v2880
        %2886 = vmatprep.subr.mxu0 0.0
        %2887 = vmatpush1.xpose.msra.mxu0 0.0
        %2888 = vmatprep.subr.mxu0 0.0
        %2889 = vmatpush1.xpose.msra.mxu0 0.0
        %2890 = vmatprep.subr.mxu0 0.0
        %2891 = vmatpush1.xpose.msra.mxu0 0.0
        %2892 = vmatprep.subr.mxu0 0.0
        %2893 = vmatpush1.xpose.msra.mxu0 0.0
        %2894 = vmatprep.subr.mxu0 0.0
        %2895 = vmatpush1.xpose.msra.mxu0 0.0
        %2896 = vmatprep.subr.mxu0 0.0
        %2897 = vmatpush1.xpose.msra.mxu0 0.0
        %2898 = vmatprep.subr.mxu0 0.0
        %2899 = vmatpush1.xpose.msra.mxu0 0.0
        %2900 = vmatprep.subr.mxu0 0.0
        %2901 = vmatpush1.xpose.msra.mxu0 0.0
        %2902 = vmatprep.subr.mxu0 0.0
        %2903 = vmatpush1.xpose.msra.mxu0 0.0
        %2904 = vmatprep.subr.mxu0 0.0
        %2905 = vmatpush1.xpose.msra.mxu0 0.0
        %2906 = vmatprep.subr.mxu0 0.0
        %2907 = vmatpush1.xpose.msra.mxu0 0.0
        %2908 = vmatprep.subr.mxu0 0.0
        %2909 = vmatpush1.xpose.msra.mxu0 0.0
        %2910 = vmatprep.subr.mxu0 0.0
        %2911 = vmatpush1.xpose.msra.mxu0 0.0
        %2912 = vmatprep.subr.mxu0 0.0
        %2913 = vmatpush1.xpose.msra.mxu0 0.0
        %2914 = vmatprep.subr.mxu0 0.0
        %2915 = vmatpush1.xpose.msra.mxu0 0.0
        %2916 = vmatprep.subr.mxu0 0.0
        %2917 = vmatpush1.xpose.msra.mxu0 0.0
        %2918 = vmatprep.subr.mxu0 0.0
        %2919 = vmatpush1.xpose.msra.mxu0 0.0
        %2920 = vmatprep.subr.mxu0 0.0
        %2921 = vmatpush1.xpose.msra.mxu0 0.0
        %2922 = vmatprep.subr.mxu0 0.0
        %2923 = vmatpush1.xpose.msra.mxu0 0.0
        %2924 = vmatprep.subr.mxu0 0.0
        %2925 = vmatpush1.xpose.msra.mxu0 0.0
        %2926 = vmatprep.subr.mxu0 0.0
        %2927 = vmatpush1.xpose.msra.mxu0 0.0
        %2928 = vmatprep.subr.mxu0 0.0
        %2929 = vmatpush1.xpose.msra.mxu0 0.0
        %2930 = vmatprep.subr.mxu0 0.0
        %2931 = vmatpush1.xpose.msra.mxu0 0.0
        %2932 = vmatprep.subr.mxu0 0.0
        %2933 = vmatpush1.xpose.msra.mxu0 0.0
        %2934 = vmatprep.subr.mxu0 0.0
        %2935 = vmatpush1.xpose.msra.mxu0 0.0
        %2936 = vmatprep.subr.mxu0 0.0
        %2937 = vmatpush1.xpose.msra.mxu0 0.0
        %2938 = vmatprep.subr.mxu0 0.0
        %2939 = vmatpush1.xpose.msra.mxu0 0.0
        %2940 = vmatprep.subr.mxu0 0.0
        %2941 = vmatpush1.xpose.msra.mxu0 0.0
        %2942 = vmatprep.subr.mxu0 0.0
        %2943 = vmatpush1.xpose.msra.mxu0 0.0
        %2944 = vmatprep.subr.mxu0 0.0
        %2945 = vmatpush1.xpose.msra.mxu0 0.0
        %2946 = vmatprep.mubr.f32.mxu0 0.0
        %2947 = vmatmul.mubr.f32.gmra.mrb[0].mxu0 %v2874
        %v2948 = vpop.f32.mrb[0].mxu0
        %v2949 = vadd.f32 %v2635, %v2948
        %v2950 = vpop.f32.mrb[0].mxu0
        %2951 = vdwg.mxu0
        %vm2952 = vcmask 130048
        %v2953 = vsel %vm2952, %v2712, -inf
        %2954 = vmax.xlane.f32.xlu0 %v2953
        %v2955 = vpop.xlane.xlu0 %2954
        %v2956 = vsel %vm2952, %v2791, -inf
        %2957 = vmax.xlane.f32.xlu0 %v2956
        %v2958 = vpop.xlane.xlu0 %2957
        %v2959 = vsel %vm2952, %v2870, -inf
        %2960 = vmax.xlane.f32.xlu0 %v2959
        %v2961 = vpop.xlane.xlu0 %2960
        %v2962 = vsel %vm2952, %v2949, -inf
        %2963 = vmax.xlane.f32.xlu0 %v2962
        %v2964 = vpop.xlane.xlu0 %2963
        %v2965 = vsub.f32 %v2712, %v2955
        %v2966 = vsub.f32 %v2791, %v2958
        %v2967 = vsub.f32 %v2870, %v2961
        %v2968 = vsub.f32 %v2949, %v2964
        %v2969 = vmul.f32 %v2965, 1.442695
        %v2970 = vpow.pop %v2969
        %v2971 = vmul.f32 %v2966, 1.442695
        %v2972 = vpow.pop %v2971
        %v2973 = vmul.f32 %v2967, 1.442695
        %v2974 = vpow.pop %v2973
        %v2975 = vmul.f32 %v2968, 1.442695
        %v2976 = vpow.pop %v2975
        %v2977 = vsel %vm2952, %v2970, 0.0
        %2978 = vadd.xlane.f32.xlu0 %v2977
        %v2979 = vpop.xlane.xlu0 %2978
        %v2980 = vsel %vm2952, %v2972, 0.0
        %2981 = vadd.xlane.f32.xlu0 %v2980
        %v2982 = vpop.xlane.xlu0 %2981
        %v2983 = vsel %vm2952, %v2974, 0.0
        %2984 = vadd.xlane.f32.xlu0 %v2983
        %v2985 = vpop.xlane.xlu0 %2984
        %v2986 = vsel %vm2952, %v2976, 0.0
        %2987 = vadd.xlane.f32.xlu0 %v2986
        %v2988 = vpop.xlane.xlu0 %2987
        %v2989 = vrcp.pop %v2979
        %v2990 = vrcp.pop %v2982
        %v2991 = vrcp.pop %v2985
        %v2992 = vrcp.pop %v2988
        %v2993 = vmul.f32 %v2970, %v2989
        %v2994 = vmul.f32 %v2972, %v2990
        %v2995 = vmul.f32 %v2974, %v2991
        %v2996 = vmul.f32 %v2976, %v2992
        %v2998 = vsel %vm2952, %v2993, 0
        %3000 = vmatprep.subr.mxu0 0.0
        %3001 = vmatpush1.msra.mxu0 %v2495
        %3002 = vmatprep.subr.mxu0 0.0
        %3003 = vmatpush1.msra.mxu0 %v2631
        %3004 = vmatprep.subr.mxu0 0.0
        %3005 = vmatpush1.msra.mxu0 0.0
        %3006 = vmatprep.subr.mxu0 0.0
        %3007 = vmatpush1.msra.mxu0 0.0
        %3008 = vmatprep.subr.mxu0 0.0
        %3009 = vmatpush1.msra.mxu0 0.0
        %3010 = vmatprep.subr.mxu0 0.0
        %3011 = vmatpush1.msra.mxu0 0.0
        %3012 = vmatprep.subr.mxu0 0.0
        %3013 = vmatpush1.msra.mxu0 0.0
        %3014 = vmatprep.subr.mxu0 0.0
        %3015 = vmatpush1.msra.mxu0 0.0
        %3016 = vmatprep.subr.mxu0 0.0
        %3017 = vmatpush1.msra.mxu0 0.0
        %3018 = vmatprep.subr.mxu0 0.0
        %3019 = vmatpush1.msra.mxu0 0.0
        %3020 = vmatprep.subr.mxu0 0.0
        %3021 = vmatpush1.msra.mxu0 0.0
        %3022 = vmatprep.subr.mxu0 0.0
        %3023 = vmatpush1.msra.mxu0 0.0
        %3024 = vmatprep.subr.mxu0 0.0
        %3025 = vmatpush1.msra.mxu0 0.0
        %3026 = vmatprep.subr.mxu0 0.0
        %3027 = vmatpush1.msra.mxu0 0.0
        %3028 = vmatprep.subr.mxu0 0.0
        %3029 = vmatpush1.msra.mxu0 0.0
        %3030 = vmatprep.subr.mxu0 0.0
        %3031 = vmatpush1.msra.mxu0 0.0
        %3032 = vmatprep.subr.mxu0 0.0
        %3033 = vmatpush1.msra.mxu0 0.0
        %3034 = vmatprep.subr.mxu0 0.0
        %3035 = vmatpush1.msra.mxu0 0.0
        %3036 = vmatprep.subr.mxu0 0.0
        %3037 = vmatpush1.msra.mxu0 0.0
        %3038 = vmatprep.subr.mxu0 0.0
        %3039 = vmatpush1.msra.mxu0 0.0
        %3040 = vmatprep.subr.mxu0 0.0
        %3041 = vmatpush1.msra.mxu0 0.0
        %3042 = vmatprep.subr.mxu0 0.0
        %3043 = vmatpush1.msra.mxu0 0.0
        %3044 = vmatprep.subr.mxu0 0.0
        %3045 = vmatpush1.msra.mxu0 0.0
        %3046 = vmatprep.subr.mxu0 0.0
        %3047 = vmatpush1.msra.mxu0 0.0
        %3048 = vmatprep.subr.mxu0 0.0
        %3049 = vmatpush1.msra.mxu0 0.0
        %3050 = vmatprep.subr.mxu0 0.0
        %3051 = vmatpush1.msra.mxu0 0.0
        %3052 = vmatprep.subr.mxu0 0.0
        %3053 = vmatpush1.msra.mxu0 0.0
        %3054 = vmatprep.subr.mxu0 0.0
        %3055 = vmatpush1.msra.mxu0 0.0
        %3056 = vmatprep.subr.mxu0 0.0
        %3057 = vmatpush1.msra.mxu0 0.0
        %3058 = vmatprep.subr.mxu0 0.0
        %3059 = vmatpush1.msra.mxu0 0.0
        %3060 = vmatprep.subr.mxu0 0.0
        %3061 = vmatpush1.msra.mxu0 0.0
        %3062 = vmatprep.subr.mxu0 0.0
        %3063 = vmatpush1.msra.mxu0 0.0
        %3064 = vmatprep.mubr.f32.mxu0 0.0
        %3065 = vmatmul.mubr.f32.gmra.mrb[0].mxu0 %v2998
        %v3066 = vpop.f32.mrb[0].mxu0
        %v3067 = vadd.f32 0.0, %v3066
        %v3068 = vpop.f32.mrb[0].mxu0
        %3069 = vdwg.mxu0
        %v3071 = vsel %vm2952, %v2994, 0
        %3073 = vmatprep.subr.mxu0 0.0
        %3074 = vmatpush1.msra.mxu0 %v2496
        %3075 = vmatprep.subr.mxu0 0.0
        %3076 = vmatpush1.msra.mxu0 %v2632
        %3077 = vmatprep.subr.mxu0 0.0
        %3078 = vmatpush1.msra.mxu0 0.0
        %3079 = vmatprep.subr.mxu0 0.0
        %3080 = vmatpush1.msra.mxu0 0.0
        %3081 = vmatprep.subr.mxu0 0.0
        %3082 = vmatpush1.msra.mxu0 0.0
        %3083 = vmatprep.subr.mxu0 0.0
        %3084 = vmatpush1.msra.mxu0 0.0
        %3085 = vmatprep.subr.mxu0 0.0
        %3086 = vmatpush1.msra.mxu0 0.0
        %3087 = vmatprep.subr.mxu0 0.0
        %3088 = vmatpush1.msra.mxu0 0.0
        %3089 = vmatprep.subr.mxu0 0.0
        %3090 = vmatpush1.msra.mxu0 0.0
        %3091 = vmatprep.subr.mxu0 0.0
        %3092 = vmatpush1.msra.mxu0 0.0
        %3093 = vmatprep.subr.mxu0 0.0
        %3094 = vmatpush1.msra.mxu0 0.0
        %3095 = vmatprep.subr.mxu0 0.0
        %3096 = vmatpush1.msra.mxu0 0.0
        %3097 = vmatprep.subr.mxu0 0.0
        %3098 = vmatpush1.msra.mxu0 0.0
        %3099 = vmatprep.subr.mxu0 0.0
        %3100 = vmatpush1.msra.mxu0 0.0
        %3101 = vmatprep.subr.mxu0 0.0
        %3102 = vmatpush1.msra.mxu0 0.0
        %3103 = vmatprep.subr.mxu0 0.0
        %3104 = vmatpush1.msra.mxu0 0.0
        %3105 = vmatprep.subr.mxu0 0.0
        %3106 = vmatpush1.msra.mxu0 0.0
        %3107 = vmatprep.subr.mxu0 0.0
        %3108 = vmatpush1.msra.mxu0 0.0
        %3109 = vmatprep.subr.mxu0 0.0
        %3110 = vmatpush1.msra.mxu0 0.0
        %3111 = vmatprep.subr.mxu0 0.0
        %3112 = vmatpush1.msra.mxu0 0.0
        %3113 = vmatprep.subr.mxu0 0.0
        %3114 = vmatpush1.msra.mxu0 0.0
        %3115 = vmatprep.subr.mxu0 0.0
        %3116 = vmatpush1.msra.mxu0 0.0
        %3117 = vmatprep.subr.mxu0 0.0
        %3118 = vmatpush1.msra.mxu0 0.0
        %3119 = vmatprep.subr.mxu0 0.0
        %3120 = vmatpush1.msra.mxu0 0.0
        %3121 = vmatprep.subr.mxu0 0.0
        %3122 = vmatpush1.msra.mxu0 0.0
        %3123 = vmatprep.subr.mxu0 0.0
        %3124 = vmatpush1.msra.mxu0 0.0
        %3125 = vmatprep.subr.mxu0 0.0
        %3126 = vmatpush1.msra.mxu0 0.0
        %3127 = vmatprep.subr.mxu0 0.0
        %3128 = vmatpush1.msra.mxu0 0.0
        %3129 = vmatprep.subr.mxu0 0.0
        %3130 = vmatpush1.msra.mxu0 0.0
        %3131 = vmatprep.subr.mxu0 0.0
        %3132 = vmatpush1.msra.mxu0 0.0
        %3133 = vmatprep.subr.mxu0 0.0
        %3134 = vmatpush1.msra.mxu0 0.0
        %3135 = vmatprep.subr.mxu0 0.0
        %3136 = vmatpush1.msra.mxu0 0.0
        %3137 = vmatprep.mubr.f32.mxu0 0.0
        %3138 = vmatmul.mubr.f32.gmra.mrb[0].mxu0 %v3071
        %v3139 = vpop.f32.mrb[0].mxu0
        %v3140 = vadd.f32 0.0, %v3139
        %v3141 = vpop.f32.mrb[0].mxu0
        %3142 = vdwg.mxu0
        %v3144 = vsel %vm2952, %v2995, 0
        %3146 = vmatprep.subr.mxu0 0.0
        %3147 = vmatpush1.msra.mxu0 %v2497
        %3148 = vmatprep.subr.mxu0 0.0
        %3149 = vmatpush1.msra.mxu0 %v2633
        %3150 = vmatprep.subr.mxu0 0.0
        %3151 = vmatpush1.msra.mxu0 0.0
        %3152 = vmatprep.subr.mxu0 0.0
        %3153 = vmatpush1.msra.mxu0 0.0
        %3154 = vmatprep.subr.mxu0 0.0
        %3155 = vmatpush1.msra.mxu0 0.0
        %3156 = vmatprep.subr.mxu0 0.0
        %3157 = vmatpush1.msra.mxu0 0.0
        %3158 = vmatprep.subr.mxu0 0.0
        %3159 = vmatpush1.msra.mxu0 0.0
        %3160 = vmatprep.subr.mxu0 0.0
        %3161 = vmatpush1.msra.mxu0 0.0
        %3162 = vmatprep.subr.mxu0 0.0
        %3163 = vmatpush1.msra.mxu0 0.0
        %3164 = vmatprep.subr.mxu0 0.0
        %3165 = vmatpush1.msra.mxu0 0.0
        %3166 = vmatprep.subr.mxu0 0.0
        %3167 = vmatpush1.msra.mxu0 0.0
        %3168 = vmatprep.subr.mxu0 0.0
        %3169 = vmatpush1.msra.mxu0 0.0
        %3170 = vmatprep.subr.mxu0 0.0
        %3171 = vmatpush1.msra.mxu0 0.0
        %3172 = vmatprep.subr.mxu0 0.0
        %3173 = vmatpush1.msra.mxu0 0.0
        %3174 = vmatprep.subr.mxu0 0.0
        %3175 = vmatpush1.msra.mxu0 0.0
        %3176 = vmatprep.subr.mxu0 0.0
        %3177 = vmatpush1.msra.mxu0 0.0
        %3178 = vmatprep.subr.mxu0 0.0
        %3179 = vmatpush1.msra.mxu0 0.0
        %3180 = vmatprep.subr.mxu0 0.0
        %3181 = vmatpush1.msra.mxu0 0.0
        %3182 = vmatprep.subr.mxu0 0.0
        %3183 = vmatpush1.msra.mxu0 0.0
        %3184 = vmatprep.subr.mxu0 0.0
        %3185 = vmatpush1.msra.mxu0 0.0
        %3186 = vmatprep.subr.mxu0 0.0
        %3187 = vmatpush1.msra.mxu0 0.0
        %3188 = vmatprep.subr.mxu0 0.0
        %3189 = vmatpush1.msra.mxu0 0.0
        %3190 = vmatprep.subr.mxu0 0.0
        %3191 = vmatpush1.msra.mxu0 0.0
        %3192 = vmatprep.subr.mxu0 0.0
        %3193 = vmatpush1.msra.mxu0 0.0
        %3194 = vmatprep.subr.mxu0 0.0
        %3195 = vmatpush1.msra.mxu0 0.0
        %3196 = vmatprep.subr.mxu0 0.0
        %3197 = vmatpush1.msra.mxu0 0.0
        %3198 = vmatprep.subr.mxu0 0.0
        %3199 = vmatpush1.msra.mxu0 0.0
        %3200 = vmatprep.subr.mxu0 0.0
        %3201 = vmatpush1.msra.mxu0 0.0
        %3202 = vmatprep.subr.mxu0 0.0
        %3203 = vmatpush1.msra.mxu0 0.0
        %3204 = vmatprep.subr.mxu0 0.0
        %3205 = vmatpush1.msra.mxu0 0.0
        %3206 = vmatprep.subr.mxu0 0.0
        %3207 = vmatpush1.msra.mxu0 0.0
        %3208 = vmatprep.subr.mxu0 0.0
        %3209 = vmatpush1.msra.mxu0 0.0
        %3210 = vmatprep.mubr.f32.mxu0 0.0
        %3211 = vmatmul.mubr.f32.gmra.mrb[0].mxu0 %v3144
        %v3212 = vpop.f32.mrb[0].mxu0
        %v3213 = vadd.f32 0.0, %v3212
        %v3214 = vpop.f32.mrb[0].mxu0
        %3215 = vdwg.mxu0
        %v3217 = vsel %vm2952, %v2996, 0
        %3219 = vmatprep.subr.mxu0 0.0
        %3220 = vmatpush1.msra.mxu0 %v2498
        %3221 = vmatprep.subr.mxu0 0.0
        %3222 = vmatpush1.msra.mxu0 %v2634
        %3223 = vmatprep.subr.mxu0 0.0
        %3224 = vmatpush1.msra.mxu0 0.0
        %3225 = vmatprep.subr.mxu0 0.0
        %3226 = vmatpush1.msra.mxu0 0.0
        %3227 = vmatprep.subr.mxu0 0.0
        %3228 = vmatpush1.msra.mxu0 0.0
        %3229 = vmatprep.subr.mxu0 0.0
        %3230 = vmatpush1.msra.mxu0 0.0
        %3231 = vmatprep.subr.mxu0 0.0
        %3232 = vmatpush1.msra.mxu0 0.0
        %3233 = vmatprep.subr.mxu0 0.0
        %3234 = vmatpush1.msra.mxu0 0.0
        %3235 = vmatprep.subr.mxu0 0.0
        %3236 = vmatpush1.msra.mxu0 0.0
        %3237 = vmatprep.subr.mxu0 0.0
        %3238 = vmatpush1.msra.mxu0 0.0
        %3239 = vmatprep.subr.mxu0 0.0
        %3240 = vmatpush1.msra.mxu0 0.0
        %3241 = vmatprep.subr.mxu0 0.0
        %3242 = vmatpush1.msra.mxu0 0.0
        %3243 = vmatprep.subr.mxu0 0.0
        %3244 = vmatpush1.msra.mxu0 0.0
        %3245 = vmatprep.subr.mxu0 0.0
        %3246 = vmatpush1.msra.mxu0 0.0
        %3247 = vmatprep.subr.mxu0 0.0
        %3248 = vmatpush1.msra.mxu0 0.0
        %3249 = vmatprep.subr.mxu0 0.0
        %3250 = vmatpush1.msra.mxu0 0.0
        %3251 = vmatprep.subr.mxu0 0.0
        %3252 = vmatpush1.msra.mxu0 0.0
        %3253 = vmatprep.subr.mxu0 0.0
        %3254 = vmatpush1.msra.mxu0 0.0
        %3255 = vmatprep.subr.mxu0 0.0
        %3256 = vmatpush1.msra.mxu0 0.0
        %3257 = vmatprep.subr.mxu0 0.0
        %3258 = vmatpush1.msra.mxu0 0.0
        %3259 = vmatprep.subr.mxu0 0.0
        %3260 = vmatpush1.msra.mxu0 0.0
        %3261 = vmatprep.subr.mxu0 0.0
        %3262 = vmatpush1.msra.mxu0 0.0
        %3263 = vmatprep.subr.mxu0 0.0
        %3264 = vmatpush1.msra.mxu0 0.0
        %3265 = vmatprep.subr.mxu0 0.0
        %3266 = vmatpush1.msra.mxu0 0.0
        %3267 = vmatprep.subr.mxu0 0.0
        %3268 = vmatpush1.msra.mxu0 0.0
        %3269 = vmatprep.subr.mxu0 0.0
        %3270 = vmatpush1.msra.mxu0 0.0
        %3271 = vmatprep.subr.mxu0 0.0
        %3272 = vmatpush1.msra.mxu0 0.0
        %3273 = vmatprep.subr.mxu0 0.0
        %3274 = vmatpush1.msra.mxu0 0.0
        %3275 = vmatprep.subr.mxu0 0.0
        %3276 = vmatpush1.msra.mxu0 0.0
        %3277 = vmatprep.subr.mxu0 0.0
        %3278 = vmatpush1.msra.mxu0 0.0
        %3279 = vmatprep.subr.mxu0 0.0
        %3280 = vmatpush1.msra.mxu0 0.0
        %3281 = vmatprep.subr.mxu0 0.0
        %3282 = vmatpush1.msra.mxu0 0.0
        %3283 = vmatprep.mubr.f32.mxu0 0.0
        %3284 = vmatmul.mubr.f32.gmra.mrb[0].mxu0 %v3217
        %v3285 = vpop.f32.mrb[0].mxu0
        %v3286 = vadd.f32 0.0, %v3285
        %v3287 = vpop.f32.mrb[0].mxu0
        %3288 = vdwg.mxu0
        %v3289 = vpack.c.bf16 %v3067, %v3067
        %v3290 = vpack.c.bf16 %v3140, %v3140
        %v3291 = vpack.c.bf16 %v3213, %v3213
        %v3292 = vpack.c.bf16 %v3286, %v3286
        %s3293 = scalar_lea.vmem %s6, 16
        %v3294 = vld [vmem:[%s3293] sm:$0xf]
        %v3295 = vld [vmem:[%s3293 + $0x4] sm:$0xf]
        %v3296 = vld [vmem:[%s3293 + $0x8] sm:$0xf]
        %v3297 = vld [vmem:[%s3293 + $0xc] sm:$0xf]
        %v3299 = vsel %vm924, %v3289, 0
        %v3302 = vsel %vm1576, %v3294, 0
        %3304 = vmatprep.subr.bf16.mxu0 0
        %3305 = vmatpush1.bf16.msra.mxu0 %v3302
        %3306 = vmatprep.subr.bf16.mxu0 0
        %3307 = vmatpush1.bf16.msra.mxu0 0
        %3308 = vmatprep.subr.bf16.mxu0 0
        %3309 = vmatpush1.bf16.msra.mxu0 0
        %3310 = vmatprep.subr.bf16.mxu0 0
        %3311 = vmatpush1.bf16.msra.mxu0 0
        %3312 = vmatprep.subr.bf16.mxu0 0
        %3313 = vmatpush1.bf16.msra.mxu0 0
        %3314 = vmatprep.subr.bf16.mxu0 0
        %3315 = vmatpush1.bf16.msra.mxu0 0
        %3316 = vmatprep.subr.bf16.mxu0 0
        %3317 = vmatpush1.bf16.msra.mxu0 0
        %3318 = vmatprep.subr.bf16.mxu0 0
        %3319 = vmatpush1.bf16.msra.mxu0 0
        %3320 = vmatprep.subr.bf16.mxu0 0
        %3321 = vmatpush1.bf16.msra.mxu0 0
        %3322 = vmatprep.subr.bf16.mxu0 0
        %3323 = vmatpush1.bf16.msra.mxu0 0
        %3324 = vmatprep.subr.bf16.mxu0 0
        %3325 = vmatpush1.bf16.msra.mxu0 0
        %3326 = vmatprep.subr.bf16.mxu0 0
        %3327 = vmatpush1.bf16.msra.mxu0 0
        %3328 = vmatprep.subr.bf16.mxu0 0
        %3329 = vmatpush1.bf16.msra.mxu0 0
        %3330 = vmatprep.subr.bf16.mxu0 0
        %3331 = vmatpush1.bf16.msra.mxu0 0
        %3332 = vmatprep.subr.bf16.mxu0 0
        %3333 = vmatpush1.bf16.msra.mxu0 0
        %3334 = vmatprep.subr.bf16.mxu0 0
        %3335 = vmatpush1.bf16.msra.mxu0 0
        %3336 = vmatprep.mubr.bf16.mxu0 0
        %3337 = vmatmul.mubr.bf16.gmra.mrb[0].mxu0 %v3299
        %v3338 = vpop.f32.mrb[0].mxu0
        %v3339 = vadd.f32 0.0, %v3338
        %v3340 = vpop.f32.mrb[0].mxu0
        %v3341 = vpop.f32.mrb[0].mxu0
        %v3342 = vpop.f32.mrb[0].mxu0
        %3343 = vdwg.mxu0
        %v3345 = vsel %vm924, %v3290, 0
        %v3348 = vsel %vm1576, %v3295, 0
        %3350 = vmatprep.subr.bf16.mxu0 0
        %3351 = vmatpush1.bf16.msra.mxu0 %v3348
        %3352 = vmatprep.subr.bf16.mxu0 0
        %3353 = vmatpush1.bf16.msra.mxu0 0
        %3354 = vmatprep.subr.bf16.mxu0 0
        %3355 = vmatpush1.bf16.msra.mxu0 0
        %3356 = vmatprep.subr.bf16.mxu0 0
        %3357 = vmatpush1.bf16.msra.mxu0 0
        %3358 = vmatprep.subr.bf16.mxu0 0
        %3359 = vmatpush1.bf16.msra.mxu0 0
        %3360 = vmatprep.subr.bf16.mxu0 0
        %3361 = vmatpush1.bf16.msra.mxu0 0
        %3362 = vmatprep.subr.bf16.mxu0 0
        %3363 = vmatpush1.bf16.msra.mxu0 0
        %3364 = vmatprep.subr.bf16.mxu0 0
        %3365 = vmatpush1.bf16.msra.mxu0 0
        %3366 = vmatprep.subr.bf16.mxu0 0
        %3367 = vmatpush1.bf16.msra.mxu0 0
        %3368 = vmatprep.subr.bf16.mxu0 0
        %3369 = vmatpush1.bf16.msra.mxu0 0
        %3370 = vmatprep.subr.bf16.mxu0 0
        %3371 = vmatpush1.bf16.msra.mxu0 0
        %3372 = vmatprep.subr.bf16.mxu0 0
        %3373 = vmatpush1.bf16.msra.mxu0 0
        %3374 = vmatprep.subr.bf16.mxu0 0
        %3375 = vmatpush1.bf16.msra.mxu0 0
        %3376 = vmatprep.subr.bf16.mxu0 0
        %3377 = vmatpush1.bf16.msra.mxu0 0
        %3378 = vmatprep.subr.bf16.mxu0 0
        %3379 = vmatpush1.bf16.msra.mxu0 0
        %3380 = vmatprep.subr.bf16.mxu0 0
        %3381 = vmatpush1.bf16.msra.mxu0 0
        %3382 = vmatprep.mubr.bf16.mxu0 0
        %3383 = vmatmul.mubr.bf16.gmra.mrb[0].mxu0 %v3345
        %v3384 = vpop.f32.mrb[0].mxu0
        %v3385 = vadd.f32 0.0, %v3384
        %v3386 = vpop.f32.mrb[0].mxu0
        %v3387 = vpop.f32.mrb[0].mxu0
        %v3388 = vpop.f32.mrb[0].mxu0
        %3389 = vdwg.mxu0
        %v3391 = vsel %vm924, %v3291, 0
        %v3394 = vsel %vm1576, %v3296, 0
        %3396 = vmatprep.subr.bf16.mxu0 0
        %3397 = vmatpush1.bf16.msra.mxu0 %v3394
        %3398 = vmatprep.subr.bf16.mxu0 0
        %3399 = vmatpush1.bf16.msra.mxu0 0
        %3400 = vmatprep.subr.bf16.mxu0 0
        %3401 = vmatpush1.bf16.msra.mxu0 0
        %3402 = vmatprep.subr.bf16.mxu0 0
        %3403 = vmatpush1.bf16.msra.mxu0 0
        %3404 = vmatprep.subr.bf16.mxu0 0
        %3405 = vmatpush1.bf16.msra.mxu0 0
        %3406 = vmatprep.subr.bf16.mxu0 0
        %3407 = vmatpush1.bf16.msra.mxu0 0
        %3408 = vmatprep.subr.bf16.mxu0 0
        %3409 = vmatpush1.bf16.msra.mxu0 0
        %3410 = vmatprep.subr.bf16.mxu0 0
        %3411 = vmatpush1.bf16.msra.mxu0 0
        %3412 = vmatprep.subr.bf16.mxu0 0
        %3413 = vmatpush1.bf16.msra.mxu0 0
        %3414 = vmatprep.subr.bf16.mxu0 0
        %3415 = vmatpush1.bf16.msra.mxu0 0
        %3416 = vmatprep.subr.bf16.mxu0 0
        %3417 = vmatpush1.bf16.msra.mxu0 0
        %3418 = vmatprep.subr.bf16.mxu0 0
        %3419 = vmatpush1.bf16.msra.mxu0 0
        %3420 = vmatprep.subr.bf16.mxu0 0
        %3421 = vmatpush1.bf16.msra.mxu0 0
        %3422 = vmatprep.subr.bf16.mxu0 0
        %3423 = vmatpush1.bf16.msra.mxu0 0
        %3424 = vmatprep.subr.bf16.mxu0 0
        %3425 = vmatpush1.bf16.msra.mxu0 0
        %3426 = vmatprep.subr.bf16.mxu0 0
        %3427 = vmatpush1.bf16.msra.mxu0 0
        %3428 = vmatprep.mubr.bf16.mxu0 0
        %3429 = vmatmul.mubr.bf16.gmra.mrb[0].mxu0 %v3391
        %v3430 = vpop.f32.mrb[0].mxu0
        %v3431 = vadd.f32 0.0, %v3430
        %v3432 = vpop.f32.mrb[0].mxu0
        %v3433 = vpop.f32.mrb[0].mxu0
        %v3434 = vpop.f32.mrb[0].mxu0
        %3435 = vdwg.mxu0
        %v3437 = vsel %vm924, %v3292, 0
        %v3440 = vsel %vm1576, %v3297, 0
        %3442 = vmatprep.subr.bf16.mxu0 0
        %3443 = vmatpush1.bf16.msra.mxu0 %v3440
        %3444 = vmatprep.subr.bf16.mxu0 0
        %3445 = vmatpush1.bf16.msra.mxu0 0
        %3446 = vmatprep.subr.bf16.mxu0 0
        %3447 = vmatpush1.bf16.msra.mxu0 0
        %3448 = vmatprep.subr.bf16.mxu0 0
        %3449 = vmatpush1.bf16.msra.mxu0 0
        %3450 = vmatprep.subr.bf16.mxu0 0
        %3451 = vmatpush1.bf16.msra.mxu0 0
        %3452 = vmatprep.subr.bf16.mxu0 0
        %3453 = vmatpush1.bf16.msra.mxu0 0
        %3454 = vmatprep.subr.bf16.mxu0 0
        %3455 = vmatpush1.bf16.msra.mxu0 0
        %3456 = vmatprep.subr.bf16.mxu0 0
        %3457 = vmatpush1.bf16.msra.mxu0 0
        %3458 = vmatprep.subr.bf16.mxu0 0
        %3459 = vmatpush1.bf16.msra.mxu0 0
        %3460 = vmatprep.subr.bf16.mxu0 0
        %3461 = vmatpush1.bf16.msra.mxu0 0
        %3462 = vmatprep.subr.bf16.mxu0 0
        %3463 = vmatpush1.bf16.msra.mxu0 0
        %3464 = vmatprep.subr.bf16.mxu0 0
        %3465 = vmatpush1.bf16.msra.mxu0 0
        %3466 = vmatprep.subr.bf16.mxu0 0
        %3467 = vmatpush1.bf16.msra.mxu0 0
        %3468 = vmatprep.subr.bf16.mxu0 0
        %3469 = vmatpush1.bf16.msra.mxu0 0
        %3470 = vmatprep.subr.bf16.mxu0 0
        %3471 = vmatpush1.bf16.msra.mxu0 0
        %3472 = vmatprep.subr.bf16.mxu0 0
        %3473 = vmatpush1.bf16.msra.mxu0 0
        %3474 = vmatprep.mubr.bf16.mxu0 0
        %3475 = vmatmul.mubr.bf16.gmra.mrb[0].mxu0 %v3437
        %v3476 = vpop.f32.mrb[0].mxu0
        %v3477 = vadd.f32 0.0, %v3476
        %v3478 = vpop.f32.mrb[0].mxu0
        %v3479 = vpop.f32.mrb[0].mxu0
        %v3480 = vpop.f32.mrb[0].mxu0
        %3481 = vdwg.mxu0
        %v3482 = vsel %vm404, %v3339, 0.0
        %v3483 = vsel %vm404, %v3385, 0.0
        %v3484 = vadd.f32 %v3482, %v3483
        %v3485 = vsel %vm404, %v3431, 0.0
        %v3486 = vadd.f32 %v3484, %v3485
        %v3487 = vsel %vm404, %v3477, 0.0
        %v3488 = vadd.f32 %v3486, %v3487
        %v3489 = vadd.f32 %v1765, %v3488
        %v3490 = vld [vmem:[%s4 + $0x2] sm:$0x1]
        %v3491 = vmul.f32 %v3489, %v3489
        %v3492 = vsel %vm404, %v3491, 0.0
        %3493 = vadd.xlane.f32.xlu0 %v3492
        %v3494 = vpop.xlane.xlu0 %3493
        %v3495 = vmul.f32 %v3494, %v408
        %v3496 = vadd.f32 %v3495, 1e-06
        %v3497 = vrsqrt.pop %v3496
        %v3498 = vmul.f32 %v3489, %v3497
        %v3499 = vlaneseq
        %v3500 = vshrl.u32 %v3499, 7
        %v3501 = vsub.s32 0, %v3500
        %v3502 = vrot.slane %v3490, %v3501
        %v3503 = vmul.f32 %v3502, %v3498
        %v3504 = vpack.c.bf16 %v3503, %v3503
        %v3505 = vld [vmem:[%s5 + $0xc] sm:$0xf]
        %v3506 = vld [vmem:[%s5 + $0x1c] sm:$0xf]
        %v3507 = vld [vmem:[%s5 + $0x2c] sm:$0xf]
        %v3508 = vld [vmem:[%s5 + $0x3c] sm:$0xf]
        %v3513 = vunpack.c.l.b16 %v3505
        %v3514 = vunpack.c.l.b16 %v3506
        %v3515 = vunpack.c.l.b16 %v3507
        %v3516 = vunpack.c.l.b16 %v3508
        %v3517 = vpack.c.b16 %v3514, %v3513
        %v3518 = vpack.c.b16 %v3516, %v3515
        %v3522 = vsel %vm404, %v3504, 0
        %3524 = vmatprep.subr.bf16.mxu0 0
        %3525 = vmatpush1.bf16.msra.mxu0 %v3517
        %3526 = vmatprep.subr.bf16.mxu0 0
        %3527 = vmatpush1.bf16.msra.mxu0 %v3518
        %3528 = vmatprep.subr.bf16.mxu0 0
        %3529 = vmatpush1.bf16.msra.mxu0 0
        %3530 = vmatprep.subr.bf16.mxu0 0
        %3531 = vmatpush1.bf16.msra.mxu0 0
        %3532 = vmatprep.subr.bf16.mxu0 0
        %3533 = vmatpush1.bf16.msra.mxu0 0
        %3534 = vmatprep.subr.bf16.mxu0 0
        %3535 = vmatpush1.bf16.msra.mxu0 0
        %3536 = vmatprep.subr.bf16.mxu0 0
        %3537 = vmatpush1.bf16.msra.mxu0 0
        %3538 = vmatprep.subr.bf16.mxu0 0
        %3539 = vmatpush1.bf16.msra.mxu0 0
        %3540 = vmatprep.subr.bf16.mxu0 0
        %3541 = vmatpush1.bf16.msra.mxu0 0
        %3542 = vmatprep.subr.bf16.mxu0 0
        %3543 = vmatpush1.bf16.msra.mxu0 0
        %3544 = vmatprep.subr.bf16.mxu0 0
        %3545 = vmatpush1.bf16.msra.mxu0 0
        %3546 = vmatprep.subr.bf16.mxu0 0
        %3547 = vmatpush1.bf16.msra.mxu0 0
        %3548 = vmatprep.subr.bf16.mxu0 0
        %3549 = vmatpush1.bf16.msra.mxu0 0
        %3550 = vmatprep.subr.bf16.mxu0 0
        %3551 = vmatpush1.bf16.msra.mxu0 0
        %3552 = vmatprep.subr.bf16.mxu0 0
        %3553 = vmatpush1.bf16.msra.mxu0 0
        %3554 = vmatprep.subr.bf16.mxu0 0
        %3555 = vmatpush1.bf16.msra.mxu0 0
        %3556 = vmatprep.mubr.bf16.mxu0 0
        %3557 = vmatmul.mubr.bf16.gmra.mrb[0].mxu0 %v3522
        %v3558 = vpop.f32.mrb[0].mxu0
        %v3559 = vadd.f32 0.0, %v3558
        %v3560 = vpop.f32.mrb[0].mxu0
        %v3561 = vpop.f32.mrb[0].mxu0
        %v3562 = vpop.f32.mrb[0].mxu0
        %3563 = vdwg.mxu0
        %v3564 = vmax.f32 %v3559, 0.0
        %v3565 = vpack.c.bf16 %v3564, %v3564
        %v3566 = vld [vmem:[%s7] sm:$0xf]
        %v3567 = vld [vmem:[%s7 + $0x4] sm:$0xf]
        %v3568 = vld [vmem:[%s7 + $0x8] sm:$0xf]
        %v3569 = vld [vmem:[%s7 + $0xc] sm:$0xf]
        %v3570 = vld [vmem:[%s7 + $0x10] sm:$0xf]
        %v3571 = vld [vmem:[%s7 + $0x14] sm:$0xf]
        %v3572 = vld [vmem:[%s7 + $0x18] sm:$0xf]
        %v3573 = vld [vmem:[%s7 + $0x1c] sm:$0xf]
        %v3582 = vunpack.c.l.b16 %v3566
        %v3583 = vunpack.c.l.b16 %v3567
        %v3584 = vunpack.c.l.b16 %v3568
        %v3585 = vunpack.c.l.b16 %v3569
        %v3586 = vunpack.c.l.b16 %v3570
        %v3587 = vunpack.c.l.b16 %v3571
        %v3588 = vunpack.c.l.b16 %v3572
        %v3589 = vunpack.c.l.b16 %v3573
        %v3590 = vpack.c.b16 %v3583, %v3582
        %v3591 = vpack.c.b16 %v3585, %v3584
        %v3592 = vpack.c.b16 %v3587, %v3586
        %v3593 = vpack.c.b16 %v3589, %v3588
        %vm3598 = vcmask 523264
        %v3600 = vsel %vm3598, %v3565, 0
        %3602 = vmatprep.subr.bf16.mxu0 0
        %3603 = vmatpush1.bf16.msra.mxu0 %v3590
        %3604 = vmatprep.subr.bf16.mxu0 0
        %3605 = vmatpush1.bf16.msra.mxu0 %v3591
        %3606 = vmatprep.subr.bf16.mxu0 0
        %3607 = vmatpush1.bf16.msra.mxu0 %v3592
        %3608 = vmatprep.subr.bf16.mxu0 0
        %3609 = vmatpush1.bf16.msra.mxu0 %v3593
        %3610 = vmatprep.subr.bf16.mxu0 0
        %3611 = vmatpush1.bf16.msra.mxu0 0
        %3612 = vmatprep.subr.bf16.mxu0 0
        %3613 = vmatpush1.bf16.msra.mxu0 0
        %3614 = vmatprep.subr.bf16.mxu0 0
        %3615 = vmatpush1.bf16.msra.mxu0 0
        %3616 = vmatprep.subr.bf16.mxu0 0
        %3617 = vmatpush1.bf16.msra.mxu0 0
        %3618 = vmatprep.subr.bf16.mxu0 0
        %3619 = vmatpush1.bf16.msra.mxu0 0
        %3620 = vmatprep.subr.bf16.mxu0 0
        %3621 = vmatpush1.bf16.msra.mxu0 0
        %3622 = vmatprep.subr.bf16.mxu0 0
        %3623 = vmatpush1.bf16.msra.mxu0 0
        %3624 = vmatprep.subr.bf16.mxu0 0
        %3625 = vmatpush1.bf16.msra.mxu0 0
        %3626 = vmatprep.subr.bf16.mxu0 0
        %3627 = vmatpush1.bf16.msra.mxu0 0
        %3628 = vmatprep.subr.bf16.mxu0 0
        %3629 = vmatpush1.bf16.msra.mxu0 0
        %3630 = vmatprep.subr.bf16.mxu0 0
        %3631 = vmatpush1.bf16.msra.mxu0 0
        %3632 = vmatprep.subr.bf16.mxu0 0
        %3633 = vmatpush1.bf16.msra.mxu0 0
        %3634 = vmatprep.mubr.bf16.mxu0 0
        %3635 = vmatmul.mubr.bf16.gmra.mrb[0].mxu0 %v3600
        %v3636 = vpop.f32.mrb[0].mxu0
        %v3637 = vadd.f32 0.0, %v3636
        %v3638 = vpop.f32.mrb[0].mxu0
        %v3639 = vpop.f32.mrb[0].mxu0
        %v3640 = vpop.f32.mrb[0].mxu0
        %3641 = vdwg.mxu0
        %v3642 = vadd.f32 %v3489, %v3637
        %3643 = vst.msk [vmem:[%s387] sm:$0xff] %vm404, %v3642
        %s3644 = sand.u32 %s224, 1
        %s3645 = scalar_lea.sflag [#allocation4], %s3644
        %s3646 = sand.u32 %s224, 1
        %s3647 = smul.addr %s3646, 8
        %s3648 = scalar_lea.vmem [#allocation7], %s3647
        // Predicated region
        $region61: #{decoder_block.1} parent=51 // pred_check
          %p3649 = pneg %p234
        $region62: #{decoder_block.1} parent=51 // pred_check_branch
          %3651 = sbr.rel (%p3649) target = $region64
        $region63: #{decoder_block.1} parent=51 // pred_region
          %s3653 = ssub.s32 128, 128
          %3654 = vsyncadd %s3645, %s3653
          %s3655 = smul.addr %s28, 128
          %s3656 = scalar_lea.hbm %s8, %s3655
          %s3658 = sshll.u32 %s3648, 4
          %s3659 = int_to_ptr.vmem [resolvable:$true] %s3658
          %3661 = dma.vmem_to_hbm [thread:$0]  %s3659, 128, %s3656, %s3645
        $region64: #{decoder_block.1} parent=51 // pred_fallthru
          _
      $region52: #{decoder_block.1} parent=5 // pred_fallthru
        _
      %p3662 = scmp.le.s32.totalorder 2, %s23
      // Predicated region
      $region65: #{decoder_block.1} parent=5 // pred_check
        %p3663 = pneg %p3662
      $region66: #{decoder_block.1} parent=5 // pred_check_branch
        %3665 = sbr.rel (%p3663) target = $region68
      $region67: #{decoder_block.1} parent=5 // pred_region
        %s3666 = ssub.s32 %s23, 2
        // Predicated region
        $region69: #{decoder_block.1} parent=67 // pred_check
          %p3667 = pneg %p240
        $region70: #{decoder_block.1} parent=67 // pred_check_branch
          %3669 = sbr.rel (%p3667) target = $region72
        $region71: #{decoder_block.1} parent=67 // pred_region
          %s3670 = sand.u32 %s225, 1
          %s3671 = scalar_lea.sflag [#allocation4], %s3670
          %s3672 = sand.u32 %s225, 1
          %s3673 = smul.addr %s3672, 8
          %s3674 = scalar_lea.vmem [#allocation7], %s3673
          %3675 = dma.done %s3671, 128
        $region72: #{decoder_block.1} parent=67 // pred_fallthru
          _
      $region68: #{decoder_block.1} parent=5 // pred_fallthru
        _
    $region6: #{decoder_block.1} parent=1 // loop_footer
      %s27 = sadd.s32 1, %s23
    $region7: #{decoder_block.1} parent=1 // loop_footer_branch
      %22 = sbr.rel target = $region3
    $region8: #{decoder_block.1} parent=1 // loop_exit
      _
    %3676 = vsyncpa [#allocation3], 1
    %s3677 = scalar_lea.sflag [#allocation3], 1
    %3678 = vsyncpa %s3677, 1
    %3679 = vsyncpa [#allocation6], 1
    %s3680 = scalar_lea.sflag [#allocation6], 1
    %3681 = vsyncpa %s3680, 1
    %3682 = vsyncpa [#allocation4], 1
    %s3683 = scalar_lea.sflag [#allocation4], 1
    %3684 = vsyncpa %s3683, 1

</llo_original>
